<compile_context>
chip_gen: v6e
topology: v6e:2x2x1
jax: 0.10.0
libtpu: 0.0.40
codegen_flags: <defaults>
</compile_context>

<pallas_src>
import jax
import jax.numpy as jnp
from jax import lax
from jax.experimental import pallas as pl
from jax.experimental.pallas import tpu as pltpu

# ----- scaled-down "roberta" config (real model: H=768, 12 layers, 12 heads) -----
B, S = 2, 16            # batch, sequence length
H = 128                 # hidden size
NH, DH = 4, 32          # heads, head dim (NH * DH == H)
FF = 256                # intermediate (FFN) size
LAYERS = 2              # transformer layers
VOCAB = 64              # vocab size
MAX_POS = 32            # position-embedding table size
NUM_CLASSES = 4         # classifier output (as in the module)
PAD_ID = 1              # RoBERTa padding idx
LN_EPS = 1e-5

M = B * S               # token-row slab (processed as one block)

_GELU_C = 0.7978845608028654  # sqrt(2/pi)


# ---------------------------- in-kernel helpers ----------------------------

def _ln(x, g, b):
    """LayerNorm over the last axis, f32 math."""
    mu = jnp.mean(x, axis=-1, keepdims=True)
    xc = x - mu
    var = jnp.mean(xc * xc, axis=-1, keepdims=True)
    return xc * lax.rsqrt(var + LN_EPS) * g + b


def _gelu(y):
    # TODO(synk): HF roberta uses exact erf-GELU; tanh approx keeps the
    # transcendental on the EUP and is numerically very close.
    return 0.5 * y * (1.0 + jnp.tanh(_GELU_C * (y + 0.044715 * y * y * y)))


# ---------------------------- fused encoder + head kernel ----------------------------

def _encoder_kernel(x_ref, mb_ref, emb_g_ref, emb_b_ref,
                    wqkv_ref, bqkv_ref, wo_ref, bo_ref, g1_ref, b1_ref,
                    wi_ref, bi_ref, wf_ref, bf_ref, g2_ref, b2_ref,
                    wp_ref, bp_ref, wc_ref, bc_ref,
                    o_ref, h_scratch):
    layer = pl.program_id(0)

    # --- layer 0: embedding LayerNorm, park h in VMEM scratch (stays resident) ---
    @pl.when(layer == 0)
    def _():
        h_scratch[...] = _ln(x_ref[...], emb_g_ref[...], emb_b_ref[...]
                             ).astype(h_scratch.dtype)

    h_bf = h_scratch[...]                                         # (M, H) bf16

    # --- fused QKV projection (one MXU matmul over the full row slab) ---
    qkv = jnp.dot(h_bf, wqkv_ref[...],
                  preferred_element_type=jnp.float32) + bqkv_ref[...]   # (M, 3H) f32
    q = qkv[:, 0 * H:1 * H]        # 128-lane-aligned slices (whole vregs, no shuffles)
    k = qkv[:, 1 * H:2 * H]
    v = qkv[:, 2 * H:3 * H]

    # constant per-head 0/1 lane masks (VPU selects; no lane slicing of activations)
    lane = lax.broadcasted_iota(jnp.int32, (1, H), 1)
    head_m = [jnp.where((lane >= h * DH) & (lane < (h + 1) * DH), 1.0, 0.0)
              for h in range(NH)]

    # --- attention: all heads of a batch element handled with packed scores ---
    ctx_parts = []
    for b in range(B):                                            # B=2, static unroll
        qb = q[b * S:(b + 1) * S, :]                              # (S, H) f32
        kb = k[b * S:(b + 1) * S, :]
        vb = v[b * S:(b + 1) * S, :]
        # head-stacked masked Q: rows [h*S + i] hold q_b[i] restricted to head h's
        # lanes -> a full-H contraction against K equals the per-head DH contraction.
        q_stack = jnp.concatenate([qb * head_m[h] for h in range(NH)],
                                  axis=0)                         # (NH*S, H) f32
        scores = lax.dot_general(q_stack.astype(jnp.bfloat16),
                                 kb.astype(jnp.bfloat16),
                                 (((1,), (1,)), ((), ())),        # contract last dims; no k.T
                                 preferred_element_type=jnp.float32)  # (NH*S, S)
        scores = scores + mb_ref[b:b + 1, :]                      # key-mask bias (1, S)
        mx = jnp.max(scores, axis=-1, keepdims=True)
        p = jnp.exp(scores - mx)
        p = p * pl.reciprocal(jnp.sum(p, axis=-1, keepdims=True), approx=True)
        p = p.astype(jnp.bfloat16)                                # (NH*S, S)
        # accumulate head contexts straight into a lane-dense (S, H) slab (no concat)
        ctx_b = jnp.zeros((S, H), jnp.float32)
        for h in range(NH):
            ctx_b = ctx_b + jnp.dot(p[h * S:(h + 1) * S, :],
                                    (vb * head_m[h]).astype(jnp.bfloat16),
                                    preferred_element_type=jnp.float32)
        ctx_parts.append(ctx_b)
    ctx = jnp.concatenate(ctx_parts, axis=0)                      # (M, H) f32

    # --- attention output projection + residual + LN1 ---
    attn = jnp.dot(ctx.astype(jnp.bfloat16), wo_ref[...],
                   preferred_element_type=jnp.float32)
    attn = attn + bo_ref[...] + h_bf.astype(jnp.float32)
    h1 = _ln(attn, g1_ref[...], b1_ref[...])                      # (M, H) f32

    # --- FFN (GELU) + residual + LN2 ---
    inter = jnp.dot(h1.astype(jnp.bfloat16), wi_ref[...],
                    preferred_element_type=jnp.float32) + bi_ref[...]
    inter = _gelu(inter)
    ff = jnp.dot(inter.astype(jnp.bfloat16), wf_ref[...],
                 preferred_element_type=jnp.float32) + bf_ref[...]
    h2 = _ln(ff + h1, g2_ref[...], b2_ref[...])                   # (M, H) f32

    h_scratch[...] = h2.astype(h_scratch.dtype)                   # carry to next layer

    # --- last layer: CLS pooler (tanh) + classifier, all in-kernel ---
    @pl.when(layer == pl.num_programs(0) - 1)
    def _():
        cls = jnp.concatenate([h2[b * S:b * S + 1, :] for b in range(B)],
                              axis=0)                             # (B, H) f32
        pooled = jnp.tanh(jnp.dot(cls.astype(jnp.bfloat16), wp_ref[...],
                                  preferred_element_type=jnp.float32) + bp_ref[...])
        logits = jnp.dot(pooled.astype(jnp.bfloat16), wc_ref[...],
                         preferred_element_type=jnp.float32) + bc_ref[...]
        o_ref[...] = logits.astype(o_ref.dtype)


def fused_encoder_classifier(x, mask_bias, p):
    """x: (M,H) f32 embedding sum; mask_bias: (B,S) f32. Returns (B, NUM_CLASSES) f32."""
    inv = lambda l: (0, 0)          # grid-invariant operands: fetched once (index never changes)
    per_layer = lambda l: (l, 0, 0)
    return pl.pallas_call(
        _encoder_kernel,
        grid=(LAYERS,),
        in_specs=[
            pl.BlockSpec((M, H), inv),                       # x (embedding sum)
            pl.BlockSpec((B, S), inv),                       # mask bias
            pl.BlockSpec((1, H), inv),                       # emb_ln_g
            pl.BlockSpec((1, H), inv),                       # emb_ln_b
            pl.BlockSpec((None, H, 3 * H), per_layer),       # w_qkv  (LAYERS, H, 3H)
            pl.BlockSpec((None, 1, 3 * H), per_layer),       # b_qkv
            pl.BlockSpec((None, H, H), per_layer),           # wo
            pl.BlockSpec((None, 1, H), per_layer),           # bo
            pl.BlockSpec((None, 1, H), per_layer),           # ln1_g
            pl.BlockSpec((None, 1, H), per_layer),           # ln1_b
            pl.BlockSpec((None, H, FF), per_layer),          # wi
            pl.BlockSpec((None, 1, FF), per_layer),          # bi
            pl.BlockSpec((None, FF, H), per_layer),          # wf
            pl.BlockSpec((None, 1, H), per_layer),           # bf
            pl.BlockSpec((None, 1, H), per_layer),           # ln2_g
            pl.BlockSpec((None, 1, H), per_layer),           # ln2_b
            pl.BlockSpec((H, H), inv),                       # wp (pooler)
            pl.BlockSpec((1, H), inv),                       # bp
            pl.BlockSpec((H, NUM_CLASSES), inv),             # wc (classifier)
            pl.BlockSpec((1, NUM_CLASSES), inv),             # bc
        ],
        out_specs=pl.BlockSpec((B, NUM_CLASSES), inv),
        out_shape=jax.ShapeDtypeStruct((B, NUM_CLASSES), jnp.float32),
        scratch_shapes=[pltpu.VMEM((M, H), jnp.bfloat16)],   # resident hidden state
        compiler_params=pltpu.CompilerParams(
            dimension_semantics=("arbitrary",)),             # h carried across layers
    )(x, mask_bias, p["emb_ln_g"], p["emb_ln_b"],
      p["w_qkv"], p["b_qkv"], p["wo"], p["bo"], p["ln1_g"], p["ln1_b"],
      p["wi"], p["bi"], p["wf"], p["bf"], p["ln2_g"], p["ln2_b"],
      p["wp"], p["bp"], p["wc"], p["bc"])


# ---------------------------- parameters ----------------------------

def init_params(key):
    def nrm(k, shape, scale=0.02):
        return scale * jax.random.normal(k, shape, dtype=jnp.float32)

    keys = iter(jax.random.split(key, 6 * LAYERS + 8))
    attn_scale = 1.0 / (DH ** 0.5)

    w_qkv, wo, wi, wf = [], [], [], []
    for _ in range(LAYERS):
        wq = nrm(next(keys), (H, H)) * attn_scale      # fold 1/sqrt(DH) into Wq
        wk = nrm(next(keys), (H, H))
        wv = nrm(next(keys), (H, H))
        w_qkv.append(jnp.concatenate([wq, wk, wv], axis=1))
        wo.append(nrm(next(keys), (H, H)))
        wi.append(nrm(next(keys), (H, FF)))
        wf.append(nrm(next(keys), (FF, H)))

    return {
        "word_emb": nrm(next(keys), (VOCAB, H)),
        "pos_emb": nrm(next(keys), (MAX_POS, H)),
        "type_emb": nrm(next(keys), (1, H)),           # roberta type_vocab_size == 1
        "emb_ln_g": jnp.ones((1, H), jnp.float32),
        "emb_ln_b": jnp.zeros((1, H), jnp.float32),
        # per-layer weights stacked on a leading LAYERS axis (streamed by index_map)
        "w_qkv": jnp.stack(w_qkv).astype(jnp.bfloat16),
        "b_qkv": jnp.zeros((LAYERS, 1, 3 * H), jnp.float32),
        "wo": jnp.stack(wo).astype(jnp.bfloat16),
        "bo": jnp.zeros((LAYERS, 1, H), jnp.float32),
        "ln1_g": jnp.ones((LAYERS, 1, H), jnp.float32),
        "ln1_b": jnp.zeros((LAYERS, 1, H), jnp.float32),
        "wi": jnp.stack(wi).astype(jnp.bfloat16),
        "bi": jnp.zeros((LAYERS, 1, FF), jnp.float32),
        "wf": jnp.stack(wf).astype(jnp.bfloat16),
        "bf": jnp.zeros((LAYERS, 1, H), jnp.float32),
        "ln2_g": jnp.ones((LAYERS, 1, H), jnp.float32),
        "ln2_b": jnp.zeros((LAYERS, 1, H), jnp.float32),
        "wp": nrm(next(keys), (H, H)).astype(jnp.bfloat16),
        "bp": jnp.zeros((1, H), jnp.float32),
        "wc": nrm(next(keys), (H, NUM_CLASSES)).astype(jnp.bfloat16),
        "bc": jnp.zeros((1, NUM_CLASSES), jnp.float32),
    }


# ---------------------------- forward pass ----------------------------

def roberta_class_forward(params, input_ids, attention_mask, token_type_ids):
    """Equivalent of ROBERTAClass.forward(input_ids, attention_mask, token_type_ids)."""
    # RoBERTa position ids: cumulative count of non-pad tokens, offset by pad idx.
    nonpad = (input_ids != PAD_ID).astype(jnp.int32)
    position_ids = jnp.cumsum(nonpad, axis=1) * nonpad + PAD_ID

    # TODO(synk): embedding table gathers stay in XLA (no clean/worthwhile Pallas gather here).
    emb = (params["word_emb"][input_ids]
           + params["pos_emb"][position_ids]
           + params["type_emb"][token_type_ids])                  # (B, S, H) f32
    x = emb.reshape(M, H)

    mask_bias = (1.0 - attention_mask.astype(jnp.float32)) * -1e9  # (B, S) additive key mask

    # TODO(synk): dropout layers run in eval/inference mode -> identity (no RNG mask).
    # One fused kernel: embedding LN -> LAYERS x (QKV, attention, out-proj+LN1, FFN+LN2)
    # -> tanh pooler -> Linear(H -> NUM_CLASSES).
    return fused_encoder_classifier(x, mask_bias, params)


# ---------------------------- main ----------------------------

if __name__ == "__main__":
    key = jax.random.PRNGKey(0)
    pkey, ikey = jax.random.split(key)
    params = init_params(pkey)

    # Deterministic example batch: second sequence has trailing padding.
    input_ids = jax.random.randint(ikey, (B, S), 2, VOCAB, dtype=jnp.int32)
    pad_tail = jnp.arange(S) >= (S - 4)
    input_ids = input_ids.at[1].set(jnp.where(pad_tail, PAD_ID, input_ids[1]))
    attention_mask = (input_ids != PAD_ID).astype(jnp.int32)
    token_type_ids = jnp.zeros((B, S), dtype=jnp.int32)

    fwd = jax.jit(roberta_class_forward)
    logits = fwd(params, input_ids, attention_mask, token_type_ids)
    jax.block_until_ready(logits)
    assert logits.shape == (B, NUM_CLASSES) and logits.dtype == jnp.float32
    assert bool(jnp.all(jnp.isfinite(logits)))
    print("KERNEL_OK")
</pallas_src>

<mosaic_0001>
module attributes {stable_mosaic.version = 11 : i64} {
  func.func @_encoder_kernel(%arg0: i32, %arg1: memref<32x128xf32, #tpu.memory_space<vmem>>, %arg2: memref<2x16xf32, #tpu.memory_space<vmem>>, %arg3: memref<1x128xf32, #tpu.memory_space<vmem>>, %arg4: memref<1x128xf32, #tpu.memory_space<vmem>>, %arg5: memref<1x128x384xbf16, #tpu.memory_space<vmem>>, %arg6: memref<1x1x384xf32, #tpu.memory_space<vmem>>, %arg7: memref<1x128x128xbf16, #tpu.memory_space<vmem>>, %arg8: memref<1x1x128xf32, #tpu.memory_space<vmem>>, %arg9: memref<1x1x128xf32, #tpu.memory_space<vmem>>, %arg10: memref<1x1x128xf32, #tpu.memory_space<vmem>>, %arg11: memref<1x128x256xbf16, #tpu.memory_space<vmem>>, %arg12: memref<1x1x256xf32, #tpu.memory_space<vmem>>, %arg13: memref<1x256x128xbf16, #tpu.memory_space<vmem>>, %arg14: memref<1x1x128xf32, #tpu.memory_space<vmem>>, %arg15: memref<1x1x128xf32, #tpu.memory_space<vmem>>, %arg16: memref<1x1x128xf32, #tpu.memory_space<vmem>>, %arg17: memref<128x128xbf16, #tpu.memory_space<vmem>>, %arg18: memref<1x128xf32, #tpu.memory_space<vmem>>, %arg19: memref<128x4xbf16, #tpu.memory_space<vmem>>, %arg20: memref<1x4xf32, #tpu.memory_space<vmem>>, %arg21: memref<2x4xf32, #tpu.memory_space<vmem>>, %arg22: memref<32x128xbf16, #tpu.memory_space<vmem>>) attributes {dimension_semantics = [#tpu.dimension_semantics<arbitrary>], iteration_bounds = array<i64: 2>, scalar_prefetch = 0 : i64, scratch_operands = 1 : i64, tpu.core_type = #tpu.core_type<tc>, window_params = [{pipeline_mode = #tpu.pipeline_mode<synchronous>, transform_indices = @transform_0, window_bounds = array<i64: 32, 128>}, {pipeline_mode = #tpu.pipeline_mode<synchronous>, transform_indices = @transform_1, window_bounds = array<i64: 2, 16>}, {pipeline_mode = #tpu.pipeline_mode<synchronous>, transform_indices = @transform_2, window_bounds = array<i64: 1, 128>}, {pipeline_mode = #tpu.pipeline_mode<synchronous>, transform_indices = @transform_3, window_bounds = array<i64: 1, 128>}, {transform_indices = @transform_4, window_bounds = array<i64: 1, 128, 384>}, {transform_indices = @transform_5, window_bounds = array<i64: 1, 1, 384>}, {transform_indices = @transform_6, window_bounds = array<i64: 1, 128, 128>}, {transform_indices = @transform_7, window_bounds = array<i64: 1, 1, 128>}, {transform_indices = @transform_8, window_bounds = array<i64: 1, 1, 128>}, {transform_indices = @transform_9, window_bounds = array<i64: 1, 1, 128>}, {transform_indices = @transform_10, window_bounds = array<i64: 1, 128, 256>}, {transform_indices = @transform_11, window_bounds = array<i64: 1, 1, 256>}, {transform_indices = @transform_12, window_bounds = array<i64: 1, 256, 128>}, {transform_indices = @transform_13, window_bounds = array<i64: 1, 1, 128>}, {transform_indices = @transform_14, window_bounds = array<i64: 1, 1, 128>}, {transform_indices = @transform_15, window_bounds = array<i64: 1, 1, 128>}, {pipeline_mode = #tpu.pipeline_mode<synchronous>, transform_indices = @transform_16, window_bounds = array<i64: 128, 128>}, {pipeline_mode = #tpu.pipeline_mode<synchronous>, transform_indices = @transform_17, window_bounds = array<i64: 1, 128>}, {pipeline_mode = #tpu.pipeline_mode<synchronous>, transform_indices = @transform_18, window_bounds = array<i64: 128, 4>}, {pipeline_mode = #tpu.pipeline_mode<synchronous>, transform_indices = @transform_19, window_bounds = array<i64: 1, 4>}, {pipeline_mode = #tpu.pipeline_mode<synchronous>, transform_indices = @transform_20, window_bounds = array<i64: 2, 4>}]} {
    %c0_i32 = arith.constant 0 : i32
    %0 = arith.cmpi eq, %arg0, %c0_i32 : i32
    %1 = arith.extui %0 : i1 to i32
    %c0_i32_0 = arith.constant 0 : i32
    %2 = arith.cmpi ne, %1, %c0_i32_0 : i32
    scf.if %2 {
      %c0_89 = arith.constant 0 : index
      %c0_90 = arith.constant 0 : index
      %249 = vector.load %arg1[%c0_89, %c0_90] : memref<32x128xf32, #tpu.memory_space<vmem>>, vector<32x128xf32>
      %c0_91 = arith.constant 0 : index
      %c0_92 = arith.constant 0 : index
      %250 = vector.load %arg3[%c0_91, %c0_92] : memref<1x128xf32, #tpu.memory_space<vmem>>, vector<1x128xf32>
      %c0_93 = arith.constant 0 : index
      %c0_94 = arith.constant 0 : index
      %251 = vector.load %arg4[%c0_93, %c0_94] : memref<1x128xf32, #tpu.memory_space<vmem>>, vector<1x128xf32>
      %cst_95 = arith.constant dense<0.000000e+00> : vector<32xf32>
      %252 = vector.multi_reduction <add>, %249, %cst_95 [1] : vector<32x128xf32> to vector<32xf32>
      %253 = vector.shape_cast %252 : vector<32xf32> to vector<32x1xf32>
      %cst_96 = arith.constant 1.280000e+02 : f32
      %254 = vector.broadcast %cst_96 : f32 to vector<32x1xf32>
      %255 = arith.divf %253, %254 : vector<32x1xf32>
      %256 = vector.broadcast %255 : vector<32x1xf32> to vector<32x128xf32>
      %257 = arith.subf %249, %256 : vector<32x128xf32>
      %258 = arith.mulf %257, %257 : vector<32x128xf32>
      %cst_97 = arith.constant dense<0.000000e+00> : vector<32xf32>
      %259 = vector.multi_reduction <add>, %258, %cst_97 [1] : vector<32x128xf32> to vector<32xf32>
      %260 = vector.shape_cast %259 : vector<32xf32> to vector<32x1xf32>
      %cst_98 = arith.constant 1.280000e+02 : f32
      %261 = vector.broadcast %cst_98 : f32 to vector<32x1xf32>
      %262 = arith.divf %260, %261 : vector<32x1xf32>
      %cst_99 = arith.constant 9.99999974E-6 : f32
      %263 = vector.broadcast %cst_99 : f32 to vector<32x1xf32>
      %264 = arith.addf %262, %263 : vector<32x1xf32>
      %265 = math.rsqrt %264 : vector<32x1xf32>
      %266 = vector.broadcast %265 : vector<32x1xf32> to vector<32x128xf32>
      %267 = arith.mulf %257, %266 : vector<32x128xf32>
      %268 = vector.broadcast %250 : vector<1x128xf32> to vector<32x128xf32>
      %269 = arith.mulf %267, %268 : vector<32x128xf32>
      %270 = vector.broadcast %251 : vector<1x128xf32> to vector<32x128xf32>
      %271 = arith.addf %269, %270 : vector<32x128xf32>
      %272 = arith.truncf %271 : vector<32x128xf32> to vector<32x128xbf16>
      %c0_100 = arith.constant 0 : index
      %c0_101 = arith.constant 0 : index
      %273 = vector.load %arg22[%c0_100, %c0_101] : memref<32x128xbf16, #tpu.memory_space<vmem>>, vector<32x128xbf16>
      tpu.vector_store %arg22[%c0_100, %c0_101], %272 {strides = array<i32>} : memref<32x128xbf16, #tpu.memory_space<vmem>>, vector<32x128xbf16>,
    } else {
    }
    %c0 = arith.constant 0 : index
    %c0_1 = arith.constant 0 : index
    %3 = vector.load %arg22[%c0, %c0_1] : memref<32x128xbf16, #tpu.memory_space<vmem>>, vector<32x128xbf16>
    %c0_2 = arith.constant 0 : index
    %c0_3 = arith.constant 0 : index
    %c0_4 = arith.constant 0 : index
    %4 = vector.load %arg5[%c0_2, %c0_3, %c0_4] : memref<1x128x384xbf16, #tpu.memory_space<vmem>>, vector<1x128x384xbf16>
    %5 = vector.shape_cast %4 : vector<1x128x384xbf16> to vector<128x384xbf16>
    %cst = arith.constant dense<0.000000e+00> : vector<32x384xf32>
    %6 = tpu.matmul %3, %5, %cst {dimension_numbers = #tpu.dot_dimension_numbers<[1], [0], [0], [1], [0, 0, 1, 1], [], []>} : vector<32x128xbf16>, vector<128x384xbf16>, vector<32x384xf32> -> vector<32x384xf32>
    %c0_5 = arith.constant 0 : index
    %c0_6 = arith.constant 0 : index
    %c0_7 = arith.constant 0 : index
    %7 = vector.load %arg6[%c0_5, %c0_6, %c0_7] : memref<1x1x384xf32, #tpu.memory_space<vmem>>, vector<1x1x384xf32>
    %8 = vector.shape_cast %7 : vector<1x1x384xf32> to vector<1x384xf32>
    %9 = vector.broadcast %8 : vector<1x384xf32> to vector<32x384xf32>
    %10 = arith.addf %6, %9 : vector<32x384xf32>
    %11 = vector.extract_strided_slice %10 {offsets = [0, 0], sizes = [32, 128], strides = [1, 1]} : vector<32x384xf32> to vector<32x128xf32>
    %12 = vector.extract_strided_slice %10 {offsets = [0, 128], sizes = [32, 128], strides = [1, 1]} : vector<32x384xf32> to vector<32x128xf32>
    %13 = vector.extract_strided_slice %10 {offsets = [0, 256], sizes = [32, 128], strides = [1, 1]} : vector<32x384xf32> to vector<32x128xf32>
    %14 = tpu.iota {dimensions = array<i32: 1>} : vector<1x128xi32>
    %c0_i32_8 = arith.constant 0 : i32
    %15 = vector.broadcast %c0_i32_8 : i32 to vector<1x128xi32>
    %16 = arith.cmpi sge, %14, %15 : vector<1x128xi32>
    %c32_i32 = arith.constant 32 : i32
    %17 = vector.broadcast %c32_i32 : i32 to vector<1x128xi32>
    %18 = arith.cmpi slt, %14, %17 : vector<1x128xi32>
    %19 = arith.andi %16, %18 : vector<1x128xi1>
    %cst_9 = arith.constant 1.000000e+00 : f32
    %cst_10 = arith.constant 0.000000e+00 : f32
    %20 = vector.broadcast %cst_9 : f32 to vector<1x128xf32>
    %21 = vector.broadcast %cst_10 : f32 to vector<1x128xf32>
    %22 = arith.select %19, %20, %21 : vector<1x128xi1>, vector<1x128xf32>
    %c32_i32_11 = arith.constant 32 : i32
    %23 = vector.broadcast %c32_i32_11 : i32 to vector<1x128xi32>
    %24 = arith.cmpi sge, %14, %23 : vector<1x128xi32>
    %c64_i32 = arith.constant 64 : i32
    %25 = vector.broadcast %c64_i32 : i32 to vector<1x128xi32>
    %26 = arith.cmpi slt, %14, %25 : vector<1x128xi32>
    %27 = arith.andi %24, %26 : vector<1x128xi1>
    %cst_12 = arith.constant 1.000000e+00 : f32
    %cst_13 = arith.constant 0.000000e+00 : f32
    %28 = vector.broadcast %cst_12 : f32 to vector<1x128xf32>
    %29 = vector.broadcast %cst_13 : f32 to vector<1x128xf32>
    %30 = arith.select %27, %28, %29 : vector<1x128xi1>, vector<1x128xf32>
    %c64_i32_14 = arith.constant 64 : i32
    %31 = vector.broadcast %c64_i32_14 : i32 to vector<1x128xi32>
    %32 = arith.cmpi sge, %14, %31 : vector<1x128xi32>
    %c96_i32 = arith.constant 96 : i32
    %33 = vector.broadcast %c96_i32 : i32 to vector<1x128xi32>
    %34 = arith.cmpi slt, %14, %33 : vector<1x128xi32>
    %35 = arith.andi %32, %34 : vector<1x128xi1>
    %cst_15 = arith.constant 1.000000e+00 : f32
    %cst_16 = arith.constant 0.000000e+00 : f32
    %36 = vector.broadcast %cst_15 : f32 to vector<1x128xf32>
    %37 = vector.broadcast %cst_16 : f32 to vector<1x128xf32>
    %38 = arith.select %35, %36, %37 : vector<1x128xi1>, vector<1x128xf32>
    %c96_i32_17 = arith.constant 96 : i32
    %39 = vector.broadcast %c96_i32_17 : i32 to vector<1x128xi32>
    %40 = arith.cmpi sge, %14, %39 : vector<1x128xi32>
    %c128_i32 = arith.constant 128 : i32
    %41 = vector.broadcast %c128_i32 : i32 to vector<1x128xi32>
    %42 = arith.cmpi slt, %14, %41 : vector<1x128xi32>
    %43 = arith.andi %40, %42 : vector<1x128xi1>
    %cst_18 = arith.constant 1.000000e+00 : f32
    %cst_19 = arith.constant 0.000000e+00 : f32
    %44 = vector.broadcast %cst_18 : f32 to vector<1x128xf32>
    %45 = vector.broadcast %cst_19 : f32 to vector<1x128xf32>
    %46 = arith.select %43, %44, %45 : vector<1x128xi1>, vector<1x128xf32>
    %47 = vector.extract_strided_slice %11 {offsets = [0, 0], sizes = [16, 128], strides = [1, 1]} : vector<32x128xf32> to vector<16x128xf32>
    %48 = vector.extract_strided_slice %12 {offsets = [0, 0], sizes = [16, 128], strides = [1, 1]} : vector<32x128xf32> to vector<16x128xf32>
    %49 = vector.extract_strided_slice %13 {offsets = [0, 0], sizes = [16, 128], strides = [1, 1]} : vector<32x128xf32> to vector<16x128xf32>
    %50 = vector.broadcast %22 : vector<1x128xf32> to vector<16x128xf32>
    %51 = arith.mulf %47, %50 : vector<16x128xf32>
    %52 = vector.broadcast %30 : vector<1x128xf32> to vector<16x128xf32>
    %53 = arith.mulf %47, %52 : vector<16x128xf32>
    %54 = vector.broadcast %38 : vector<1x128xf32> to vector<16x128xf32>
    %55 = arith.mulf %47, %54 : vector<16x128xf32>
    %56 = vector.broadcast %46 : vector<1x128xf32> to vector<16x128xf32>
    %57 = arith.mulf %47, %56 : vector<16x128xf32>
    %58 = tpu.concatenate %51, %53, %55, %57 in 0 : vector<16x128xf32>, vector<16x128xf32>, vector<16x128xf32>, vector<16x128xf32> -> vector<64x128xf32>
    %59 = arith.truncf %58 : vector<64x128xf32> to vector<64x128xbf16>
    %60 = arith.truncf %48 : vector<16x128xf32> to vector<16x128xbf16>
    %cst_20 = arith.constant dense<0.000000e+00> : vector<64x16xf32>
    %61 = tpu.matmul %59, %60, %cst_20 {dimension_numbers = #tpu.dot_dimension_numbers<[1], [1], [0], [0], [0, 0, 1, 0], [], []>} : vector<64x128xbf16>, vector<16x128xbf16>, vector<64x16xf32> -> vector<64x16xf32>
    %c0_21 = arith.constant 0 : index
    %c0_22 = arith.constant 0 : index
    %62 = vector.load %arg2[%c0_21, %c0_22] : memref<2x16xf32, #tpu.memory_space<vmem>>, vector<1x16xf32>
    %63 = vector.broadcast %62 : vector<1x16xf32> to vector<64x16xf32>
    %64 = arith.addf %61, %63 : vector<64x16xf32>
    %cst_23 = arith.constant dense<0xFF800000> : vector<64xf32>
    %65 = vector.multi_reduction <maximumf>, %64, %cst_23 [1] : vector<64x16xf32> to vector<64xf32>
    %66 = vector.shape_cast %65 : vector<64xf32> to vector<64x1xf32>
    %67 = vector.broadcast %66 : vector<64x1xf32> to vector<64x16xf32>
    %68 = arith.subf %64, %67 : vector<64x16xf32>
    %69 = math.exp %68 : vector<64x16xf32>
    %cst_24 = arith.constant dense<0.000000e+00> : vector<64xf32>
    %70 = vector.multi_reduction <add>, %69, %cst_24 [1] : vector<64x16xf32> to vector<64xf32>
    %71 = vector.shape_cast %70 : vector<64xf32> to vector<64x1xf32>
    %72 = tpu.reciprocal %71 {approx = true} : vector<64x1xf32> -> vector<64x1xf32>
    %73 = vector.broadcast %72 : vector<64x1xf32> to vector<64x16xf32>
    %74 = arith.mulf %69, %73 : vector<64x16xf32>
    %75 = arith.truncf %74 : vector<64x16xf32> to vector<64x16xbf16>
    %cst_25 = arith.constant 0.000000e+00 : f32
    %76 = vector.broadcast %cst_25 : f32 to vector<16x128xf32>
    %77 = vector.extract_strided_slice %75 {offsets = [0, 0], sizes = [16, 16], strides = [1, 1]} : vector<64x16xbf16> to vector<16x16xbf16>
    %78 = vector.broadcast %22 : vector<1x128xf32> to vector<16x128xf32>
    %79 = arith.mulf %49, %78 : vector<16x128xf32>
    %80 = arith.truncf %79 : vector<16x128xf32> to vector<16x128xbf16>
    %cst_26 = arith.constant dense<0.000000e+00> : vector<16x128xf32>
    %81 = tpu.matmul %77, %80, %cst_26 {dimension_numbers = #tpu.dot_dimension_numbers<[1], [0], [0], [1], [0, 0, 1, 1], [], []>} : vector<16x16xbf16>, vector<16x128xbf16>, vector<16x128xf32> -> vector<16x128xf32>
    %82 = arith.addf %76, %81 : vector<16x128xf32>
    %83 = vector.extract_strided_slice %75 {offsets = [16, 0], sizes = [16, 16], strides = [1, 1]} : vector<64x16xbf16> to vector<16x16xbf16>
    %84 = vector.broadcast %30 : vector<1x128xf32> to vector<16x128xf32>
    %85 = arith.mulf %49, %84 : vector<16x128xf32>
    %86 = arith.truncf %85 : vector<16x128xf32> to vector<16x128xbf16>
    %cst_27 = arith.constant dense<0.000000e+00> : vector<16x128xf32>
    %87 = tpu.matmul %83, %86, %cst_27 {dimension_numbers = #tpu.dot_dimension_numbers<[1], [0], [0], [1], [0, 0, 1, 1], [], []>} : vector<16x16xbf16>, vector<16x128xbf16>, vector<16x128xf32> -> vector<16x128xf32>
    %88 = arith.addf %82, %87 : vector<16x128xf32>
    %89 = vector.extract_strided_slice %75 {offsets = [32, 0], sizes = [16, 16], strides = [1, 1]} : vector<64x16xbf16> to vector<16x16xbf16>
    %90 = vector.broadcast %38 : vector<1x128xf32> to vector<16x128xf32>
    %91 = arith.mulf %49, %90 : vector<16x128xf32>
    %92 = arith.truncf %91 : vector<16x128xf32> to vector<16x128xbf16>
    %cst_28 = arith.constant dense<0.000000e+00> : vector<16x128xf32>
    %93 = tpu.matmul %89, %92, %cst_28 {dimension_numbers = #tpu.dot_dimension_numbers<[1], [0], [0], [1], [0, 0, 1, 1], [], []>} : vector<16x16xbf16>, vector<16x128xbf16>, vector<16x128xf32> -> vector<16x128xf32>
    %94 = arith.addf %88, %93 : vector<16x128xf32>
    %95 = vector.extract_strided_slice %75 {offsets = [48, 0], sizes = [16, 16], strides = [1, 1]} : vector<64x16xbf16> to vector<16x16xbf16>
    %96 = vector.broadcast %46 : vector<1x128xf32> to vector<16x128xf32>
    %97 = arith.mulf %49, %96 : vector<16x128xf32>
    %98 = arith.truncf %97 : vector<16x128xf32> to vector<16x128xbf16>
    %cst_29 = arith.constant dense<0.000000e+00> : vector<16x128xf32>
    %99 = tpu.matmul %95, %98, %cst_29 {dimension_numbers = #tpu.dot_dimension_numbers<[1], [0], [0], [1], [0, 0, 1, 1], [], []>} : vector<16x16xbf16>, vector<16x128xbf16>, vector<16x128xf32> -> vector<16x128xf32>
    %100 = arith.addf %94, %99 : vector<16x128xf32>
    %101 = vector.extract_strided_slice %11 {offsets = [16, 0], sizes = [16, 128], strides = [1, 1]} : vector<32x128xf32> to vector<16x128xf32>
    %102 = vector.extract_strided_slice %12 {offsets = [16, 0], sizes = [16, 128], strides = [1, 1]} : vector<32x128xf32> to vector<16x128xf32>
    %103 = vector.extract_strided_slice %13 {offsets = [16, 0], sizes = [16, 128], strides = [1, 1]} : vector<32x128xf32> to vector<16x128xf32>
    %104 = vector.broadcast %22 : vector<1x128xf32> to vector<16x128xf32>
    %105 = arith.mulf %101, %104 : vector<16x128xf32>
    %106 = vector.broadcast %30 : vector<1x128xf32> to vector<16x128xf32>
    %107 = arith.mulf %101, %106 : vector<16x128xf32>
    %108 = vector.broadcast %38 : vector<1x128xf32> to vector<16x128xf32>
    %109 = arith.mulf %101, %108 : vector<16x128xf32>
    %110 = vector.broadcast %46 : vector<1x128xf32> to vector<16x128xf32>
    %111 = arith.mulf %101, %110 : vector<16x128xf32>
    %112 = tpu.concatenate %105, %107, %109, %111 in 0 : vector<16x128xf32>, vector<16x128xf32>, vector<16x128xf32>, vector<16x128xf32> -> vector<64x128xf32>
    %113 = arith.truncf %112 : vector<64x128xf32> to vector<64x128xbf16>
    %114 = arith.truncf %102 : vector<16x128xf32> to vector<16x128xbf16>
    %cst_30 = arith.constant dense<0.000000e+00> : vector<64x16xf32>
    %115 = tpu.matmul %113, %114, %cst_30 {dimension_numbers = #tpu.dot_dimension_numbers<[1], [1], [0], [0], [0, 0, 1, 0], [], []>} : vector<64x128xbf16>, vector<16x128xbf16>, vector<64x16xf32> -> vector<64x16xf32>
    %c1 = arith.constant 1 : index
    %c0_31 = arith.constant 0 : index
    %116 = vector.load %arg2[%c1, %c0_31] : memref<2x16xf32, #tpu.memory_space<vmem>>, vector<1x16xf32>
    %117 = vector.broadcast %116 : vector<1x16xf32> to vector<64x16xf32>
    %118 = arith.addf %115, %117 : vector<64x16xf32>
    %cst_32 = arith.constant dense<0xFF800000> : vector<64xf32>
    %119 = vector.multi_reduction <maximumf>, %118, %cst_32 [1] : vector<64x16xf32> to vector<64xf32>
    %120 = vector.shape_cast %119 : vector<64xf32> to vector<64x1xf32>
    %121 = vector.broadcast %120 : vector<64x1xf32> to vector<64x16xf32>
    %122 = arith.subf %118, %121 : vector<64x16xf32>
    %123 = math.exp %122 : vector<64x16xf32>
    %cst_33 = arith.constant dense<0.000000e+00> : vector<64xf32>
    %124 = vector.multi_reduction <add>, %123, %cst_33 [1] : vector<64x16xf32> to vector<64xf32>
    %125 = vector.shape_cast %124 : vector<64xf32> to vector<64x1xf32>
    %126 = tpu.reciprocal %125 {approx = true} : vector<64x1xf32> -> vector<64x1xf32>
    %127 = vector.broadcast %126 : vector<64x1xf32> to vector<64x16xf32>
    %128 = arith.mulf %123, %127 : vector<64x16xf32>
    %129 = arith.truncf %128 : vector<64x16xf32> to vector<64x16xbf16>
    %cst_34 = arith.constant 0.000000e+00 : f32
    %130 = vector.broadcast %cst_34 : f32 to vector<16x128xf32>
    %131 = vector.extract_strided_slice %129 {offsets = [0, 0], sizes = [16, 16], strides = [1, 1]} : vector<64x16xbf16> to vector<16x16xbf16>
    %132 = vector.broadcast %22 : vector<1x128xf32> to vector<16x128xf32>
    %133 = arith.mulf %103, %132 : vector<16x128xf32>
    %134 = arith.truncf %133 : vector<16x128xf32> to vector<16x128xbf16>
    %cst_35 = arith.constant dense<0.000000e+00> : vector<16x128xf32>
    %135 = tpu.matmul %131, %134, %cst_35 {dimension_numbers = #tpu.dot_dimension_numbers<[1], [0], [0], [1], [0, 0, 1, 1], [], []>} : vector<16x16xbf16>, vector<16x128xbf16>, vector<16x128xf32> -> vector<16x128xf32>
    %136 = arith.addf %130, %135 : vector<16x128xf32>
    %137 = vector.extract_strided_slice %129 {offsets = [16, 0], sizes = [16, 16], strides = [1, 1]} : vector<64x16xbf16> to vector<16x16xbf16>
    %138 = vector.broadcast %30 : vector<1x128xf32> to vector<16x128xf32>
    %139 = arith.mulf %103, %138 : vector<16x128xf32>
    %140 = arith.truncf %139 : vector<16x128xf32> to vector<16x128xbf16>
    %cst_36 = arith.constant dense<0.000000e+00> : vector<16x128xf32>
    %141 = tpu.matmul %137, %140, %cst_36 {dimension_numbers = #tpu.dot_dimension_numbers<[1], [0], [0], [1], [0, 0, 1, 1], [], []>} : vector<16x16xbf16>, vector<16x128xbf16>, vector<16x128xf32> -> vector<16x128xf32>
    %142 = arith.addf %136, %141 : vector<16x128xf32>
    %143 = vector.extract_strided_slice %129 {offsets = [32, 0], sizes = [16, 16], strides = [1, 1]} : vector<64x16xbf16> to vector<16x16xbf16>
    %144 = vector.broadcast %38 : vector<1x128xf32> to vector<16x128xf32>
    %145 = arith.mulf %103, %144 : vector<16x128xf32>
    %146 = arith.truncf %145 : vector<16x128xf32> to vector<16x128xbf16>
    %cst_37 = arith.constant dense<0.000000e+00> : vector<16x128xf32>
    %147 = tpu.matmul %143, %146, %cst_37 {dimension_numbers = #tpu.dot_dimension_numbers<[1], [0], [0], [1], [0, 0, 1, 1], [], []>} : vector<16x16xbf16>, vector<16x128xbf16>, vector<16x128xf32> -> vector<16x128xf32>
    %148 = arith.addf %142, %147 : vector<16x128xf32>
    %149 = vector.extract_strided_slice %129 {offsets = [48, 0], sizes = [16, 16], strides = [1, 1]} : vector<64x16xbf16> to vector<16x16xbf16>
    %150 = vector.broadcast %46 : vector<1x128xf32> to vector<16x128xf32>
    %151 = arith.mulf %103, %150 : vector<16x128xf32>
    %152 = arith.truncf %151 : vector<16x128xf32> to vector<16x128xbf16>
    %cst_38 = arith.constant dense<0.000000e+00> : vector<16x128xf32>
    %153 = tpu.matmul %149, %152, %cst_38 {dimension_numbers = #tpu.dot_dimension_numbers<[1], [0], [0], [1], [0, 0, 1, 1], [], []>} : vector<16x16xbf16>, vector<16x128xbf16>, vector<16x128xf32> -> vector<16x128xf32>
    %154 = arith.addf %148, %153 : vector<16x128xf32>
    %155 = tpu.concatenate %100, %154 in 0 : vector<16x128xf32>, vector<16x128xf32> -> vector<32x128xf32>
    %156 = arith.truncf %155 : vector<32x128xf32> to vector<32x128xbf16>
    %c0_39 = arith.constant 0 : index
    %c0_40 = arith.constant 0 : index
    %c0_41 = arith.constant 0 : index
    %157 = vector.load %arg7[%c0_39, %c0_40, %c0_41] : memref<1x128x128xbf16, #tpu.memory_space<vmem>>, vector<1x128x128xbf16>
    %158 = vector.shape_cast %157 : vector<1x128x128xbf16> to vector<128x128xbf16>
    %cst_42 = arith.constant dense<0.000000e+00> : vector<32x128xf32>
    %159 = tpu.matmul %156, %158, %cst_42 {dimension_numbers = #tpu.dot_dimension_numbers<[1], [0], [0], [1], [0, 0, 1, 1], [], []>} : vector<32x128xbf16>, vector<128x128xbf16>, vector<32x128xf32> -> vector<32x128xf32>
    %c0_43 = arith.constant 0 : index
    %c0_44 = arith.constant 0 : index
    %c0_45 = arith.constant 0 : index
    %160 = vector.load %arg8[%c0_43, %c0_44, %c0_45] : memref<1x1x128xf32, #tpu.memory_space<vmem>>, vector<1x1x128xf32>
    %161 = vector.shape_cast %160 : vector<1x1x128xf32> to vector<1x128xf32>
    %162 = vector.broadcast %161 : vector<1x128xf32> to vector<32x128xf32>
    %163 = arith.addf %159, %162 : vector<32x128xf32>
    %164 = arith.extf %3 : vector<32x128xbf16> to vector<32x128xf32>
    %165 = arith.addf %163, %164 : vector<32x128xf32>
    %c0_46 = arith.constant 0 : index
    %c0_47 = arith.constant 0 : index
    %c0_48 = arith.constant 0 : index
    %166 = vector.load %arg9[%c0_46, %c0_47, %c0_48] : memref<1x1x128xf32, #tpu.memory_space<vmem>>, vector<1x1x128xf32>
    %167 = vector.shape_cast %166 : vector<1x1x128xf32> to vector<1x128xf32>
    %c0_49 = arith.constant 0 : index
    %c0_50 = arith.constant 0 : index
    %c0_51 = arith.constant 0 : index
    %168 = vector.load %arg10[%c0_49, %c0_50, %c0_51] : memref<1x1x128xf32, #tpu.memory_space<vmem>>, vector<1x1x128xf32>
    %169 = vector.shape_cast %168 : vector<1x1x128xf32> to vector<1x128xf32>
    %cst_52 = arith.constant dense<0.000000e+00> : vector<32xf32>
    %170 = vector.multi_reduction <add>, %165, %cst_52 [1] : vector<32x128xf32> to vector<32xf32>
    %171 = vector.shape_cast %170 : vector<32xf32> to vector<32x1xf32>
    %cst_53 = arith.constant 1.280000e+02 : f32
    %172 = vector.broadcast %cst_53 : f32 to vector<32x1xf32>
    %173 = arith.divf %171, %172 : vector<32x1xf32>
    %174 = vector.broadcast %173 : vector<32x1xf32> to vector<32x128xf32>
    %175 = arith.subf %165, %174 : vector<32x128xf32>
    %176 = arith.mulf %175, %175 : vector<32x128xf32>
    %cst_54 = arith.constant dense<0.000000e+00> : vector<32xf32>
    %177 = vector.multi_reduction <add>, %176, %cst_54 [1] : vector<32x128xf32> to vector<32xf32>
    %178 = vector.shape_cast %177 : vector<32xf32> to vector<32x1xf32>
    %cst_55 = arith.constant 1.280000e+02 : f32
    %179 = vector.broadcast %cst_55 : f32 to vector<32x1xf32>
    %180 = arith.divf %178, %179 : vector<32x1xf32>
    %cst_56 = arith.constant 9.99999974E-6 : f32
    %181 = vector.broadcast %cst_56 : f32 to vector<32x1xf32>
    %182 = arith.addf %180, %181 : vector<32x1xf32>
    %183 = math.rsqrt %182 : vector<32x1xf32>
    %184 = vector.broadcast %183 : vector<32x1xf32> to vector<32x128xf32>
    %185 = arith.mulf %175, %184 : vector<32x128xf32>
    %186 = vector.broadcast %167 : vector<1x128xf32> to vector<32x128xf32>
    %187 = arith.mulf %185, %186 : vector<32x128xf32>
    %188 = vector.broadcast %169 : vector<1x128xf32> to vector<32x128xf32>
    %189 = arith.addf %187, %188 : vector<32x128xf32>
    %190 = arith.truncf %189 : vector<32x128xf32> to vector<32x128xbf16>
    %c0_57 = arith.constant 0 : index
    %c0_58 = arith.constant 0 : index
    %c0_59 = arith.constant 0 : index
    %191 = vector.load %arg11[%c0_57, %c0_58, %c0_59] : memref<1x128x256xbf16, #tpu.memory_space<vmem>>, vector<1x128x256xbf16>
    %192 = vector.shape_cast %191 : vector<1x128x256xbf16> to vector<128x256xbf16>
    %cst_60 = arith.constant dense<0.000000e+00> : vector<32x256xf32>
    %193 = tpu.matmul %190, %192, %cst_60 {dimension_numbers = #tpu.dot_dimension_numbers<[1], [0], [0], [1], [0, 0, 1, 1], [], []>} : vector<32x128xbf16>, vector<128x256xbf16>, vector<32x256xf32> -> vector<32x256xf32>
    %c0_61 = arith.constant 0 : index
    %c0_62 = arith.constant 0 : index
    %c0_63 = arith.constant 0 : index
    %194 = vector.load %arg12[%c0_61, %c0_62, %c0_63] : memref<1x1x256xf32, #tpu.memory_space<vmem>>, vector<1x1x256xf32>
    %195 = vector.shape_cast %194 : vector<1x1x256xf32> to vector<1x256xf32>
    %196 = vector.broadcast %195 : vector<1x256xf32> to vector<32x256xf32>
    %197 = arith.addf %193, %196 : vector<32x256xf32>
    %cst_64 = arith.constant 5.000000e-01 : f32
    %198 = vector.broadcast %cst_64 : f32 to vector<32x256xf32>
    %199 = arith.mulf %198, %197 : vector<32x256xf32>
    %cst_65 = arith.constant 4.471500e-02 : f32
    %200 = vector.broadcast %cst_65 : f32 to vector<32x256xf32>
    %201 = arith.mulf %200, %197 : vector<32x256xf32>
    %202 = arith.mulf %201, %197 : vector<32x256xf32>
    %203 = arith.mulf %202, %197 : vector<32x256xf32>
    %204 = arith.addf %197, %203 : vector<32x256xf32>
    %cst_66 = arith.constant 0.797884583 : f32
    %205 = vector.broadcast %cst_66 : f32 to vector<32x256xf32>
    %206 = arith.mulf %205, %204 : vector<32x256xf32>
    %207 = math.tanh %206 : vector<32x256xf32>
    %cst_67 = arith.constant 1.000000e+00 : f32
    %208 = vector.broadcast %cst_67 : f32 to vector<32x256xf32>
    %209 = arith.addf %208, %207 : vector<32x256xf32>
    %210 = arith.mulf %199, %209 : vector<32x256xf32>
    %211 = arith.truncf %210 : vector<32x256xf32> to vector<32x256xbf16>
    %c0_68 = arith.constant 0 : index
    %c0_69 = arith.constant 0 : index
    %c0_70 = arith.constant 0 : index
    %212 = vector.load %arg13[%c0_68, %c0_69, %c0_70] : memref<1x256x128xbf16, #tpu.memory_space<vmem>>, vector<1x256x128xbf16>
    %213 = vector.shape_cast %212 : vector<1x256x128xbf16> to vector<256x128xbf16>
    %cst_71 = arith.constant dense<0.000000e+00> : vector<32x128xf32>
    %214 = tpu.matmul %211, %213, %cst_71 {dimension_numbers = #tpu.dot_dimension_numbers<[1], [0], [0], [1], [0, 0, 1, 1], [], []>} : vector<32x256xbf16>, vector<256x128xbf16>, vector<32x128xf32> -> vector<32x128xf32>
    %c0_72 = arith.constant 0 : index
    %c0_73 = arith.constant 0 : index
    %c0_74 = arith.constant 0 : index
    %215 = vector.load %arg14[%c0_72, %c0_73, %c0_74] : memref<1x1x128xf32, #tpu.memory_space<vmem>>, vector<1x1x128xf32>
    %216 = vector.shape_cast %215 : vector<1x1x128xf32> to vector<1x128xf32>
    %217 = vector.broadcast %216 : vector<1x128xf32> to vector<32x128xf32>
    %218 = arith.addf %214, %217 : vector<32x128xf32>
    %219 = arith.addf %218, %189 : vector<32x128xf32>
    %c0_75 = arith.constant 0 : index
    %c0_76 = arith.constant 0 : index
    %c0_77 = arith.constant 0 : index
    %220 = vector.load %arg15[%c0_75, %c0_76, %c0_77] : memref<1x1x128xf32, #tpu.memory_space<vmem>>, vector<1x1x128xf32>
    %221 = vector.shape_cast %220 : vector<1x1x128xf32> to vector<1x128xf32>
    %c0_78 = arith.constant 0 : index
    %c0_79 = arith.constant 0 : index
    %c0_80 = arith.constant 0 : index
    %222 = vector.load %arg16[%c0_78, %c0_79, %c0_80] : memref<1x1x128xf32, #tpu.memory_space<vmem>>, vector<1x1x128xf32>
    %223 = vector.shape_cast %222 : vector<1x1x128xf32> to vector<1x128xf32>
    %cst_81 = arith.constant dense<0.000000e+00> : vector<32xf32>
    %224 = vector.multi_reduction <add>, %219, %cst_81 [1] : vector<32x128xf32> to vector<32xf32>
    %225 = vector.shape_cast %224 : vector<32xf32> to vector<32x1xf32>
    %cst_82 = arith.constant 1.280000e+02 : f32
    %226 = vector.broadcast %cst_82 : f32 to vector<32x1xf32>
    %227 = arith.divf %225, %226 : vector<32x1xf32>
    %228 = vector.broadcast %227 : vector<32x1xf32> to vector<32x128xf32>
    %229 = arith.subf %219, %228 : vector<32x128xf32>
    %230 = arith.mulf %229, %229 : vector<32x128xf32>
    %cst_83 = arith.constant dense<0.000000e+00> : vector<32xf32>
    %231 = vector.multi_reduction <add>, %230, %cst_83 [1] : vector<32x128xf32> to vector<32xf32>
    %232 = vector.shape_cast %231 : vector<32xf32> to vector<32x1xf32>
    %cst_84 = arith.constant 1.280000e+02 : f32
    %233 = vector.broadcast %cst_84 : f32 to vector<32x1xf32>
    %234 = arith.divf %232, %233 : vector<32x1xf32>
    %cst_85 = arith.constant 9.99999974E-6 : f32
    %235 = vector.broadcast %cst_85 : f32 to vector<32x1xf32>
    %236 = arith.addf %234, %235 : vector<32x1xf32>
    %237 = math.rsqrt %236 : vector<32x1xf32>
    %238 = vector.broadcast %237 : vector<32x1xf32> to vector<32x128xf32>
    %239 = arith.mulf %229, %238 : vector<32x128xf32>
    %240 = vector.broadcast %221 : vector<1x128xf32> to vector<32x128xf32>
    %241 = arith.mulf %239, %240 : vector<32x128xf32>
    %242 = vector.broadcast %223 : vector<1x128xf32> to vector<32x128xf32>
    %243 = arith.addf %241, %242 : vector<32x128xf32>
    %244 = arith.truncf %243 : vector<32x128xf32> to vector<32x128xbf16>
    %c0_86 = arith.constant 0 : index
    %c0_87 = arith.constant 0 : index
    %245 = vector.load %arg22[%c0_86, %c0_87] : memref<32x128xbf16, #tpu.memory_space<vmem>>, vector<32x128xbf16>
    tpu.vector_store %arg22[%c0_86, %c0_87], %244 {strides = array<i32>} : memref<32x128xbf16, #tpu.memory_space<vmem>>, vector<32x128xbf16>,
    %c1_i32 = arith.constant 1 : i32
    %246 = arith.cmpi eq, %arg0, %c1_i32 : i32
    %247 = arith.extui %246 : i1 to i32
    %c0_i32_88 = arith.constant 0 : i32
    %248 = arith.cmpi ne, %247, %c0_i32_88 : i32
    scf.if %248 {
      %249 = vector.extract_strided_slice %243 {offsets = [0, 0], sizes = [1, 128], strides = [1, 1]} : vector<32x128xf32> to vector<1x128xf32>
      %250 = vector.extract_strided_slice %243 {offsets = [16, 0], sizes = [1, 128], strides = [1, 1]} : vector<32x128xf32> to vector<1x128xf32>
      %251 = tpu.concatenate %249, %250 in 0 : vector<1x128xf32>, vector<1x128xf32> -> vector<2x128xf32>
      %252 = arith.truncf %251 : vector<2x128xf32> to vector<2x128xbf16>
      %c0_89 = arith.constant 0 : index
      %c0_90 = arith.constant 0 : index
      %253 = vector.load %arg17[%c0_89, %c0_90] : memref<128x128xbf16, #tpu.memory_space<vmem>>, vector<128x128xbf16>
      %cst_91 = arith.constant dense<0.000000e+00> : vector<2x128xf32>
      %254 = tpu.matmul %252, %253, %cst_91 {dimension_numbers = #tpu.dot_dimension_numbers<[1], [0], [0], [1], [0, 0, 1, 1], [], []>} : vector<2x128xbf16>, vector<128x128xbf16>, vector<2x128xf32> -> vector<2x128xf32>
      %c0_92 = arith.constant 0 : index
      %c0_93 = arith.constant 0 : index
      %255 = vector.load %arg18[%c0_92, %c0_93] : memref<1x128xf32, #tpu.memory_space<vmem>>, vector<1x128xf32>
      %256 = vector.broadcast %255 : vector<1x128xf32> to vector<2x128xf32>
      %257 = arith.addf %254, %256 : vector<2x128xf32>
      %258 = math.tanh %257 : vector<2x128xf32>
      %259 = arith.truncf %258 : vector<2x128xf32> to vector<2x128xbf16>
      %c0_94 = arith.constant 0 : index
      %c0_95 = arith.constant 0 : index
      %260 = vector.load %arg19[%c0_94, %c0_95] : memref<128x4xbf16, #tpu.memory_space<vmem>>, vector<128x4xbf16>
      %cst_96 = arith.constant dense<0.000000e+00> : vector<2x4xf32>
      %261 = tpu.matmul %259, %260, %cst_96 {dimension_numbers = #tpu.dot_dimension_numbers<[1], [0], [0], [1], [0, 0, 1, 1], [], []>} : vector<2x128xbf16>, vector<128x4xbf16>, vector<2x4xf32> -> vector<2x4xf32>
      %c0_97 = arith.constant 0 : index
      %c0_98 = arith.constant 0 : index
      %262 = vector.load %arg20[%c0_97, %c0_98] : memref<1x4xf32, #tpu.memory_space<vmem>>, vector<1x4xf32>
      %263 = vector.broadcast %262 : vector<1x4xf32> to vector<2x4xf32>
      %264 = arith.addf %261, %263 : vector<2x4xf32>
      %c0_99 = arith.constant 0 : index
      %c0_100 = arith.constant 0 : index
      %265 = vector.load %arg21[%c0_99, %c0_100] : memref<2x4xf32, #tpu.memory_space<vmem>>, vector<2x4xf32>
      tpu.vector_store %arg21[%c0_99, %c0_100], %264 {strides = array<i32>} : memref<2x4xf32, #tpu.memory_space<vmem>>, vector<2x4xf32>,
    } else {
    }
    return
  }
  func.func @transform_0(%arg0: i32) -> (i32, i32) {
    %c0_i32 = arith.constant 0 : i32
    %c0_i32_0 = arith.constant 0 : i32
    %c0_i32_1 = arith.constant 0 : i32
    return %c0_i32, %c0_i32_0 : i32, i32
  }
  func.func @transform_1(%arg0: i32) -> (i32, i32) {
    %c0_i32 = arith.constant 0 : i32
    %c0_i32_0 = arith.constant 0 : i32
    %c0_i32_1 = arith.constant 0 : i32
    return %c0_i32, %c0_i32_0 : i32, i32
  }
  func.func @transform_2(%arg0: i32) -> (i32, i32) {
    %c0_i32 = arith.constant 0 : i32
    %c0_i32_0 = arith.constant 0 : i32
    %c0_i32_1 = arith.constant 0 : i32
    return %c0_i32, %c0_i32_0 : i32, i32
  }
  func.func @transform_3(%arg0: i32) -> (i32, i32) {
    %c0_i32 = arith.constant 0 : i32
    %c0_i32_0 = arith.constant 0 : i32
    %c0_i32_1 = arith.constant 0 : i32
    return %c0_i32, %c0_i32_0 : i32, i32
  }
  func.func @transform_4(%arg0: i32) -> (i32, i32, i32) {
    %c0_i32 = arith.constant 0 : i32
    %c0_i32_0 = arith.constant 0 : i32
    %c0_i32_1 = arith.constant 0 : i32
    return %arg0, %c0_i32, %c0_i32_0 : i32, i32, i32
  }
  func.func @transform_5(%arg0: i32) -> (i32, i32, i32) {
    %c0_i32 = arith.constant 0 : i32
    %c0_i32_0 = arith.constant 0 : i32
    %c0_i32_1 = arith.constant 0 : i32
    return %arg0, %c0_i32, %c0_i32_0 : i32, i32, i32
  }
  func.func @transform_6(%arg0: i32) -> (i32, i32, i32) {
    %c0_i32 = arith.constant 0 : i32
    %c0_i32_0 = arith.constant 0 : i32
    %c0_i32_1 = arith.constant 0 : i32
    return %arg0, %c0_i32, %c0_i32_0 : i32, i32, i32
  }
  func.func @transform_7(%arg0: i32) -> (i32, i32, i32) {
    %c0_i32 = arith.constant 0 : i32
    %c0_i32_0 = arith.constant 0 : i32
    %c0_i32_1 = arith.constant 0 : i32
    return %arg0, %c0_i32, %c0_i32_0 : i32, i32, i32
  }
  func.func @transform_8(%arg0: i32) -> (i32, i32, i32) {
    %c0_i32 = arith.constant 0 : i32
    %c0_i32_0 = arith.constant 0 : i32
    %c0_i32_1 = arith.constant 0 : i32
    return %arg0, %c0_i32, %c0_i32_0 : i32, i32, i32
  }
  func.func @transform_9(%arg0: i32) -> (i32, i32, i32) {
    %c0_i32 = arith.constant 0 : i32
    %c0_i32_0 = arith.constant 0 : i32
    %c0_i32_1 = arith.constant 0 : i32
    return %arg0, %c0_i32, %c0_i32_0 : i32, i32, i32
  }
  func.func @transform_10(%arg0: i32) -> (i32, i32, i32) {
    %c0_i32 = arith.constant 0 : i32
    %c0_i32_0 = arith.constant 0 : i32
    %c0_i32_1 = arith.constant 0 : i32
    return %arg0, %c0_i32, %c0_i32_0 : i32, i32, i32
  }
  func.func @transform_11(%arg0: i32) -> (i32, i32, i32) {
    %c0_i32 = arith.constant 0 : i32
    %c0_i32_0 = arith.constant 0 : i32
    %c0_i32_1 = arith.constant 0 : i32
    return %arg0, %c0_i32, %c0_i32_0 : i32, i32, i32
  }
  func.func @transform_12(%arg0: i32) -> (i32, i32, i32) {
    %c0_i32 = arith.constant 0 : i32
    %c0_i32_0 = arith.constant 0 : i32
    %c0_i32_1 = arith.constant 0 : i32
    return %arg0, %c0_i32, %c0_i32_0 : i32, i32, i32
  }
  func.func @transform_13(%arg0: i32) -> (i32, i32, i32) {
    %c0_i32 = arith.constant 0 : i32
    %c0_i32_0 = arith.constant 0 : i32
    %c0_i32_1 = arith.constant 0 : i32
    return %arg0, %c0_i32, %c0_i32_0 : i32, i32, i32
  }
  func.func @transform_14(%arg0: i32) -> (i32, i32, i32) {
    %c0_i32 = arith.constant 0 : i32
    %c0_i32_0 = arith.constant 0 : i32
    %c0_i32_1 = arith.constant 0 : i32
    return %arg0, %c0_i32, %c0_i32_0 : i32, i32, i32
  }
  func.func @transform_15(%arg0: i32) -> (i32, i32, i32) {
    %c0_i32 = arith.constant 0 : i32
    %c0_i32_0 = arith.constant 0 : i32
    %c0_i32_1 = arith.constant 0 : i32
    return %arg0, %c0_i32, %c0_i32_0 : i32, i32, i32
  }
  func.func @transform_16(%arg0: i32) -> (i32, i32) {
    %c0_i32 = arith.constant 0 : i32
    %c0_i32_0 = arith.constant 0 : i32
    %c0_i32_1 = arith.constant 0 : i32
    return %c0_i32, %c0_i32_0 : i32, i32
  }
  func.func @transform_17(%arg0: i32) -> (i32, i32) {
    %c0_i32 = arith.constant 0 : i32
    %c0_i32_0 = arith.constant 0 : i32
    %c0_i32_1 = arith.constant 0 : i32
    return %c0_i32, %c0_i32_0 : i32, i32
  }
  func.func @transform_18(%arg0: i32) -> (i32, i32) {
    %c0_i32 = arith.constant 0 : i32
    %c0_i32_0 = arith.constant 0 : i32
    %c0_i32_1 = arith.constant 0 : i32
    return %c0_i32, %c0_i32_0 : i32, i32
  }
  func.func @transform_19(%arg0: i32) -> (i32, i32) {
    %c0_i32 = arith.constant 0 : i32
    %c0_i32_0 = arith.constant 0 : i32
    %c0_i32_1 = arith.constant 0 : i32
    return %c0_i32, %c0_i32_0 : i32, i32
  }
  func.func @transform_20(%arg0: i32) -> (i32, i32) {
    %c0_i32 = arith.constant 0 : i32
    %c0_i32_0 = arith.constant 0 : i32
    %c0_i32_1 = arith.constant 0 : i32
    return %c0_i32, %c0_i32_0 : i32, i32
  }
}

</mosaic_0001>

<llo_original>
// kernel: roberta_class_forward.1
$region0: #{roberta_class_forward.1}
  #allocation0 [shape = 'u32[]', space=smem, size = 0x4, offset = 0x4, fixed_abs, tag = 'smem constant byte address 0x4 - core index']
  #allocation1 [shape = 'u32[144,128]{1,0:T(1,128)}', space=vmem, size = 0x12000, scoped, tag = 'internal scratch']
  #allocation2 [shape = 'bf16[32,128]{1,0:T(8,128)(2,1)}', space=vmem, size = 0x2000, scoped, tag = 'scratch operand']
  %s0 = inlined_call_operand.vmem [shape: f32[32,128], index: 0, kind: input, shape index: {}]
  %s1 = inlined_call_operand.vmem [shape: f32[2,16], index: 1, kind: input, shape index: {}]
  %s2 = inlined_call_operand.vmem [shape: f32[1,128], index: 2, kind: input, shape index: {}]
  %s3 = inlined_call_operand.hbm [shape: f32[1,128], index: 3, kind: input, shape index: {}]
  %s4 = inlined_call_operand.vmem [shape: bf16[2,128,384], index: 4, kind: input, shape index: {}]
  %s5 = inlined_call_operand.vmem [shape: f32[2,1,384], index: 5, kind: input, shape index: {}]
  %s6 = inlined_call_operand.vmem [shape: bf16[2,128,128], index: 6, kind: input, shape index: {}]
  %s7 = inlined_call_operand.vmem [shape: f32[2,1,128], index: 7, kind: input, shape index: {}]
  %s8 = inlined_call_operand.vmem [shape: f32[2,1,128], index: 8, kind: input, shape index: {}]
  %s9 = inlined_call_operand.hbm [shape: f32[2,1,128], index: 9, kind: input, shape index: {}]
  %s10 = inlined_call_operand.vmem [shape: bf16[2,128,256], index: 10, kind: input, shape index: {}]
  %s11 = inlined_call_operand.hbm [shape: f32[2,1,256], index: 11, kind: input, shape index: {}]
  %s12 = inlined_call_operand.hbm [shape: bf16[2,256,128], index: 12, kind: input, shape index: {}]
  %s13 = inlined_call_operand.hbm [shape: f32[2,1,128], index: 13, kind: input, shape index: {}]
  %s14 = inlined_call_operand.vmem [shape: f32[2,1,128], index: 14, kind: input, shape index: {}]
  %s15 = inlined_call_operand.hbm [shape: f32[2,1,128], index: 15, kind: input, shape index: {}]
  %s16 = inlined_call_operand.vmem [shape: bf16[128,128], index: 16, kind: input, shape index: {}]
  %s17 = inlined_call_operand.hbm [shape: f32[1,128], index: 17, kind: input, shape index: {}]
  %s18 = inlined_call_operand.vmem [shape: bf16[128,4], index: 18, kind: input, shape index: {}]
  %s19 = inlined_call_operand.hbm [shape: f32[1,4], index: 19, kind: input, shape index: {}]
  %s20 = inlined_call_operand.hbm [shape: f32[2,4], index: 20, kind: output, shape index: {}]
  %s21 = sld [smem:[#allocation0]]
  $region153: #{roberta_class_forward.1} parent=0
    _
  %s23 = ssub.s32 1, %s21
  %s24 = scalar_select 0, %s23, %s21
  $region1: #{roberta_class_forward.1} parent=0
    #allocation3 [shape = 'u8[512]{0}', space=vmem, size = 0x400, scoped, tag = 'input window, operand 3, single buffered']
    #allocation4 [shape = 's32[2]{0}', space=sflag, size = 0x8, scoped, tag = 'scoped memory for roberta_class_forward.1']
    #allocation5 [shape = 's32[2]{0}', space=sflag, size = 0x8, scoped, tag = 'scoped memory for roberta_class_forward.1']
    #allocation6 [shape = 'u8[1024]{0}', space=vmem, size = 0x400, scoped, tag = 'input window, operand 9']
    #allocation7 [shape = 's32[2]{0}', space=sflag, size = 0x8, scoped, tag = 'scoped memory for roberta_class_forward.1']
    #allocation8 [shape = 'u8[2048]{0}', space=vmem, size = 0x800, scoped, tag = 'input window, operand 11']
    #allocation9 [shape = 'u8[131072]{0}', space=vmem, size = 0x20000, scoped, tag = 'input window, operand 12']
    #allocation10 [shape = 's32[2]{0}', space=sflag, size = 0x8, scoped, tag = 'scoped memory for roberta_class_forward.1']
    #allocation11 [shape = 'u8[1024]{0}', space=vmem, size = 0x400, scoped, tag = 'input window, operand 13']
    #allocation12 [shape = 'u8[1024]{0}', space=vmem, size = 0x400, scoped, tag = 'input window, operand 15']
    #allocation13 [shape = 's32[2]{0}', space=sflag, size = 0x8, scoped, tag = 'scoped memory for roberta_class_forward.1']
    #allocation14 [shape = 'u8[512]{0}', space=vmem, size = 0x400, scoped, tag = 'input window, operand 17, single buffered']
    #allocation15 [shape = 'u8[512]{0}', space=vmem, size = 0x400, scoped, tag = 'input window, operand 19, single buffered']
    #allocation16 [shape = 's32[1]{0}', space=sflag, size = 0x4, scoped, tag = 'scoped memory for roberta_class_forward.1']
    #allocation17 [shape = 'u8[1024]{0}', space=vmem, size = 0x400, scoped, tag = 'output window, operand 0, single buffered']
    %25 = vsyncpa [#allocation4], 0
    %26 = vsyncpa [#allocation7], 0
    %s27 = scalar_lea.sflag [#allocation7], 1
    %28 = vsyncpa %s27, 0
    %29 = vsyncpa [#allocation10], 0
    %s30 = scalar_lea.sflag [#allocation10], 1
    %31 = vsyncpa %s30, 0
    %32 = vsyncpa [#allocation13], 0
    %s33 = scalar_lea.sflag [#allocation13], 1
    %34 = vsyncpa %s33, 0
    %35 = vsyncpa [#allocation16], 0
    %36 = vsyncpa [#allocation5], 0
    loop: start=0, step=1, limit=4
    $region2: #{roberta_class_forward.1} parent=1 // loop_pre_header
      _
    $region3: #{roberta_class_forward.1} parent=1 // loop_header
      %s38 = sphi 0, %s42
      %p39 = scmp.ge.s32.totalorder %s38, 4
      %s46 = sphi 0, %s46
      %s48 = sphi 0, %s46
      %s49 = sphi 0, %s48
      %s63 = sphi 0, %s49
      %s67 = sphi 0, %s67
      %s69 = sphi 0, %s67
      %s70 = sphi 0, %s69
      %s84 = sphi 0, %s70
      %s88 = sphi 0, %s88
      %s90 = sphi 0, %s88
      %s91 = sphi 0, %s90
      %s105 = sphi 0, %s91
      %s109 = sphi 0, %s109
      %s111 = sphi 0, %s109
      %s112 = sphi 0, %s111
      %s126 = sphi 0, %s112
      %s132 = sphi 0, %s134
      %s135 = sphi 0, %s132
      %s136 = sphi 0, %s135
      %s152 = sphi 0, %s136
      %s158 = sphi 0, %s160
      %s161 = sphi 0, %s158
      %s162 = sphi 0, %s161
      %s178 = sphi 0, %s162
      %s184 = sphi 0, %s186
      %s187 = sphi 0, %s184
      %s188 = sphi 0, %s187
      %s204 = sphi 0, %s188
      %s210 = sphi 0, %s212
      %s213 = sphi 0, %s210
      %s214 = sphi 0, %s213
      %s230 = sphi 0, %s214
      %s236 = sphi 0, %s238
      %s239 = sphi 0, %s236
      %s240 = sphi 0, %s239
      %s256 = sphi 0, %s240
      %s262 = sphi 0, %s264
      %s265 = sphi 0, %s262
      %s266 = sphi 0, %s265
      %s282 = sphi 0, %s266
      %s288 = sphi 0, %s290
      %s291 = sphi 0, %s288
      %s292 = sphi 0, %s291
      %s308 = sphi 0, %s292
      %s314 = sphi 0, %s316
      %s317 = sphi 0, %s314
      %s318 = sphi 0, %s317
      %s334 = sphi 0, %s318
      %s340 = sphi 0, %s342
      %s343 = sphi 0, %s340
      %s344 = sphi 0, %s343
      %s360 = sphi 0, %s344
      %s366 = sphi 0, %s368
      %s369 = sphi 0, %s366
      %s370 = sphi 0, %s369
      %s386 = sphi 0, %s370
      %s392 = sphi 0, %s394
      %s395 = sphi 0, %s392
      %s396 = sphi 0, %s395
      %s412 = sphi 0, %s396
      %s418 = sphi 0, %s420
      %s421 = sphi 0, %s418
      %s422 = sphi 0, %s421
      %s438 = sphi 0, %s422
      %s442 = sphi 0, %s442
      %s444 = sphi 0, %s442
      %s445 = sphi 0, %s444
      %s459 = sphi 0, %s445
      %s463 = sphi 0, %s463
      %s465 = sphi 0, %s463
      %s466 = sphi 0, %s465
      %s480 = sphi 0, %s466
      %s484 = sphi 0, %s484
      %s486 = sphi 0, %s484
      %s487 = sphi 0, %s486
      %s501 = sphi 0, %s487
      %s505 = sphi 0, %s505
      %s507 = sphi 0, %s505
      %s508 = sphi 0, %s507
      %s522 = sphi 0, %s508
      %s526 = sphi 0, %s526
      %s528 = sphi 0, %s526
      %s529 = sphi 0, %s528
      %s543 = sphi 0, %s529
    $region4: #{roberta_class_forward.1} parent=1 // loop_header_branch
      %41 = sbr.rel (%p39) target = $region8
    $region5: #{roberta_class_forward.1} parent=1 // loop_body
      %s43 = ssub.s32 %s38, 1
      %s44 = ssub.s32 %s38, 2
      %s45 = sadd.s32 %s38, 1
      %s47 = sadd.s32 %s46, 1
      %p50 = scmp.eq.s32.totalorder %s38, 1
      %p51 = scmp.ne.s32.totalorder %s46, %s48
      %p52 = scmp.eq.s32.totalorder %s38, 0
      %p53 = por %p51, %p52
      %p54 = scmp.ne.s32.totalorder %s46, %s48
      %p55 = scmp.eq.s32.totalorder %s43, 1
      %p56 = por %p54, %p55
      %p57 = scmp.ne.s32.totalorder %s48, %s49
      %p58 = scmp.eq.s32.totalorder %s43, 0
      %p59 = por %p57, %p58
      %p60 = scmp.ne.s32.totalorder %s48, %s49
      %p61 = scmp.eq.s32.totalorder %s44, 1
      %p62 = por %p60, %p61
      %p64 = scmp.ne.s32.totalorder %s49, %s63
      %p65 = scmp.eq.s32.totalorder %s44, 0
      %p66 = por %p64, %p65
      %s68 = sadd.s32 %s67, 1
      %p71 = scmp.eq.s32.totalorder %s38, 1
      %p72 = scmp.ne.s32.totalorder %s67, %s69
      %p73 = scmp.eq.s32.totalorder %s38, 0
      %p74 = por %p72, %p73
      %p75 = scmp.ne.s32.totalorder %s67, %s69
      %p76 = scmp.eq.s32.totalorder %s43, 1
      %p77 = por %p75, %p76
      %p78 = scmp.ne.s32.totalorder %s69, %s70
      %p79 = scmp.eq.s32.totalorder %s43, 0
      %p80 = por %p78, %p79
      %p81 = scmp.ne.s32.totalorder %s69, %s70
      %p82 = scmp.eq.s32.totalorder %s44, 1
      %p83 = por %p81, %p82
      %p85 = scmp.ne.s32.totalorder %s70, %s84
      %p86 = scmp.eq.s32.totalorder %s44, 0
      %p87 = por %p85, %p86
      %s89 = sadd.s32 %s88, 1
      %p92 = scmp.eq.s32.totalorder %s38, 1
      %p93 = scmp.ne.s32.totalorder %s88, %s90
      %p94 = scmp.eq.s32.totalorder %s38, 0
      %p95 = por %p93, %p94
      %p96 = scmp.ne.s32.totalorder %s88, %s90
      %p97 = scmp.eq.s32.totalorder %s43, 1
      %p98 = por %p96, %p97
      %p99 = scmp.ne.s32.totalorder %s90, %s91
      %p100 = scmp.eq.s32.totalorder %s43, 0
      %p101 = por %p99, %p100
      %p102 = scmp.ne.s32.totalorder %s90, %s91
      %p103 = scmp.eq.s32.totalorder %s44, 1
      %p104 = por %p102, %p103
      %p106 = scmp.ne.s32.totalorder %s91, %s105
      %p107 = scmp.eq.s32.totalorder %s44, 0
      %p108 = por %p106, %p107
      %s110 = sadd.s32 %s109, 1
      %p113 = scmp.eq.s32.totalorder %s38, 1
      %p114 = scmp.ne.s32.totalorder %s109, %s111
      %p115 = scmp.eq.s32.totalorder %s38, 0
      %p116 = por %p114, %p115
      %p117 = scmp.ne.s32.totalorder %s109, %s111
      %p118 = scmp.eq.s32.totalorder %s43, 1
      %p119 = por %p117, %p118
      %p120 = scmp.ne.s32.totalorder %s111, %s112
      %p121 = scmp.eq.s32.totalorder %s43, 0
      %p122 = por %p120, %p121
      %p123 = scmp.ne.s32.totalorder %s111, %s112
      %p124 = scmp.eq.s32.totalorder %s44, 1
      %p125 = por %p123, %p124
      %p127 = scmp.ne.s32.totalorder %s112, %s126
      %p128 = scmp.eq.s32.totalorder %s44, 0
      %p129 = por %p127, %p128
      %s130 = ssub.s32 %s38, %s45
      %p131 = scmp.eq.s32.totalorder %s130, 0
      %s133 = sadd.s32 %s132, 1
      %s134 = scalar_select %p131, %s132, %s133
      %p137 = pneg %p131
      %p138 = scmp.eq.s32.totalorder %s38, 1
      %p139 = por %p137, %p138
      %p140 = scmp.ne.s32.totalorder %s132, %s135
      %p141 = scmp.eq.s32.totalorder %s38, 0
      %p142 = por %p140, %p141
      %p143 = scmp.ne.s32.totalorder %s132, %s135
      %p144 = scmp.eq.s32.totalorder %s43, 1
      %p145 = por %p143, %p144
      %p146 = scmp.ne.s32.totalorder %s135, %s136
      %p147 = scmp.eq.s32.totalorder %s43, 0
      %p148 = por %p146, %p147
      %p149 = scmp.ne.s32.totalorder %s135, %s136
      %p150 = scmp.eq.s32.totalorder %s44, 1
      %p151 = por %p149, %p150
      %p153 = scmp.ne.s32.totalorder %s136, %s152
      %p154 = scmp.eq.s32.totalorder %s44, 0
      %p155 = por %p153, %p154
      %s156 = ssub.s32 %s38, %s45
      %p157 = scmp.eq.s32.totalorder %s156, 0
      %s159 = sadd.s32 %s158, 1
      %s160 = scalar_select %p157, %s158, %s159
      %p163 = pneg %p157
      %p164 = scmp.eq.s32.totalorder %s38, 1
      %p165 = por %p163, %p164
      %p166 = scmp.ne.s32.totalorder %s158, %s161
      %p167 = scmp.eq.s32.totalorder %s38, 0
      %p168 = por %p166, %p167
      %p169 = scmp.ne.s32.totalorder %s158, %s161
      %p170 = scmp.eq.s32.totalorder %s43, 1
      %p171 = por %p169, %p170
      %p172 = scmp.ne.s32.totalorder %s161, %s162
      %p173 = scmp.eq.s32.totalorder %s43, 0
      %p174 = por %p172, %p173
      %p175 = scmp.ne.s32.totalorder %s161, %s162
      %p176 = scmp.eq.s32.totalorder %s44, 1
      %p177 = por %p175, %p176
      %p179 = scmp.ne.s32.totalorder %s162, %s178
      %p180 = scmp.eq.s32.totalorder %s44, 0
      %p181 = por %p179, %p180
      %s182 = ssub.s32 %s38, %s45
      %p183 = scmp.eq.s32.totalorder %s182, 0
      %s185 = sadd.s32 %s184, 1
      %s186 = scalar_select %p183, %s184, %s185
      %p189 = pneg %p183
      %p190 = scmp.eq.s32.totalorder %s38, 1
      %p191 = por %p189, %p190
      %p192 = scmp.ne.s32.totalorder %s184, %s187
      %p193 = scmp.eq.s32.totalorder %s38, 0
      %p194 = por %p192, %p193
      %p195 = scmp.ne.s32.totalorder %s184, %s187
      %p196 = scmp.eq.s32.totalorder %s43, 1
      %p197 = por %p195, %p196
      %p198 = scmp.ne.s32.totalorder %s187, %s188
      %p199 = scmp.eq.s32.totalorder %s43, 0
      %p200 = por %p198, %p199
      %p201 = scmp.ne.s32.totalorder %s187, %s188
      %p202 = scmp.eq.s32.totalorder %s44, 1
      %p203 = por %p201, %p202
      %p205 = scmp.ne.s32.totalorder %s188, %s204
      %p206 = scmp.eq.s32.totalorder %s44, 0
      %p207 = por %p205, %p206
      %s208 = ssub.s32 %s38, %s45
      %p209 = scmp.eq.s32.totalorder %s208, 0
      %s211 = sadd.s32 %s210, 1
      %s212 = scalar_select %p209, %s210, %s211
      %p215 = pneg %p209
      %p216 = scmp.eq.s32.totalorder %s38, 1
      %p217 = por %p215, %p216
      %p218 = scmp.ne.s32.totalorder %s210, %s213
      %p219 = scmp.eq.s32.totalorder %s38, 0
      %p220 = por %p218, %p219
      %p221 = scmp.ne.s32.totalorder %s210, %s213
      %p222 = scmp.eq.s32.totalorder %s43, 1
      %p223 = por %p221, %p222
      %p224 = scmp.ne.s32.totalorder %s213, %s214
      %p225 = scmp.eq.s32.totalorder %s43, 0
      %p226 = por %p224, %p225
      %p227 = scmp.ne.s32.totalorder %s213, %s214
      %p228 = scmp.eq.s32.totalorder %s44, 1
      %p229 = por %p227, %p228
      %p231 = scmp.ne.s32.totalorder %s214, %s230
      %p232 = scmp.eq.s32.totalorder %s44, 0
      %p233 = por %p231, %p232
      %s234 = ssub.s32 %s38, %s45
      %p235 = scmp.eq.s32.totalorder %s234, 0
      %s237 = sadd.s32 %s236, 1
      %s238 = scalar_select %p235, %s236, %s237
      %p241 = pneg %p235
      %p242 = scmp.eq.s32.totalorder %s38, 1
      %p243 = por %p241, %p242
      %p244 = scmp.ne.s32.totalorder %s236, %s239
      %p245 = scmp.eq.s32.totalorder %s38, 0
      %p246 = por %p244, %p245
      %p247 = scmp.ne.s32.totalorder %s236, %s239
      %p248 = scmp.eq.s32.totalorder %s43, 1
      %p249 = por %p247, %p248
      %p250 = scmp.ne.s32.totalorder %s239, %s240
      %p251 = scmp.eq.s32.totalorder %s43, 0
      %p252 = por %p250, %p251
      %p253 = scmp.ne.s32.totalorder %s239, %s240
      %p254 = scmp.eq.s32.totalorder %s44, 1
      %p255 = por %p253, %p254
      %p257 = scmp.ne.s32.totalorder %s240, %s256
      %p258 = scmp.eq.s32.totalorder %s44, 0
      %p259 = por %p257, %p258
      %s260 = ssub.s32 %s38, %s45
      %p261 = scmp.eq.s32.totalorder %s260, 0
      %s263 = sadd.s32 %s262, 1
      %s264 = scalar_select %p261, %s262, %s263
      %p267 = pneg %p261
      %p268 = scmp.eq.s32.totalorder %s38, 1
      %p269 = por %p267, %p268
      %p270 = scmp.ne.s32.totalorder %s262, %s265
      %p271 = scmp.eq.s32.totalorder %s38, 0
      %p272 = por %p270, %p271
      %p273 = scmp.ne.s32.totalorder %s262, %s265
      %p274 = scmp.eq.s32.totalorder %s43, 1
      %p275 = por %p273, %p274
      %p276 = scmp.ne.s32.totalorder %s265, %s266
      %p277 = scmp.eq.s32.totalorder %s43, 0
      %p278 = por %p276, %p277
      %p279 = scmp.ne.s32.totalorder %s265, %s266
      %p280 = scmp.eq.s32.totalorder %s44, 1
      %p281 = por %p279, %p280
      %p283 = scmp.ne.s32.totalorder %s266, %s282
      %p284 = scmp.eq.s32.totalorder %s44, 0
      %p285 = por %p283, %p284
      %s286 = ssub.s32 %s38, %s45
      %p287 = scmp.eq.s32.totalorder %s286, 0
      %s289 = sadd.s32 %s288, 1
      %s290 = scalar_select %p287, %s288, %s289
      %p293 = pneg %p287
      %p294 = scmp.eq.s32.totalorder %s38, 1
      %p295 = por %p293, %p294
      %p296 = scmp.ne.s32.totalorder %s288, %s291
      %p297 = scmp.eq.s32.totalorder %s38, 0
      %p298 = por %p296, %p297
      %p299 = scmp.ne.s32.totalorder %s288, %s291
      %p300 = scmp.eq.s32.totalorder %s43, 1
      %p301 = por %p299, %p300
      %p302 = scmp.ne.s32.totalorder %s291, %s292
      %p303 = scmp.eq.s32.totalorder %s43, 0
      %p304 = por %p302, %p303
      %p305 = scmp.ne.s32.totalorder %s291, %s292
      %p306 = scmp.eq.s32.totalorder %s44, 1
      %p307 = por %p305, %p306
      %p309 = scmp.ne.s32.totalorder %s292, %s308
      %p310 = scmp.eq.s32.totalorder %s44, 0
      %p311 = por %p309, %p310
      %s312 = ssub.s32 %s38, %s45
      %p313 = scmp.eq.s32.totalorder %s312, 0
      %s315 = sadd.s32 %s314, 1
      %s316 = scalar_select %p313, %s314, %s315
      %p319 = pneg %p313
      %p320 = scmp.eq.s32.totalorder %s38, 1
      %p321 = por %p319, %p320
      %p322 = scmp.ne.s32.totalorder %s314, %s317
      %p323 = scmp.eq.s32.totalorder %s38, 0
      %p324 = por %p322, %p323
      %p325 = scmp.ne.s32.totalorder %s314, %s317
      %p326 = scmp.eq.s32.totalorder %s43, 1
      %p327 = por %p325, %p326
      %p328 = scmp.ne.s32.totalorder %s317, %s318
      %p329 = scmp.eq.s32.totalorder %s43, 0
      %p330 = por %p328, %p329
      %p331 = scmp.ne.s32.totalorder %s317, %s318
      %p332 = scmp.eq.s32.totalorder %s44, 1
      %p333 = por %p331, %p332
      %p335 = scmp.ne.s32.totalorder %s318, %s334
      %p336 = scmp.eq.s32.totalorder %s44, 0
      %p337 = por %p335, %p336
      %s338 = ssub.s32 %s38, %s45
      %p339 = scmp.eq.s32.totalorder %s338, 0
      %s341 = sadd.s32 %s340, 1
      %s342 = scalar_select %p339, %s340, %s341
      %p345 = pneg %p339
      %p346 = scmp.eq.s32.totalorder %s38, 1
      %p347 = por %p345, %p346
      %p348 = scmp.ne.s32.totalorder %s340, %s343
      %p349 = scmp.eq.s32.totalorder %s38, 0
      %p350 = por %p348, %p349
      %p351 = scmp.ne.s32.totalorder %s340, %s343
      %p352 = scmp.eq.s32.totalorder %s43, 1
      %p353 = por %p351, %p352
      %p354 = scmp.ne.s32.totalorder %s343, %s344
      %p355 = scmp.eq.s32.totalorder %s43, 0
      %p356 = por %p354, %p355
      %p357 = scmp.ne.s32.totalorder %s343, %s344
      %p358 = scmp.eq.s32.totalorder %s44, 1
      %p359 = por %p357, %p358
      %p361 = scmp.ne.s32.totalorder %s344, %s360
      %p362 = scmp.eq.s32.totalorder %s44, 0
      %p363 = por %p361, %p362
      %s364 = ssub.s32 %s38, %s45
      %p365 = scmp.eq.s32.totalorder %s364, 0
      %s367 = sadd.s32 %s366, 1
      %s368 = scalar_select %p365, %s366, %s367
      %p371 = pneg %p365
      %p372 = scmp.eq.s32.totalorder %s38, 1
      %p373 = por %p371, %p372
      %p374 = scmp.ne.s32.totalorder %s366, %s369
      %p375 = scmp.eq.s32.totalorder %s38, 0
      %p376 = por %p374, %p375
      %p377 = scmp.ne.s32.totalorder %s366, %s369
      %p378 = scmp.eq.s32.totalorder %s43, 1
      %p379 = por %p377, %p378
      %p380 = scmp.ne.s32.totalorder %s369, %s370
      %p381 = scmp.eq.s32.totalorder %s43, 0
      %p382 = por %p380, %p381
      %p383 = scmp.ne.s32.totalorder %s369, %s370
      %p384 = scmp.eq.s32.totalorder %s44, 1
      %p385 = por %p383, %p384
      %p387 = scmp.ne.s32.totalorder %s370, %s386
      %p388 = scmp.eq.s32.totalorder %s44, 0
      %p389 = por %p387, %p388
      %s390 = ssub.s32 %s38, %s45
      %p391 = scmp.eq.s32.totalorder %s390, 0
      %s393 = sadd.s32 %s392, 1
      %s394 = scalar_select %p391, %s392, %s393
      %p397 = pneg %p391
      %p398 = scmp.eq.s32.totalorder %s38, 1
      %p399 = por %p397, %p398
      %p400 = scmp.ne.s32.totalorder %s392, %s395
      %p401 = scmp.eq.s32.totalorder %s38, 0
      %p402 = por %p400, %p401
      %p403 = scmp.ne.s32.totalorder %s392, %s395
      %p404 = scmp.eq.s32.totalorder %s43, 1
      %p405 = por %p403, %p404
      %p406 = scmp.ne.s32.totalorder %s395, %s396
      %p407 = scmp.eq.s32.totalorder %s43, 0
      %p408 = por %p406, %p407
      %p409 = scmp.ne.s32.totalorder %s395, %s396
      %p410 = scmp.eq.s32.totalorder %s44, 1
      %p411 = por %p409, %p410
      %p413 = scmp.ne.s32.totalorder %s396, %s412
      %p414 = scmp.eq.s32.totalorder %s44, 0
      %p415 = por %p413, %p414
      %s416 = ssub.s32 %s38, %s45
      %p417 = scmp.eq.s32.totalorder %s416, 0
      %s419 = sadd.s32 %s418, 1
      %s420 = scalar_select %p417, %s418, %s419
      %p423 = pneg %p417
      %p424 = scmp.eq.s32.totalorder %s38, 1
      %p425 = por %p423, %p424
      %p426 = scmp.ne.s32.totalorder %s418, %s421
      %p427 = scmp.eq.s32.totalorder %s38, 0
      %p428 = por %p426, %p427
      %p429 = scmp.ne.s32.totalorder %s418, %s421
      %p430 = scmp.eq.s32.totalorder %s43, 1
      %p431 = por %p429, %p430
      %p432 = scmp.ne.s32.totalorder %s421, %s422
      %p433 = scmp.eq.s32.totalorder %s43, 0
      %p434 = por %p432, %p433
      %p435 = scmp.ne.s32.totalorder %s421, %s422
      %p436 = scmp.eq.s32.totalorder %s44, 1
      %p437 = por %p435, %p436
      %p439 = scmp.ne.s32.totalorder %s422, %s438
      %p440 = scmp.eq.s32.totalorder %s44, 0
      %p441 = por %p439, %p440
      %s443 = sadd.s32 %s442, 1
      %p446 = scmp.eq.s32.totalorder %s38, 1
      %p447 = scmp.ne.s32.totalorder %s442, %s444
      %p448 = scmp.eq.s32.totalorder %s38, 0
      %p449 = por %p447, %p448
      %p450 = scmp.ne.s32.totalorder %s442, %s444
      %p451 = scmp.eq.s32.totalorder %s43, 1
      %p452 = por %p450, %p451
      %p453 = scmp.ne.s32.totalorder %s444, %s445
      %p454 = scmp.eq.s32.totalorder %s43, 0
      %p455 = por %p453, %p454
      %p456 = scmp.ne.s32.totalorder %s444, %s445
      %p457 = scmp.eq.s32.totalorder %s44, 1
      %p458 = por %p456, %p457
      %p460 = scmp.ne.s32.totalorder %s445, %s459
      %p461 = scmp.eq.s32.totalorder %s44, 0
      %p462 = por %p460, %p461
      %s464 = sadd.s32 %s463, 1
      %p467 = scmp.eq.s32.totalorder %s38, 1
      %p468 = scmp.ne.s32.totalorder %s463, %s465
      %p469 = scmp.eq.s32.totalorder %s38, 0
      %p470 = por %p468, %p469
      %p471 = scmp.ne.s32.totalorder %s463, %s465
      %p472 = scmp.eq.s32.totalorder %s43, 1
      %p473 = por %p471, %p472
      %p474 = scmp.ne.s32.totalorder %s465, %s466
      %p475 = scmp.eq.s32.totalorder %s43, 0
      %p476 = por %p474, %p475
      %p477 = scmp.ne.s32.totalorder %s465, %s466
      %p478 = scmp.eq.s32.totalorder %s44, 1
      %p479 = por %p477, %p478
      %p481 = scmp.ne.s32.totalorder %s466, %s480
      %p482 = scmp.eq.s32.totalorder %s44, 0
      %p483 = por %p481, %p482
      %s485 = sadd.s32 %s484, 1
      %p488 = scmp.eq.s32.totalorder %s38, 1
      %p489 = scmp.ne.s32.totalorder %s484, %s486
      %p490 = scmp.eq.s32.totalorder %s38, 0
      %p491 = por %p489, %p490
      %p492 = scmp.ne.s32.totalorder %s484, %s486
      %p493 = scmp.eq.s32.totalorder %s43, 1
      %p494 = por %p492, %p493
      %p495 = scmp.ne.s32.totalorder %s486, %s487
      %p496 = scmp.eq.s32.totalorder %s43, 0
      %p497 = por %p495, %p496
      %p498 = scmp.ne.s32.totalorder %s486, %s487
      %p499 = scmp.eq.s32.totalorder %s44, 1
      %p500 = por %p498, %p499
      %p502 = scmp.ne.s32.totalorder %s487, %s501
      %p503 = scmp.eq.s32.totalorder %s44, 0
      %p504 = por %p502, %p503
      %s506 = sadd.s32 %s505, 1
      %p509 = scmp.eq.s32.totalorder %s38, 1
      %p510 = scmp.ne.s32.totalorder %s505, %s507
      %p511 = scmp.eq.s32.totalorder %s38, 0
      %p512 = por %p510, %p511
      %p513 = scmp.ne.s32.totalorder %s505, %s507
      %p514 = scmp.eq.s32.totalorder %s43, 1
      %p515 = por %p513, %p514
      %p516 = scmp.ne.s32.totalorder %s507, %s508
      %p517 = scmp.eq.s32.totalorder %s43, 0
      %p518 = por %p516, %p517
      %p519 = scmp.ne.s32.totalorder %s507, %s508
      %p520 = scmp.eq.s32.totalorder %s44, 1
      %p521 = por %p519, %p520
      %p523 = scmp.ne.s32.totalorder %s508, %s522
      %p524 = scmp.eq.s32.totalorder %s44, 0
      %p525 = por %p523, %p524
      %s527 = sadd.s32 %s526, 1
      %p530 = scmp.eq.s32.totalorder %s38, 1
      %p531 = scmp.ne.s32.totalorder %s526, %s528
      %p532 = scmp.eq.s32.totalorder %s38, 0
      %p533 = por %p531, %p532
      %p534 = scmp.ne.s32.totalorder %s526, %s528
      %p535 = scmp.eq.s32.totalorder %s43, 1
      %p536 = por %p534, %p535
      %p537 = scmp.ne.s32.totalorder %s528, %s529
      %p538 = scmp.eq.s32.totalorder %s43, 0
      %p539 = por %p537, %p538
      %p540 = scmp.ne.s32.totalorder %s528, %s529
      %p541 = scmp.eq.s32.totalorder %s44, 1
      %p542 = por %p540, %p541
      %p544 = scmp.ne.s32.totalorder %s529, %s543
      %p545 = scmp.eq.s32.totalorder %s44, 0
      %p546 = por %p544, %p545
      %p547 = scmp.le.s32.totalorder 1, %s38
      %p548 = scmp.lt.s32.totalorder %s38, 3
      %p549 = pnand %p547, %p548
      %p550 = pneg %p549
      // Predicated region
      $region9: #{roberta_class_forward.1} parent=5 // pred_check
        _
      $region10: #{roberta_class_forward.1} parent=5 // pred_check_branch
        %552 = sbr.rel (%p549) target = $region12
      $region11: #{roberta_class_forward.1} parent=5 // pred_region
        %s553 = ssub.s32 %s38, 1
        // Predicated region
        $region13: #{roberta_class_forward.1} parent=11 // pred_check
          %p554 = pneg %p59
        $region14: #{roberta_class_forward.1} parent=11 // pred_check_branch
          %556 = sbr.rel (%p554) target = $region16
        $region15: #{roberta_class_forward.1} parent=11 // pred_region
          _
        $region16: #{roberta_class_forward.1} parent=11 // pred_fallthru
          _
        // Predicated region
        $region17: #{roberta_class_forward.1} parent=11 // pred_check
          %p557 = pneg %p80
        $region18: #{roberta_class_forward.1} parent=11 // pred_check_branch
          %559 = sbr.rel (%p557) target = $region20
        $region19: #{roberta_class_forward.1} parent=11 // pred_region
          _
        $region20: #{roberta_class_forward.1} parent=11 // pred_fallthru
          _
        // Predicated region
        $region21: #{roberta_class_forward.1} parent=11 // pred_check
          %p560 = pneg %p101
        $region22: #{roberta_class_forward.1} parent=11 // pred_check_branch
          %562 = sbr.rel (%p560) target = $region24
        $region23: #{roberta_class_forward.1} parent=11 // pred_region
          _
        $region24: #{roberta_class_forward.1} parent=11 // pred_fallthru
          _
        // Predicated region
        $region25: #{roberta_class_forward.1} parent=11 // pred_check
          %p563 = pneg %p122
        $region26: #{roberta_class_forward.1} parent=11 // pred_check_branch
          %565 = sbr.rel (%p563) target = $region28
        $region27: #{roberta_class_forward.1} parent=11 // pred_region
          %s567 = ssub.s32 16, 16
          %568 = vsyncadd [#allocation4], %s567
          %s570 = sshll.u32 [#allocation3], 4
          %s571 = int_to_ptr.vmem [resolvable:$true] %s570
          %573 = dma.hbm_to_vmem [thread:$0]  %s3, 16, %s571, [#allocation4]
        $region28: #{roberta_class_forward.1} parent=11 // pred_fallthru
          _
        // Predicated region
        $region29: #{roberta_class_forward.1} parent=11 // pred_check
          %p574 = pneg %p455
        $region30: #{roberta_class_forward.1} parent=11 // pred_check_branch
          %576 = sbr.rel (%p574) target = $region32
        $region31: #{roberta_class_forward.1} parent=11 // pred_region
          _
        $region32: #{roberta_class_forward.1} parent=11 // pred_fallthru
          _
        // Predicated region
        $region33: #{roberta_class_forward.1} parent=11 // pred_check
          %p577 = pneg %p476
        $region34: #{roberta_class_forward.1} parent=11 // pred_check_branch
          %579 = sbr.rel (%p577) target = $region36
        $region35: #{roberta_class_forward.1} parent=11 // pred_region
          %s581 = ssub.s32 16, 16
          %582 = vsyncadd [#allocation13], %s581
          %s584 = sshll.u32 [#allocation14], 4
          %s585 = int_to_ptr.vmem [resolvable:$true] %s584
          %587 = dma.hbm_to_vmem [thread:$0]  %s17, 16, %s585, [#allocation13]
        $region36: #{roberta_class_forward.1} parent=11 // pred_fallthru
          _
        // Predicated region
        $region37: #{roberta_class_forward.1} parent=11 // pred_check
          %p588 = pneg %p497
        $region38: #{roberta_class_forward.1} parent=11 // pred_check_branch
          %590 = sbr.rel (%p588) target = $region40
        $region39: #{roberta_class_forward.1} parent=11 // pred_region
          _
        $region40: #{roberta_class_forward.1} parent=11 // pred_fallthru
          _
        // Predicated region
        $region41: #{roberta_class_forward.1} parent=11 // pred_check
          %p591 = pneg %p518
        $region42: #{roberta_class_forward.1} parent=11 // pred_check_branch
          %593 = sbr.rel (%p591) target = $region44
        $region43: #{roberta_class_forward.1} parent=11 // pred_region
          %s595 = ssub.s32 16, 16
          %596 = vsyncadd [#allocation16], %s595
          %s598 = sshll.u32 [#allocation15], 4
          %s599 = int_to_ptr.vmem [resolvable:$true] %s598
          %601 = dma.hbm_to_vmem [thread:$0]  %s19, 16, %s599, [#allocation16]
        $region44: #{roberta_class_forward.1} parent=11 // pred_fallthru
          _
      $region12: #{roberta_class_forward.1} parent=5 // pred_fallthru
        _
      %p602 = scmp.lt.s32.totalorder %s38, 2
      // Predicated region
      $region45: #{roberta_class_forward.1} parent=5 // pred_check
        %p603 = pneg %p602
      $region46: #{roberta_class_forward.1} parent=5 // pred_check_branch
        %605 = sbr.rel (%p603) target = $region48
      $region47: #{roberta_class_forward.1} parent=5 // pred_region
        // Predicated region
        $region49: #{roberta_class_forward.1} parent=47 // pred_check
          %p606 = pneg %p142
        $region50: #{roberta_class_forward.1} parent=47 // pred_check_branch
          %608 = sbr.rel (%p606) target = $region52
        $region51: #{roberta_class_forward.1} parent=47 // pred_region
          %p609 = scmp.lt.s32.totalorder %s38, 1
          %s610 = scalar_select %p609, %s38, 1
          %s611 = smul.addr %s610, 48
          %s612 = smul.addr %s611, 4
          %s613 = scalar_lea.vmem %s4, %s612
        $region52: #{roberta_class_forward.1} parent=47 // pred_fallthru
          _
        // Predicated region
        $region53: #{roberta_class_forward.1} parent=47 // pred_check
          %p614 = pneg %p168
        $region54: #{roberta_class_forward.1} parent=47 // pred_check_branch
          %616 = sbr.rel (%p614) target = $region56
        $region55: #{roberta_class_forward.1} parent=47 // pred_region
          %p617 = scmp.lt.s32.totalorder %s38, 1
          %s618 = scalar_select %p617, %s38, 1
          %s619 = smul.addr %s618, 3
          %s620 = scalar_lea.vmem %s5, %s619
        $region56: #{roberta_class_forward.1} parent=47 // pred_fallthru
          _
        // Predicated region
        $region57: #{roberta_class_forward.1} parent=47 // pred_check
          %p621 = pneg %p194
        $region58: #{roberta_class_forward.1} parent=47 // pred_check_branch
          %623 = sbr.rel (%p621) target = $region60
        $region59: #{roberta_class_forward.1} parent=47 // pred_region
          %p624 = scmp.lt.s32.totalorder %s38, 1
          %s625 = scalar_select %p624, %s38, 1
          %s626 = smul.addr %s625, 16
          %s627 = smul.addr %s626, 4
          %s628 = scalar_lea.vmem %s6, %s627
        $region60: #{roberta_class_forward.1} parent=47 // pred_fallthru
          _
        // Predicated region
        $region61: #{roberta_class_forward.1} parent=47 // pred_check
          %p629 = pneg %p220
        $region62: #{roberta_class_forward.1} parent=47 // pred_check_branch
          %631 = sbr.rel (%p629) target = $region64
        $region63: #{roberta_class_forward.1} parent=47 // pred_region
          %p632 = scmp.lt.s32.totalorder %s38, 1
          %s633 = scalar_select %p632, %s38, 1
          %s634 = scalar_lea.vmem %s7, %s633
        $region64: #{roberta_class_forward.1} parent=47 // pred_fallthru
          _
        // Predicated region
        $region65: #{roberta_class_forward.1} parent=47 // pred_check
          %p635 = pneg %p246
        $region66: #{roberta_class_forward.1} parent=47 // pred_check_branch
          %637 = sbr.rel (%p635) target = $region68
        $region67: #{roberta_class_forward.1} parent=47 // pred_region
          %p638 = scmp.lt.s32.totalorder %s38, 1
          %s639 = scalar_select %p638, %s38, 1
          %s640 = scalar_lea.vmem %s8, %s639
        $region68: #{roberta_class_forward.1} parent=47 // pred_fallthru
          _
        // Predicated region
        $region69: #{roberta_class_forward.1} parent=47 // pred_check
          %p641 = pneg %p272
        $region70: #{roberta_class_forward.1} parent=47 // pred_check_branch
          %643 = sbr.rel (%p641) target = $region72
        $region71: #{roberta_class_forward.1} parent=47 // pred_region
          %s644 = sand.u32 %s38, 1
          %s645 = scalar_lea.sflag [#allocation7], %s644
          %s646 = sand.u32 %s262, 1
          %s647 = scalar_lea.vmem [#allocation6], %s646
          %s649 = ssub.s32 16, 16
          %650 = vsyncadd %s645, %s649
          %s651 = smul.addr %s38, 16
          %s652 = scalar_lea.hbm %s9, %s651
          %s654 = sshll.u32 %s647, 4
          %s655 = int_to_ptr.vmem [resolvable:$true] %s654
          %657 = dma.hbm_to_vmem [thread:$0]  %s652, 16, %s655, %s645
        $region72: #{roberta_class_forward.1} parent=47 // pred_fallthru
          _
        // Predicated region
        $region73: #{roberta_class_forward.1} parent=47 // pred_check
          %p658 = pneg %p298
        $region74: #{roberta_class_forward.1} parent=47 // pred_check_branch
          %660 = sbr.rel (%p658) target = $region76
        $region75: #{roberta_class_forward.1} parent=47 // pred_region
          %p661 = scmp.lt.s32.totalorder %s38, 1
          %s662 = scalar_select %p661, %s38, 1
          %s663 = smul.addr %s662, 32
          %s664 = smul.addr %s663, 4
          %s665 = scalar_lea.vmem %s10, %s664
        $region76: #{roberta_class_forward.1} parent=47 // pred_fallthru
          _
        // Predicated region
        $region77: #{roberta_class_forward.1} parent=47 // pred_check
          %p666 = pneg %p324
        $region78: #{roberta_class_forward.1} parent=47 // pred_check_branch
          %668 = sbr.rel (%p666) target = $region80
        $region79: #{roberta_class_forward.1} parent=47 // pred_region
          %s669 = sand.u32 %s38, 1
          %s670 = scalar_lea.sflag [#allocation7], %s669
          %s671 = sand.u32 %s314, 1
          %s672 = smul.addr %s671, 2
          %s673 = scalar_lea.vmem [#allocation8], %s672
          %s675 = ssub.s32 32, 32
          %676 = vsyncadd %s670, %s675
          %s677 = smul.addr %s38, 2
          %s678 = smul.addr %s677, 16
          %s679 = scalar_lea.hbm %s11, %s678
          %s681 = sshll.u32 %s673, 4
          %s682 = int_to_ptr.vmem [resolvable:$true] %s681
          %684 = dma.hbm_to_vmem [thread:$0]  %s679, 32, %s682, %s670
        $region80: #{roberta_class_forward.1} parent=47 // pred_fallthru
          _
        // Predicated region
        $region81: #{roberta_class_forward.1} parent=47 // pred_check
          %p685 = pneg %p350
        $region82: #{roberta_class_forward.1} parent=47 // pred_check_branch
          %687 = sbr.rel (%p685) target = $region84
        $region83: #{roberta_class_forward.1} parent=47 // pred_region
          %s688 = sand.u32 %s38, 1
          %s689 = scalar_lea.sflag [#allocation10], %s688
          %s690 = sand.u32 %s340, 1
          %s691 = smul.addr %s690, 128
          %s692 = scalar_lea.vmem [#allocation9], %s691
          %s694 = ssub.s32 2048, 2048
          %695 = vsyncadd %s689, %s694
          %s696 = smul.addr %s38, 32
          %s697 = smul.addr %s696, 64
          %s698 = scalar_lea.hbm %s12, %s697
          %s699 = sshll.u32 %s692, 4
          %s700 = int_to_ptr.vmem [resolvable:$true] %s699
          %705 = dma.hbm_to_vmem [thread:$0]  %s698, 2048, %s700, %s689, 64, 64, 4
        $region84: #{roberta_class_forward.1} parent=47 // pred_fallthru
          _
        // Predicated region
        $region85: #{roberta_class_forward.1} parent=47 // pred_check
          %p706 = pneg %p376
        $region86: #{roberta_class_forward.1} parent=47 // pred_check_branch
          %708 = sbr.rel (%p706) target = $region88
        $region87: #{roberta_class_forward.1} parent=47 // pred_region
          %s709 = sand.u32 %s38, 1
          %s710 = scalar_lea.sflag [#allocation10], %s709
          %s711 = sand.u32 %s366, 1
          %s712 = scalar_lea.vmem [#allocation11], %s711
          %s714 = ssub.s32 16, 16
          %715 = vsyncadd %s710, %s714
          %s716 = smul.addr %s38, 16
          %s717 = scalar_lea.hbm %s13, %s716
          %s719 = sshll.u32 %s712, 4
          %s720 = int_to_ptr.vmem [resolvable:$true] %s719
          %722 = dma.hbm_to_vmem [thread:$0]  %s717, 16, %s720, %s710
        $region88: #{roberta_class_forward.1} parent=47 // pred_fallthru
          _
        // Predicated region
        $region89: #{roberta_class_forward.1} parent=47 // pred_check
          %p723 = pneg %p402
        $region90: #{roberta_class_forward.1} parent=47 // pred_check_branch
          %725 = sbr.rel (%p723) target = $region92
        $region91: #{roberta_class_forward.1} parent=47 // pred_region
          %p726 = scmp.lt.s32.totalorder %s38, 1
          %s727 = scalar_select %p726, %s38, 1
          %s728 = scalar_lea.vmem %s14, %s727
        $region92: #{roberta_class_forward.1} parent=47 // pred_fallthru
          _
        // Predicated region
        $region93: #{roberta_class_forward.1} parent=47 // pred_check
          %p729 = pneg %p428
        $region94: #{roberta_class_forward.1} parent=47 // pred_check_branch
          %731 = sbr.rel (%p729) target = $region96
        $region95: #{roberta_class_forward.1} parent=47 // pred_region
          %s732 = sand.u32 %s38, 1
          %s733 = scalar_lea.sflag [#allocation13], %s732
          %s734 = sand.u32 %s418, 1
          %s735 = scalar_lea.vmem [#allocation12], %s734
          %s737 = ssub.s32 16, 16
          %738 = vsyncadd %s733, %s737
          %s739 = smul.addr %s38, 16
          %s740 = scalar_lea.hbm %s15, %s739
          %s742 = sshll.u32 %s735, 4
          %s743 = int_to_ptr.vmem [resolvable:$true] %s742
          %745 = dma.hbm_to_vmem [thread:$0]  %s740, 16, %s743, %s733
        $region96: #{roberta_class_forward.1} parent=47 // pred_fallthru
          _
      $region48: #{roberta_class_forward.1} parent=5 // pred_fallthru
        _
      %p746 = scmp.le.s32.totalorder 1, %s38
      %p747 = scmp.lt.s32.totalorder %s38, 3
      %p748 = pnand %p746, %p747
      %p749 = pneg %p748
      // Predicated region
      $region97: #{roberta_class_forward.1} parent=5 // pred_check
        _
      $region98: #{roberta_class_forward.1} parent=5 // pred_check_branch
        %751 = sbr.rel (%p748) target = $region100
      $region99: #{roberta_class_forward.1} parent=5 // pred_region
        %s752 = ssub.s32 %s38, 1
        // Predicated region
        $region101: #{roberta_class_forward.1} parent=99 // pred_check
          %p753 = pneg %p122
        $region102: #{roberta_class_forward.1} parent=99 // pred_check_branch
          %755 = sbr.rel (%p753) target = $region104
        $region103: #{roberta_class_forward.1} parent=99 // pred_region
          %756 = dma.done [#allocation4], 16
        $region104: #{roberta_class_forward.1} parent=99 // pred_fallthru
          _
        %s757 = sand.u32 %s43, 1
        %s758 = scalar_lea.sflag [#allocation7], %s757
        %s759 = sand.u32 %s265, 1
        %s760 = scalar_lea.vmem [#allocation6], %s759
        // Predicated region
        $region105: #{roberta_class_forward.1} parent=99 // pred_check
          %p761 = pneg %p278
        $region106: #{roberta_class_forward.1} parent=99 // pred_check_branch
          %763 = sbr.rel (%p761) target = $region108
        $region107: #{roberta_class_forward.1} parent=99 // pred_region
          %764 = dma.done %s758, 16
        $region108: #{roberta_class_forward.1} parent=99 // pred_fallthru
          _
        %s765 = sand.u32 %s43, 1
        %s766 = scalar_lea.sflag [#allocation7], %s765
        %s767 = sand.u32 %s317, 1
        %s768 = smul.addr %s767, 2
        %s769 = scalar_lea.vmem [#allocation8], %s768
        // Predicated region
        $region109: #{roberta_class_forward.1} parent=99 // pred_check
          %p770 = pneg %p330
        $region110: #{roberta_class_forward.1} parent=99 // pred_check_branch
          %772 = sbr.rel (%p770) target = $region112
        $region111: #{roberta_class_forward.1} parent=99 // pred_region
          %773 = dma.done %s766, 32
        $region112: #{roberta_class_forward.1} parent=99 // pred_fallthru
          _
        %s774 = sand.u32 %s43, 1
        %s775 = scalar_lea.sflag [#allocation10], %s774
        %s776 = sand.u32 %s343, 1
        %s777 = smul.addr %s776, 128
        %s778 = scalar_lea.vmem [#allocation9], %s777
        // Predicated region
        $region113: #{roberta_class_forward.1} parent=99 // pred_check
          %p779 = pneg %p356
        $region114: #{roberta_class_forward.1} parent=99 // pred_check_branch
          %781 = sbr.rel (%p779) target = $region116
        $region115: #{roberta_class_forward.1} parent=99 // pred_region
          %782 = dma.done %s775, 2048
        $region116: #{roberta_class_forward.1} parent=99 // pred_fallthru
          _
        %s783 = sand.u32 %s43, 1
        %s784 = scalar_lea.sflag [#allocation10], %s783
        %s785 = sand.u32 %s369, 1
        %s786 = scalar_lea.vmem [#allocation11], %s785
        // Predicated region
        $region117: #{roberta_class_forward.1} parent=99 // pred_check
          %p787 = pneg %p382
        $region118: #{roberta_class_forward.1} parent=99 // pred_check_branch
          %789 = sbr.rel (%p787) target = $region120
        $region119: #{roberta_class_forward.1} parent=99 // pred_region
          %790 = dma.done %s784, 16
        $region120: #{roberta_class_forward.1} parent=99 // pred_fallthru
          _
        %s791 = sand.u32 %s43, 1
        %s792 = scalar_lea.sflag [#allocation13], %s791
        %s793 = sand.u32 %s421, 1
        %s794 = scalar_lea.vmem [#allocation12], %s793
        // Predicated region
        $region121: #{roberta_class_forward.1} parent=99 // pred_check
          %p795 = pneg %p434
        $region122: #{roberta_class_forward.1} parent=99 // pred_check_branch
          %797 = sbr.rel (%p795) target = $region124
        $region123: #{roberta_class_forward.1} parent=99 // pred_region
          %798 = dma.done %s792, 16
        $region124: #{roberta_class_forward.1} parent=99 // pred_fallthru
          _
        // Predicated region
        $region125: #{roberta_class_forward.1} parent=99 // pred_check
          %p799 = pneg %p476
        $region126: #{roberta_class_forward.1} parent=99 // pred_check_branch
          %801 = sbr.rel (%p799) target = $region128
        $region127: #{roberta_class_forward.1} parent=99 // pred_region
          %802 = dma.done [#allocation13], 16
        $region128: #{roberta_class_forward.1} parent=99 // pred_fallthru
          _
        // Predicated region
        $region129: #{roberta_class_forward.1} parent=99 // pred_check
          %p803 = pneg %p518
        $region130: #{roberta_class_forward.1} parent=99 // pred_check_branch
          %805 = sbr.rel (%p803) target = $region132
        $region131: #{roberta_class_forward.1} parent=99 // pred_region
          %806 = dma.done [#allocation16], 16
        $region132: #{roberta_class_forward.1} parent=99 // pred_fallthru
          _
        %p807 = pneg %p59
        %p808 = pneg %p56
        %p809 = pneg %p80
        %p810 = pneg %p77
        %p811 = pneg %p101
        %p812 = pneg %p98
        %p813 = pneg %p122
        %p814 = pneg %p119
        %p815 = scmp.lt.s32.totalorder %s43, 1
        %s816 = scalar_select %p815, %s43, 1
        %s817 = smul.addr %s816, 48
        %s818 = smul.addr %s817, 4
        %s819 = scalar_lea.vmem %s4, %s818
        %p820 = pneg %p148
        %p821 = pneg %p145
        %p822 = scmp.lt.s32.totalorder %s43, 1
        %s823 = scalar_select %p822, %s43, 1
        %s824 = smul.addr %s823, 3
        %s825 = scalar_lea.vmem %s5, %s824
        %p826 = pneg %p174
        %p827 = pneg %p171
        %p828 = scmp.lt.s32.totalorder %s43, 1
        %s829 = scalar_select %p828, %s43, 1
        %s830 = smul.addr %s829, 16
        %s831 = smul.addr %s830, 4
        %s832 = scalar_lea.vmem %s6, %s831
        %p833 = pneg %p200
        %p834 = pneg %p197
        %p835 = scmp.lt.s32.totalorder %s43, 1
        %s836 = scalar_select %p835, %s43, 1
        %s837 = scalar_lea.vmem %s7, %s836
        %p838 = pneg %p226
        %p839 = pneg %p223
        %p840 = scmp.lt.s32.totalorder %s43, 1
        %s841 = scalar_select %p840, %s43, 1
        %s842 = scalar_lea.vmem %s8, %s841
        %p843 = pneg %p252
        %p844 = pneg %p249
        %s845 = sand.u32 %s43, 1
        %s846 = scalar_lea.sflag [#allocation7], %s845
        %s847 = sand.u32 %s265, 1
        %s848 = scalar_lea.vmem [#allocation6], %s847
        %p849 = pneg %p278
        %p850 = pneg %p275
        %p851 = scmp.lt.s32.totalorder %s43, 1
        %s852 = scalar_select %p851, %s43, 1
        %s853 = smul.addr %s852, 32
        %s854 = smul.addr %s853, 4
        %s855 = scalar_lea.vmem %s10, %s854
        %p856 = pneg %p304
        %p857 = pneg %p301
        %s858 = sand.u32 %s43, 1
        %s859 = scalar_lea.sflag [#allocation7], %s858
        %s860 = sand.u32 %s317, 1
        %s861 = smul.addr %s860, 2
        %s862 = scalar_lea.vmem [#allocation8], %s861
        %p863 = pneg %p330
        %p864 = pneg %p327
        %s865 = sand.u32 %s43, 1
        %s866 = scalar_lea.sflag [#allocation10], %s865
        %s867 = sand.u32 %s343, 1
        %s868 = smul.addr %s867, 128
        %s869 = scalar_lea.vmem [#allocation9], %s868
        %p870 = pneg %p356
        %p871 = pneg %p353
        %s872 = sand.u32 %s43, 1
        %s873 = scalar_lea.sflag [#allocation10], %s872
        %s874 = sand.u32 %s369, 1
        %s875 = scalar_lea.vmem [#allocation11], %s874
        %p876 = pneg %p382
        %p877 = pneg %p379
        %p878 = scmp.lt.s32.totalorder %s43, 1
        %s879 = scalar_select %p878, %s43, 1
        %s880 = scalar_lea.vmem %s14, %s879
        %p881 = pneg %p408
        %p882 = pneg %p405
        %s883 = sand.u32 %s43, 1
        %s884 = scalar_lea.sflag [#allocation13], %s883
        %s885 = sand.u32 %s421, 1
        %s886 = scalar_lea.vmem [#allocation12], %s885
        %p887 = pneg %p434
        %p888 = pneg %p431
        %p889 = pneg %p455
        %p890 = pneg %p452
        %p891 = pneg %p476
        %p892 = pneg %p473
        %p893 = pneg %p497
        %p894 = pneg %p494
        %p895 = pneg %p518
        %p896 = pneg %p515
        %p897 = pneg %p539
        %p898 = pneg %p536
        %p899 = scmp.lt.s32.totalorder %s43, 1
        %s900 = scalar_select %p899, %s43, 1
        %s901 = smul.addr %s900, 48
        %s902 = smul.addr %s901, 4
        %s903 = scalar_lea.vmem %s4, %s902
        %p904 = scmp.lt.s32.totalorder %s43, 1
        %s905 = scalar_select %p904, %s43, 1
        %s906 = smul.addr %s905, 3
        %s907 = scalar_lea.vmem %s5, %s906
        %p908 = scmp.lt.s32.totalorder %s43, 1
        %s909 = scalar_select %p908, %s43, 1
        %s910 = smul.addr %s909, 16
        %s911 = smul.addr %s910, 4
        %s912 = scalar_lea.vmem %s6, %s911
        %p913 = scmp.lt.s32.totalorder %s43, 1
        %s914 = scalar_select %p913, %s43, 1
        %s915 = scalar_lea.vmem %s7, %s914
        %p916 = scmp.lt.s32.totalorder %s43, 1
        %s917 = scalar_select %p916, %s43, 1
        %s918 = scalar_lea.vmem %s8, %s917
        %p919 = scmp.lt.s32.totalorder %s43, 1
        %s920 = scalar_select %p919, %s43, 1
        %s921 = smul.addr %s920, 32
        %s922 = smul.addr %s921, 4
        %s923 = scalar_lea.vmem %s10, %s922
        %p924 = scmp.lt.s32.totalorder %s43, 1
        %s925 = scalar_select %p924, %s43, 1
        %s926 = scalar_lea.vmem %s14, %s925
        %p928 = scmp.eq.s32.totalorder %s43, 0
        // Predicated region
        $region133: #{roberta_class_forward.1} parent=99 // pred_check
          %p929 = pneg %p928
        $region134: #{roberta_class_forward.1} parent=99 // pred_check_branch
          %931 = sbr.rel (%p929) target = $region136
        $region135: #{roberta_class_forward.1} parent=99 // pred_region
          %v932 = vld [vmem:[%s0] sm:$0xff]
          %v933 = vld [vmem:[%s0 + $0x8] sm:$0xff]
          %v934 = vld [vmem:[%s0 + $0x10] sm:$0xff]
          %v935 = vld [vmem:[%s0 + $0x18] sm:$0xff]
          %v936 = vld [vmem:[%s2] sm:$0x1]
          %v937 = vld [vmem:[#allocation3] sm:$0x1]
          %938 = vadd.xlane.f32.xlu0 %v932
          %v939 = vpop.xlane.xlu0 %938
          %940 = vadd.xlane.f32.xlu0 %v933
          %v941 = vpop.xlane.xlu0 %940
          %942 = vadd.xlane.f32.xlu0 %v934
          %v943 = vpop.xlane.xlu0 %942
          %944 = vadd.xlane.f32.xlu0 %v935
          %v945 = vpop.xlane.xlu0 %944
          %v946 = vrcp.pop 128.0
          %v947 = vmul.f32 %v939, %v946
          %v948 = vmul.f32 %v941, %v946
          %v949 = vmul.f32 %v943, %v946
          %v950 = vmul.f32 %v945, %v946
          %v951 = vsub.f32 %v932, %v947
          %v952 = vsub.f32 %v933, %v948
          %v953 = vsub.f32 %v934, %v949
          %v954 = vsub.f32 %v935, %v950
          %v955 = vmul.f32 %v951, %v951
          %v956 = vmul.f32 %v952, %v952
          %v957 = vmul.f32 %v953, %v953
          %v958 = vmul.f32 %v954, %v954
          %959 = vadd.xlane.f32.xlu0 %v955
          %v960 = vpop.xlane.xlu0 %959
          %961 = vadd.xlane.f32.xlu0 %v956
          %v962 = vpop.xlane.xlu0 %961
          %963 = vadd.xlane.f32.xlu0 %v957
          %v964 = vpop.xlane.xlu0 %963
          %965 = vadd.xlane.f32.xlu0 %v958
          %v966 = vpop.xlane.xlu0 %965
          %v967 = vmul.f32 %v960, %v946
          %v968 = vmul.f32 %v962, %v946
          %v969 = vmul.f32 %v964, %v946
          %v970 = vmul.f32 %v966, %v946
          %v971 = vadd.f32 %v967, 1e-05
          %v972 = vadd.f32 %v968, 1e-05
          %v973 = vadd.f32 %v969, 1e-05
          %v974 = vadd.f32 %v970, 1e-05
          %v975 = vrsqrt.pop %v971
          %v976 = vrsqrt.pop %v972
          %v977 = vrsqrt.pop %v973
          %v978 = vrsqrt.pop %v974
          %v979 = vmul.f32 %v951, %v975
          %v980 = vmul.f32 %v952, %v976
          %v981 = vmul.f32 %v953, %v977
          %v982 = vmul.f32 %v954, %v978
          %v984 = vlaneseq
          %v985 = vshrl.u32 %v984, 7
          %v986 = vsub.s32 0, %v985
          %v987 = vrot.slane %v936, %v986
          %v989 = vmul.f32 %v979, %v987
          %v990 = vmul.f32 %v980, %v987
          %v991 = vmul.f32 %v981, %v987
          %v992 = vmul.f32 %v982, %v987
          %v994 = vlaneseq
          %v995 = vshrl.u32 %v994, 7
          %v996 = vsub.s32 0, %v995
          %v997 = vrot.slane %v937, %v996
          %v999 = vadd.f32 %v989, %v997
          %v1000 = vadd.f32 %v990, %v997
          %v1001 = vadd.f32 %v991, %v997
          %v1002 = vadd.f32 %v992, %v997
          %v1003 = vpack.c.bf16 %v1000, %v999
          %v1004 = vpack.c.bf16 %v1002, %v1001
          %v1007 = vunpack.c.l.b16 %v1003
          %v1008 = vunpack.c.h.b16 %v1003
          %v1009 = vunpack.c.l.b16 %v1004
          %v1010 = vunpack.c.h.b16 %v1004
          %v1011 = vpack.c.b16 %v1007, %v1007
          %v1012 = vpack.c.b16 %v1008, %v1008
          %v1013 = vpack.c.b16 %v1009, %v1009
          %v1014 = vpack.c.b16 %v1010, %v1010
          %1019 = vst [vmem:[#allocation2] sm:$0xf] %v1011
          %1020 = vst [vmem:[#allocation2 + $0x4] sm:$0xf] %v1012
          %1021 = vst [vmem:[#allocation2 + $0x8] sm:$0xf] %v1013
          %1022 = vst [vmem:[#allocation2 + $0xc] sm:$0xf] %v1014
        $region136: #{roberta_class_forward.1} parent=99 // pred_fallthru
          _
        %v1023 = vld [vmem:[#allocation2] sm:$0xf]
        %v1024 = vld [vmem:[#allocation2 + $0x4] sm:$0xf]
        %v1025 = vld [vmem:[#allocation2 + $0x8] sm:$0xf]
        %v1026 = vld [vmem:[#allocation2 + $0xc] sm:$0xf]
        %v1027 = vld [vmem:[%s903] sm:$0xff]
        %v1028 = vld [vmem:[%s903 + $0x8] sm:$0xf]
        %v1029 = vld [vmem:[%s903 + $0xc] sm:$0xff]
        %v1030 = vld [vmem:[%s903 + $0x14] sm:$0xf]
        %v1031 = vld [vmem:[%s903 + $0x18] sm:$0xff]
        %v1032 = vld [vmem:[%s903 + $0x20] sm:$0xf]
        %v1033 = vld [vmem:[%s903 + $0x24] sm:$0xff]
        %v1034 = vld [vmem:[%s903 + $0x2c] sm:$0xf]
        %v1035 = vld [vmem:[%s903 + $0x30] sm:$0xff]
        %v1036 = vld [vmem:[%s903 + $0x38] sm:$0xf]
        %v1037 = vld [vmem:[%s903 + $0x3c] sm:$0xff]
        %v1038 = vld [vmem:[%s903 + $0x44] sm:$0xf]
        %v1039 = vld [vmem:[%s903 + $0x48] sm:$0xff]
        %v1040 = vld [vmem:[%s903 + $0x50] sm:$0xf]
        %v1041 = vld [vmem:[%s903 + $0x54] sm:$0xff]
        %v1042 = vld [vmem:[%s903 + $0x5c] sm:$0xf]
        %v1043 = vld [vmem:[%s903 + $0x60] sm:$0xff]
        %v1044 = vld [vmem:[%s903 + $0x68] sm:$0xf]
        %v1045 = vld [vmem:[%s903 + $0x6c] sm:$0xff]
        %v1046 = vld [vmem:[%s903 + $0x74] sm:$0xf]
        %v1047 = vld [vmem:[%s903 + $0x78] sm:$0xff]
        %v1048 = vld [vmem:[%s903 + $0x80] sm:$0xf]
        %v1049 = vld [vmem:[%s903 + $0x84] sm:$0xff]
        %v1050 = vld [vmem:[%s903 + $0x8c] sm:$0xf]
        %v1051 = vld [vmem:[%s903 + $0x90] sm:$0xff]
        %v1052 = vld [vmem:[%s903 + $0x98] sm:$0xf]
        %v1053 = vld [vmem:[%s903 + $0x9c] sm:$0xff]
        %v1054 = vld [vmem:[%s903 + $0xa4] sm:$0xf]
        %v1055 = vld [vmem:[%s903 + $0xa8] sm:$0xff]
        %v1056 = vld [vmem:[%s903 + $0xb0] sm:$0xf]
        %v1057 = vld [vmem:[%s903 + $0xb4] sm:$0xff]
        %v1058 = vld [vmem:[%s903 + $0xbc] sm:$0xf]
        %v1059 = vld [vmem:[%s907] sm:$0x7]
        %v1061 = vlaneseq
        %v1062 = vshrl.u32 %v1061, 7
        %v1063 = vsub.s32 0, %v1062
        %v1064 = vrot.slane %v1059, %v1063
        %v1065 = vlaneseq
        %v1066 = vshrl.u32 %v1065, 7
        %v1067 = vsub.s32 1, %v1066
        %v1068 = vrot.slane %v1059, %v1067
        %v1069 = vlaneseq
        %v1070 = vshrl.u32 %v1069, 7
        %v1071 = vsub.s32 2, %v1070
        %v1072 = vrot.slane %v1059, %v1071
        %v1080 = vunpack.c.l.b16 %v1023
        %v1081 = vunpack.c.l.b16 %v1024
        %v1082 = vunpack.c.l.b16 %v1025
        %v1083 = vunpack.c.l.b16 %v1026
        %v1084 = vpack.c.b16 %v1081, %v1080
        %v1085 = vpack.c.b16 %v1083, %v1082
        %v1120 = vunpack.c.l.b16 %v1027
        %v1121 = vunpack.c.h.b16 %v1027
        %v1122 = vunpack.c.l.b16 %v1028
        %v1123 = vunpack.c.l.b16 %v1029
        %v1124 = vunpack.c.h.b16 %v1029
        %v1125 = vunpack.c.l.b16 %v1030
        %v1126 = vunpack.c.l.b16 %v1031
        %v1127 = vunpack.c.h.b16 %v1031
        %v1128 = vunpack.c.l.b16 %v1032
        %v1129 = vunpack.c.l.b16 %v1033
        %v1130 = vunpack.c.h.b16 %v1033
        %v1131 = vunpack.c.l.b16 %v1034
        %v1132 = vunpack.c.l.b16 %v1035
        %v1133 = vunpack.c.h.b16 %v1035
        %v1134 = vunpack.c.l.b16 %v1036
        %v1135 = vunpack.c.l.b16 %v1037
        %v1136 = vunpack.c.h.b16 %v1037
        %v1137 = vunpack.c.l.b16 %v1038
        %v1138 = vunpack.c.l.b16 %v1039
        %v1139 = vunpack.c.h.b16 %v1039
        %v1140 = vunpack.c.l.b16 %v1040
        %v1141 = vunpack.c.l.b16 %v1041
        %v1142 = vunpack.c.h.b16 %v1041
        %v1143 = vunpack.c.l.b16 %v1042
        %v1144 = vunpack.c.l.b16 %v1043
        %v1145 = vunpack.c.h.b16 %v1043
        %v1146 = vunpack.c.l.b16 %v1044
        %v1147 = vunpack.c.l.b16 %v1045
        %v1148 = vunpack.c.h.b16 %v1045
        %v1149 = vunpack.c.l.b16 %v1046
        %v1150 = vunpack.c.l.b16 %v1047
        %v1151 = vunpack.c.h.b16 %v1047
        %v1152 = vunpack.c.l.b16 %v1048
        %v1153 = vunpack.c.l.b16 %v1049
        %v1154 = vunpack.c.h.b16 %v1049
        %v1155 = vunpack.c.l.b16 %v1050
        %v1156 = vunpack.c.l.b16 %v1051
        %v1157 = vunpack.c.h.b16 %v1051
        %v1158 = vunpack.c.l.b16 %v1052
        %v1159 = vunpack.c.l.b16 %v1053
        %v1160 = vunpack.c.h.b16 %v1053
        %v1161 = vunpack.c.l.b16 %v1054
        %v1162 = vunpack.c.l.b16 %v1055
        %v1163 = vunpack.c.h.b16 %v1055
        %v1164 = vunpack.c.l.b16 %v1056
        %v1165 = vunpack.c.l.b16 %v1057
        %v1166 = vunpack.c.h.b16 %v1057
        %v1167 = vunpack.c.l.b16 %v1058
        %v1168 = vpack.c.b16 %v1123, %v1120
        %v1169 = vpack.c.b16 %v1124, %v1121
        %v1170 = vpack.c.b16 %v1125, %v1122
        %v1171 = vpack.c.b16 %v1129, %v1126
        %v1172 = vpack.c.b16 %v1130, %v1127
        %v1173 = vpack.c.b16 %v1131, %v1128
        %v1174 = vpack.c.b16 %v1135, %v1132
        %v1175 = vpack.c.b16 %v1136, %v1133
        %v1176 = vpack.c.b16 %v1137, %v1134
        %v1177 = vpack.c.b16 %v1141, %v1138
        %v1178 = vpack.c.b16 %v1142, %v1139
        %v1179 = vpack.c.b16 %v1143, %v1140
        %v1180 = vpack.c.b16 %v1147, %v1144
        %v1181 = vpack.c.b16 %v1148, %v1145
        %v1182 = vpack.c.b16 %v1149, %v1146
        %v1183 = vpack.c.b16 %v1153, %v1150
        %v1184 = vpack.c.b16 %v1154, %v1151
        %v1185 = vpack.c.b16 %v1155, %v1152
        %v1186 = vpack.c.b16 %v1159, %v1156
        %v1187 = vpack.c.b16 %v1160, %v1157
        %v1188 = vpack.c.b16 %v1161, %v1158
        %v1189 = vpack.c.b16 %v1165, %v1162
        %v1190 = vpack.c.b16 %v1166, %v1163
        %v1191 = vpack.c.b16 %v1167, %v1164
        %1216 = vmatprep.subr.bf16.mxu0 %v1190
        %1217 = vmatpush1.bf16.msra.mxu0 %v1189
        %1218 = vmatprep.subr.bf16.mxu0 %v1187
        %1219 = vmatpush1.bf16.msra.mxu0 %v1186
        %1220 = vmatprep.subr.bf16.mxu0 %v1184
        %1221 = vmatpush1.bf16.msra.mxu0 %v1183
        %1222 = vmatprep.subr.bf16.mxu0 %v1181
        %1223 = vmatpush1.bf16.msra.mxu0 %v1180
        %1224 = vmatprep.subr.bf16.mxu0 %v1178
        %1225 = vmatpush1.bf16.msra.mxu0 %v1177
        %1226 = vmatprep.subr.bf16.mxu0 %v1175
        %1227 = vmatpush1.bf16.msra.mxu0 %v1174
        %1228 = vmatprep.subr.bf16.mxu0 %v1172
        %1229 = vmatpush1.bf16.msra.mxu0 %v1171
        %1230 = vmatprep.subr.bf16.mxu0 %v1169
        %1231 = vmatpush1.bf16.msra.mxu0 %v1168
        %1232 = vmatprep.subr.bf16.mxu0 0
        %1233 = vmatpush2.bf16.msra.mxu0 0
        %1234 = vmatprep.subr.bf16.mxu0 0
        %1235 = vmatpush2.bf16.msra.mxu0 0
        %1236 = vmatprep.subr.bf16.mxu0 0
        %1237 = vmatpush2.bf16.msra.mxu0 0
        %1238 = vmatprep.subr.bf16.mxu0 0
        %1239 = vmatpush2.bf16.msra.mxu0 0
        %1240 = vmatprep.subr.bf16.mxu0 0
        %1241 = vmatpush2.bf16.msra.mxu0 0
        %1242 = vmatprep.subr.bf16.mxu0 0
        %1243 = vmatpush2.bf16.msra.mxu0 0
        %1244 = vmatprep.subr.bf16.mxu0 0
        %1245 = vmatpush2.bf16.msra.mxu0 0
        %1246 = vmatprep.subr.bf16.mxu0 0
        %1247 = vmatpush2.bf16.msra.mxu0 0
        %1248 = vmatprep.mubr.bf16.mxu0 0
        %1249 = vmatmul.mubr.bf16.gmra.mxu0 %v1084
        %v1250 = vpop.f32.mrf.mxu0
        %v1251 = vadd.f32 %v1064, %v1250
        %v1252 = vpop.f32.mrf.mxu0
        %v1253 = vadd.f32 %v1068, %v1252
        %v1254 = vpop.f32.mrf.mxu0
        %v1255 = vadd.f32 %v1064, %v1254
        %v1256 = vpop.f32.mrf.mxu0
        %v1257 = vadd.f32 %v1068, %v1256
        %1258 = vmatprep.mubr.bf16.mxu0 0
        %1259 = vmatmul.mubr.bf16.gmra.mxu0 %v1085
        %v1260 = vpop.f32.mrf.mxu0
        %v1261 = vadd.f32 %v1064, %v1260
        %v1262 = vpop.f32.mrf.mxu0
        %v1263 = vadd.f32 %v1068, %v1262
        %v1264 = vpop.f32.mrf.mxu0
        %v1265 = vadd.f32 %v1064, %v1264
        %v1266 = vpop.f32.mrf.mxu0
        %v1267 = vadd.f32 %v1068, %v1266
        %1268 = vdwg.mxu0
        %1269 = vmatprep.subr.bf16.mxu0 0
        %1270 = vmatpush1.bf16.msra.mxu0 %v1191
        %1271 = vmatprep.subr.bf16.mxu0 0
        %1272 = vmatpush1.bf16.msra.mxu0 %v1188
        %1273 = vmatprep.subr.bf16.mxu0 0
        %1274 = vmatpush1.bf16.msra.mxu0 %v1185
        %1275 = vmatprep.subr.bf16.mxu0 0
        %1276 = vmatpush1.bf16.msra.mxu0 %v1182
        %1277 = vmatprep.subr.bf16.mxu0 0
        %1278 = vmatpush1.bf16.msra.mxu0 %v1179
        %1279 = vmatprep.subr.bf16.mxu0 0
        %1280 = vmatpush1.bf16.msra.mxu0 %v1176
        %1281 = vmatprep.subr.bf16.mxu0 0
        %1282 = vmatpush1.bf16.msra.mxu0 %v1173
        %1283 = vmatprep.subr.bf16.mxu0 0
        %1284 = vmatpush1.bf16.msra.mxu0 %v1170
        %1285 = vmatprep.subr.bf16.mxu0 0
        %1286 = vmatpush2.bf16.msra.mxu0 0
        %1287 = vmatprep.subr.bf16.mxu0 0
        %1288 = vmatpush2.bf16.msra.mxu0 0
        %1289 = vmatprep.subr.bf16.mxu0 0
        %1290 = vmatpush2.bf16.msra.mxu0 0
        %1291 = vmatprep.subr.bf16.mxu0 0
        %1292 = vmatpush2.bf16.msra.mxu0 0
        %1293 = vmatprep.subr.bf16.mxu0 0
        %1294 = vmatpush2.bf16.msra.mxu0 0
        %1295 = vmatprep.subr.bf16.mxu0 0
        %1296 = vmatpush2.bf16.msra.mxu0 0
        %1297 = vmatprep.subr.bf16.mxu0 0
        %1298 = vmatpush2.bf16.msra.mxu0 0
        %1299 = vmatprep.subr.bf16.mxu0 0
        %1300 = vmatpush2.bf16.msra.mxu0 0
        %1301 = vmatprep.mubr.bf16.mxu0 0
        %1302 = vmatmul.mubr.bf16.gmra.mxu0 %v1084
        %v1303 = vpop.f32.mrf.mxu0
        %v1304 = vadd.f32 %v1072, %v1303
        %v1305 = vpop.f32.mrf.mxu0
        %v1306 = vpop.f32.mrf.mxu0
        %v1307 = vadd.f32 %v1072, %v1306
        %v1308 = vpop.f32.mrf.mxu0
        %1309 = vmatprep.mubr.bf16.mxu0 0
        %1310 = vmatmul.mubr.bf16.gmra.mxu0 %v1085
        %v1311 = vpop.f32.mrf.mxu0
        %v1312 = vadd.f32 %v1072, %v1311
        %v1313 = vpop.f32.mrf.mxu0
        %v1314 = vpop.f32.mrf.mxu0
        %v1315 = vadd.f32 %v1072, %v1314
        %v1316 = vpop.f32.mrf.mxu0
        %1317 = vdwg.mxu0
        %v1318 = vlaneseq
        %v1319 = vand.u32 %v1318, 127
        %vm1320 = vcmp.ge.s32.totalorder %v1319, 0
        %vm1321 = vcmp.lt.s32.totalorder %v1319, 32
        %vm1322 = vmand %vm1320, %vm1321
        %v1323 = vsel %vm1322, 1.0, 0.0
        %vm1324 = vcmp.ge.s32.totalorder %v1319, 32
        %vm1325 = vcmp.lt.s32.totalorder %v1319, 64
        %vm1326 = vmand %vm1324, %vm1325
        %v1327 = vsel %vm1326, 1.0, 0.0
        %vm1328 = vcmp.ge.s32.totalorder %v1319, 64
        %vm1329 = vcmp.lt.s32.totalorder %v1319, 96
        %vm1330 = vmand %vm1328, %vm1329
        %v1331 = vsel %vm1330, 1.0, 0.0
        %vm1332 = vcmp.ge.s32.totalorder %v1319, 96
        %vm1333 = vcmp.lt.s32.totalorder %v1319, 128
        %vm1334 = vmand %vm1332, %vm1333
        %v1335 = vsel %vm1334, 1.0, 0.0
        %v1336 = vmul.f32 %v1251, %v1323
        %v1337 = vmul.f32 %v1255, %v1323
        %v1338 = vmul.f32 %v1251, %v1327
        %v1339 = vmul.f32 %v1255, %v1327
        %v1340 = vmul.f32 %v1251, %v1331
        %v1341 = vmul.f32 %v1255, %v1331
        %v1342 = vmul.f32 %v1251, %v1335
        %v1343 = vmul.f32 %v1255, %v1335
        %v1344 = vpack.c.bf16 %v1337, %v1336
        %v1345 = vpack.c.bf16 %v1339, %v1338
        %v1346 = vpack.c.bf16 %v1341, %v1340
        %v1347 = vpack.c.bf16 %v1343, %v1342
        %v1348 = vpack.c.bf16 %v1257, %v1253
        %v1349 = vld [vmem:[%s1] sm:$0x1]
        %v1350 = vlaneseq
        %v1351 = vshrl.u32 %v1350, 7
        %v1352 = vsub.s32 0, %v1351
        %v1353 = vrot.slane %v1349, %v1352
        %1354 = vmatprep.subr.bf16.mxu0 0
        %1355 = vmatpush1.bf16.xpose.msra.mxu0 0
        %1356 = vmatprep.subr.bf16.mxu0 0
        %1357 = vmatpush1.bf16.xpose.msra.mxu0 0
        %1358 = vmatprep.subr.bf16.mxu0 0
        %1359 = vmatpush1.bf16.xpose.msra.mxu0 0
        %1360 = vmatprep.subr.bf16.mxu0 0
        %1361 = vmatpush1.bf16.xpose.msra.mxu0 0
        %1362 = vmatprep.subr.bf16.mxu0 0
        %1363 = vmatpush1.bf16.xpose.msra.mxu0 0
        %1364 = vmatprep.subr.bf16.mxu0 0
        %1365 = vmatpush1.bf16.xpose.msra.mxu0 0
        %1366 = vmatprep.subr.bf16.mxu0 0
        %1367 = vmatpush1.bf16.xpose.msra.mxu0 0
        %1368 = vmatprep.subr.bf16.mxu0 0
        %1369 = vmatpush1.bf16.xpose.msra.mxu0 %v1348
        %1370 = vmatprep.subr.bf16.mxu0 0
        %1371 = vmatpush2.bf16.xpose.msra.mxu0 0
        %1372 = vmatprep.subr.bf16.mxu0 0
        %1373 = vmatpush2.bf16.xpose.msra.mxu0 0
        %1374 = vmatprep.subr.bf16.mxu0 0
        %1375 = vmatpush2.bf16.xpose.msra.mxu0 0
        %1376 = vmatprep.subr.bf16.mxu0 0
        %1377 = vmatpush2.bf16.xpose.msra.mxu0 0
        %1378 = vmatprep.subr.bf16.mxu0 0
        %1379 = vmatpush2.bf16.xpose.msra.mxu0 0
        %1380 = vmatprep.subr.bf16.mxu0 0
        %1381 = vmatpush2.bf16.xpose.msra.mxu0 0
        %1382 = vmatprep.subr.bf16.mxu0 0
        %1383 = vmatpush2.bf16.xpose.msra.mxu0 0
        %1384 = vmatprep.subr.bf16.mxu0 0
        %1385 = vmatpush2.bf16.xpose.msra.mxu0 0
        %1386 = vmatprep.mubr.bf16.mxu0 0
        %1387 = vmatmul.mubr.bf16.gmra.mxu0 %v1344
        %v1388 = vpop.f32.mrf.mxu0
        %v1389 = vadd.f32 %v1353, %v1388
        %v1390 = vpop.f32.mrf.mxu0
        %v1391 = vpop.f32.mrf.mxu0
        %v1392 = vadd.f32 %v1353, %v1391
        %v1393 = vpop.f32.mrf.mxu0
        %1394 = vmatprep.mubr.bf16.mxu0 0
        %1395 = vmatmul.mubr.bf16.gmra.mxu0 %v1345
        %v1396 = vpop.f32.mrf.mxu0
        %v1397 = vadd.f32 %v1353, %v1396
        %v1398 = vpop.f32.mrf.mxu0
        %v1399 = vpop.f32.mrf.mxu0
        %v1400 = vadd.f32 %v1353, %v1399
        %v1401 = vpop.f32.mrf.mxu0
        %1402 = vmatprep.mubr.bf16.mxu0 0
        %1403 = vmatmul.mubr.bf16.gmra.mxu0 %v1346
        %v1404 = vpop.f32.mrf.mxu0
        %v1405 = vadd.f32 %v1353, %v1404
        %v1406 = vpop.f32.mrf.mxu0
        %v1407 = vpop.f32.mrf.mxu0
        %v1408 = vadd.f32 %v1353, %v1407
        %v1409 = vpop.f32.mrf.mxu0
        %1410 = vmatprep.mubr.bf16.mxu0 0
        %1411 = vmatmul.mubr.bf16.gmra.mxu0 %v1347
        %v1412 = vpop.f32.mrf.mxu0
        %v1413 = vadd.f32 %v1353, %v1412
        %v1414 = vpop.f32.mrf.mxu0
        %v1415 = vpop.f32.mrf.mxu0
        %v1416 = vadd.f32 %v1353, %v1415
        %v1417 = vpop.f32.mrf.mxu0
        %1418 = vdwg.mxu0
        %vm1419 = vcmask 130048
        %v1420 = vsel %vm1419, %v1389, -inf
        %1421 = vmax.xlane.f32.xlu0 %v1420
        %v1422 = vpop.xlane.xlu0 %1421
        %v1423 = vsel %vm1419, %v1392, -inf
        %1424 = vmax.xlane.f32.xlu0 %v1423
        %v1425 = vpop.xlane.xlu0 %1424
        %v1426 = vsel %vm1419, %v1397, -inf
        %1427 = vmax.xlane.f32.xlu0 %v1426
        %v1428 = vpop.xlane.xlu0 %1427
        %v1429 = vsel %vm1419, %v1400, -inf
        %1430 = vmax.xlane.f32.xlu0 %v1429
        %v1431 = vpop.xlane.xlu0 %1430
        %v1432 = vsel %vm1419, %v1405, -inf
        %1433 = vmax.xlane.f32.xlu0 %v1432
        %v1434 = vpop.xlane.xlu0 %1433
        %v1435 = vsel %vm1419, %v1408, -inf
        %1436 = vmax.xlane.f32.xlu0 %v1435
        %v1437 = vpop.xlane.xlu0 %1436
        %v1438 = vsel %vm1419, %v1413, -inf
        %1439 = vmax.xlane.f32.xlu0 %v1438
        %v1440 = vpop.xlane.xlu0 %1439
        %v1441 = vsel %vm1419, %v1416, -inf
        %1442 = vmax.xlane.f32.xlu0 %v1441
        %v1443 = vpop.xlane.xlu0 %1442
        %v1444 = vsub.f32 %v1389, %v1422
        %v1445 = vsub.f32 %v1392, %v1425
        %v1446 = vsub.f32 %v1397, %v1428
        %v1447 = vsub.f32 %v1400, %v1431
        %v1448 = vsub.f32 %v1405, %v1434
        %v1449 = vsub.f32 %v1408, %v1437
        %v1450 = vsub.f32 %v1413, %v1440
        %v1451 = vsub.f32 %v1416, %v1443
        %v1452 = vmul.f32 %v1444, 1.442695
        %v1453 = vpow.pop %v1452
        %v1454 = vmul.f32 %v1445, 1.442695
        %v1455 = vpow.pop %v1454
        %v1456 = vmul.f32 %v1446, 1.442695
        %v1457 = vpow.pop %v1456
        %v1458 = vmul.f32 %v1447, 1.442695
        %v1459 = vpow.pop %v1458
        %v1460 = vmul.f32 %v1448, 1.442695
        %v1461 = vpow.pop %v1460
        %v1462 = vmul.f32 %v1449, 1.442695
        %v1463 = vpow.pop %v1462
        %v1464 = vmul.f32 %v1450, 1.442695
        %v1465 = vpow.pop %v1464
        %v1466 = vmul.f32 %v1451, 1.442695
        %v1467 = vpow.pop %v1466
        %v1468 = vsel %vm1419, %v1453, 0.0
        %1469 = vadd.xlane.f32.xlu0 %v1468
        %v1470 = vpop.xlane.xlu0 %1469
        %v1471 = vsel %vm1419, %v1455, 0.0
        %1472 = vadd.xlane.f32.xlu0 %v1471
        %v1473 = vpop.xlane.xlu0 %1472
        %v1474 = vsel %vm1419, %v1457, 0.0
        %1475 = vadd.xlane.f32.xlu0 %v1474
        %v1476 = vpop.xlane.xlu0 %1475
        %v1477 = vsel %vm1419, %v1459, 0.0
        %1478 = vadd.xlane.f32.xlu0 %v1477
        %v1479 = vpop.xlane.xlu0 %1478
        %v1480 = vsel %vm1419, %v1461, 0.0
        %1481 = vadd.xlane.f32.xlu0 %v1480
        %v1482 = vpop.xlane.xlu0 %1481
        %v1483 = vsel %vm1419, %v1463, 0.0
        %1484 = vadd.xlane.f32.xlu0 %v1483
        %v1485 = vpop.xlane.xlu0 %1484
        %v1486 = vsel %vm1419, %v1465, 0.0
        %1487 = vadd.xlane.f32.xlu0 %v1486
        %v1488 = vpop.xlane.xlu0 %1487
        %v1489 = vsel %vm1419, %v1467, 0.0
        %1490 = vadd.xlane.f32.xlu0 %v1489
        %v1491 = vpop.xlane.xlu0 %1490
        %v1492 = vrcp.pop %v1470
        %v1493 = vrcp.pop %v1473
        %v1494 = vrcp.pop %v1476
        %v1495 = vrcp.pop %v1479
        %v1496 = vrcp.pop %v1482
        %v1497 = vrcp.pop %v1485
        %v1498 = vrcp.pop %v1488
        %v1499 = vrcp.pop %v1491
        %v1500 = vmul.f32 %v1453, %v1492
        %v1501 = vmul.f32 %v1455, %v1493
        %v1502 = vmul.f32 %v1457, %v1494
        %v1503 = vmul.f32 %v1459, %v1495
        %v1504 = vmul.f32 %v1461, %v1496
        %v1505 = vmul.f32 %v1463, %v1497
        %v1506 = vmul.f32 %v1465, %v1498
        %v1507 = vmul.f32 %v1467, %v1499
        %v1508 = vpack.c.bf16 %v1501, %v1500
        %v1509 = vpack.c.bf16 %v1503, %v1502
        %v1510 = vpack.c.bf16 %v1505, %v1504
        %v1511 = vpack.c.bf16 %v1507, %v1506
        %v1512 = vmul.f32 %v1304, %v1323
        %v1513 = vmul.f32 %v1307, %v1323
        %v1514 = vpack.c.bf16 %v1513, %v1512
        %v1515 = vmul.f32 %v1304, %v1327
        %v1516 = vmul.f32 %v1307, %v1327
        %v1517 = vpack.c.bf16 %v1516, %v1515
        %v1519 = vsel %vm1419, %v1509, 0
        %1521 = vmatprep.subr.bf16.mxu0 0
        %1522 = vmatpush1.bf16.msra.mxu0 0
        %1523 = vmatprep.subr.bf16.mxu0 0
        %1524 = vmatpush1.bf16.msra.mxu0 0
        %1525 = vmatprep.subr.bf16.mxu0 0
        %1526 = vmatpush1.bf16.msra.mxu0 0
        %1527 = vmatprep.subr.bf16.mxu0 0
        %1528 = vmatpush1.bf16.msra.mxu0 0
        %1529 = vmatprep.subr.bf16.mxu0 0
        %1530 = vmatpush1.bf16.msra.mxu0 0
        %1531 = vmatprep.subr.bf16.mxu0 0
        %1532 = vmatpush1.bf16.msra.mxu0 0
        %1533 = vmatprep.subr.bf16.mxu0 0
        %1534 = vmatpush1.bf16.msra.mxu0 0
        %1535 = vmatprep.subr.bf16.mxu0 0
        %1536 = vmatpush1.bf16.msra.mxu0 %v1517
        %1537 = vmatprep.subr.bf16.mxu0 0
        %1538 = vmatpush2.bf16.msra.mxu0 0
        %1539 = vmatprep.subr.bf16.mxu0 0
        %1540 = vmatpush2.bf16.msra.mxu0 0
        %1541 = vmatprep.subr.bf16.mxu0 0
        %1542 = vmatpush2.bf16.msra.mxu0 0
        %1543 = vmatprep.subr.bf16.mxu0 0
        %1544 = vmatpush2.bf16.msra.mxu0 0
        %1545 = vmatprep.subr.bf16.mxu0 0
        %1546 = vmatpush2.bf16.msra.mxu0 0
        %1547 = vmatprep.subr.bf16.mxu0 0
        %1548 = vmatpush2.bf16.msra.mxu0 0
        %1549 = vmatprep.subr.bf16.mxu0 0
        %1550 = vmatpush2.bf16.msra.mxu0 0
        %1551 = vmatprep.subr.bf16.mxu0 0
        %1552 = vmatpush2.bf16.msra.mxu0 0
        %1553 = vmatprep.mubr.bf16.mxu0 0
        %1554 = vmatmul.mubr.bf16.gmra.mxu0 %v1519
        %v1555 = vpop.f32.mrf.mxu0
        %v1556 = vadd.f32 0.0, %v1555
        %v1557 = vpop.f32.mrf.mxu0
        %v1558 = vpop.f32.mrf.mxu0
        %v1559 = vadd.f32 0.0, %v1558
        %v1560 = vpop.f32.mrf.mxu0
        %1561 = vdwg.mxu0
        %v1563 = vsel %vm1419, %v1508, 0
        %1565 = vmatprep.subr.bf16.mxu0 0
        %1566 = vmatpush1.bf16.msra.mxu0 0
        %1567 = vmatprep.subr.bf16.mxu0 0
        %1568 = vmatpush1.bf16.msra.mxu0 0
        %1569 = vmatprep.subr.bf16.mxu0 0
        %1570 = vmatpush1.bf16.msra.mxu0 0
        %1571 = vmatprep.subr.bf16.mxu0 0
        %1572 = vmatpush1.bf16.msra.mxu0 0
        %1573 = vmatprep.subr.bf16.mxu0 0
        %1574 = vmatpush1.bf16.msra.mxu0 0
        %1575 = vmatprep.subr.bf16.mxu0 0
        %1576 = vmatpush1.bf16.msra.mxu0 0
        %1577 = vmatprep.subr.bf16.mxu0 0
        %1578 = vmatpush1.bf16.msra.mxu0 0
        %1579 = vmatprep.subr.bf16.mxu0 0
        %1580 = vmatpush1.bf16.msra.mxu0 %v1514
        %1581 = vmatprep.subr.bf16.mxu0 0
        %1582 = vmatpush2.bf16.msra.mxu0 0
        %1583 = vmatprep.subr.bf16.mxu0 0
        %1584 = vmatpush2.bf16.msra.mxu0 0
        %1585 = vmatprep.subr.bf16.mxu0 0
        %1586 = vmatpush2.bf16.msra.mxu0 0
        %1587 = vmatprep.subr.bf16.mxu0 0
        %1588 = vmatpush2.bf16.msra.mxu0 0
        %1589 = vmatprep.subr.bf16.mxu0 0
        %1590 = vmatpush2.bf16.msra.mxu0 0
        %1591 = vmatprep.subr.bf16.mxu0 0
        %1592 = vmatpush2.bf16.msra.mxu0 0
        %1593 = vmatprep.subr.bf16.mxu0 0
        %1594 = vmatpush2.bf16.msra.mxu0 0
        %1595 = vmatprep.subr.bf16.mxu0 0
        %1596 = vmatpush2.bf16.msra.mxu0 0
        %1597 = vmatprep.mubr.bf16.mxu0 0
        %1598 = vmatmul.mubr.bf16.gmra.mxu0 %v1563
        %v1599 = vpop.f32.mrf.mxu0
        %v1600 = vadd.f32 %v1556, %v1599
        %v1601 = vpop.f32.mrf.mxu0
        %v1602 = vpop.f32.mrf.mxu0
        %v1603 = vadd.f32 %v1559, %v1602
        %v1604 = vpop.f32.mrf.mxu0
        %1605 = vdwg.mxu0
        %v1606 = vmul.f32 %v1304, %v1331
        %v1607 = vmul.f32 %v1307, %v1331
        %v1608 = vpack.c.bf16 %v1607, %v1606
        %v1610 = vsel %vm1419, %v1510, 0
        %1612 = vmatprep.subr.bf16.mxu0 0
        %1613 = vmatpush1.bf16.msra.mxu0 0
        %1614 = vmatprep.subr.bf16.mxu0 0
        %1615 = vmatpush1.bf16.msra.mxu0 0
        %1616 = vmatprep.subr.bf16.mxu0 0
        %1617 = vmatpush1.bf16.msra.mxu0 0
        %1618 = vmatprep.subr.bf16.mxu0 0
        %1619 = vmatpush1.bf16.msra.mxu0 0
        %1620 = vmatprep.subr.bf16.mxu0 0
        %1621 = vmatpush1.bf16.msra.mxu0 0
        %1622 = vmatprep.subr.bf16.mxu0 0
        %1623 = vmatpush1.bf16.msra.mxu0 0
        %1624 = vmatprep.subr.bf16.mxu0 0
        %1625 = vmatpush1.bf16.msra.mxu0 0
        %1626 = vmatprep.subr.bf16.mxu0 0
        %1627 = vmatpush1.bf16.msra.mxu0 %v1608
        %1628 = vmatprep.subr.bf16.mxu0 0
        %1629 = vmatpush2.bf16.msra.mxu0 0
        %1630 = vmatprep.subr.bf16.mxu0 0
        %1631 = vmatpush2.bf16.msra.mxu0 0
        %1632 = vmatprep.subr.bf16.mxu0 0
        %1633 = vmatpush2.bf16.msra.mxu0 0
        %1634 = vmatprep.subr.bf16.mxu0 0
        %1635 = vmatpush2.bf16.msra.mxu0 0
        %1636 = vmatprep.subr.bf16.mxu0 0
        %1637 = vmatpush2.bf16.msra.mxu0 0
        %1638 = vmatprep.subr.bf16.mxu0 0
        %1639 = vmatpush2.bf16.msra.mxu0 0
        %1640 = vmatprep.subr.bf16.mxu0 0
        %1641 = vmatpush2.bf16.msra.mxu0 0
        %1642 = vmatprep.subr.bf16.mxu0 0
        %1643 = vmatpush2.bf16.msra.mxu0 0
        %1644 = vmatprep.mubr.bf16.mxu0 0
        %1645 = vmatmul.mubr.bf16.gmra.mxu0 %v1610
        %v1646 = vpop.f32.mrf.mxu0
        %v1647 = vadd.f32 0.0, %v1646
        %v1648 = vpop.f32.mrf.mxu0
        %v1649 = vpop.f32.mrf.mxu0
        %v1650 = vadd.f32 0.0, %v1649
        %v1651 = vpop.f32.mrf.mxu0
        %1652 = vdwg.mxu0
        %v1653 = vadd.f32 %v1600, %v1647
        %v1654 = vadd.f32 %v1603, %v1650
        %v1655 = vmul.f32 %v1304, %v1335
        %v1656 = vmul.f32 %v1307, %v1335
        %v1657 = vpack.c.bf16 %v1656, %v1655
        %v1659 = vsel %vm1419, %v1511, 0
        %1661 = vmatprep.subr.bf16.mxu0 0
        %1662 = vmatpush1.bf16.msra.mxu0 0
        %1663 = vmatprep.subr.bf16.mxu0 0
        %1664 = vmatpush1.bf16.msra.mxu0 0
        %1665 = vmatprep.subr.bf16.mxu0 0
        %1666 = vmatpush1.bf16.msra.mxu0 0
        %1667 = vmatprep.subr.bf16.mxu0 0
        %1668 = vmatpush1.bf16.msra.mxu0 0
        %1669 = vmatprep.subr.bf16.mxu0 0
        %1670 = vmatpush1.bf16.msra.mxu0 0
        %1671 = vmatprep.subr.bf16.mxu0 0
        %1672 = vmatpush1.bf16.msra.mxu0 0
        %1673 = vmatprep.subr.bf16.mxu0 0
        %1674 = vmatpush1.bf16.msra.mxu0 0
        %1675 = vmatprep.subr.bf16.mxu0 0
        %1676 = vmatpush1.bf16.msra.mxu0 %v1657
        %1677 = vmatprep.subr.bf16.mxu0 0
        %1678 = vmatpush2.bf16.msra.mxu0 0
        %1679 = vmatprep.subr.bf16.mxu0 0
        %1680 = vmatpush2.bf16.msra.mxu0 0
        %1681 = vmatprep.subr.bf16.mxu0 0
        %1682 = vmatpush2.bf16.msra.mxu0 0
        %1683 = vmatprep.subr.bf16.mxu0 0
        %1684 = vmatpush2.bf16.msra.mxu0 0
        %1685 = vmatprep.subr.bf16.mxu0 0
        %1686 = vmatpush2.bf16.msra.mxu0 0
        %1687 = vmatprep.subr.bf16.mxu0 0
        %1688 = vmatpush2.bf16.msra.mxu0 0
        %1689 = vmatprep.subr.bf16.mxu0 0
        %1690 = vmatpush2.bf16.msra.mxu0 0
        %1691 = vmatprep.subr.bf16.mxu0 0
        %1692 = vmatpush2.bf16.msra.mxu0 0
        %1693 = vmatprep.mubr.bf16.mxu0 0
        %1694 = vmatmul.mubr.bf16.gmra.mxu0 %v1659
        %v1695 = vpop.f32.mrf.mxu0
        %v1696 = vadd.f32 0.0, %v1695
        %v1697 = vpop.f32.mrf.mxu0
        %v1698 = vpop.f32.mrf.mxu0
        %v1699 = vadd.f32 0.0, %v1698
        %v1700 = vpop.f32.mrf.mxu0
        %1701 = vdwg.mxu0
        %v1702 = vadd.f32 %v1653, %v1696
        %v1703 = vadd.f32 %v1654, %v1699
        %v1704 = vmul.f32 %v1261, %v1323
        %v1705 = vmul.f32 %v1265, %v1323
        %v1706 = vmul.f32 %v1261, %v1327
        %v1707 = vmul.f32 %v1265, %v1327
        %v1708 = vmul.f32 %v1261, %v1331
        %v1709 = vmul.f32 %v1265, %v1331
        %v1710 = vmul.f32 %v1261, %v1335
        %v1711 = vmul.f32 %v1265, %v1335
        %v1712 = vpack.c.bf16 %v1705, %v1704
        %v1713 = vpack.c.bf16 %v1707, %v1706
        %v1714 = vpack.c.bf16 %v1709, %v1708
        %v1715 = vpack.c.bf16 %v1711, %v1710
        %v1716 = vpack.c.bf16 %v1267, %v1263
        %v1717 = vld [vmem:[%s1 + $0x1] sm:$0x1]
        %v1718 = vlaneseq
        %v1719 = vshrl.u32 %v1718, 7
        %v1720 = vsub.s32 0, %v1719
        %v1721 = vrot.slane %v1717, %v1720
        %1722 = vmatprep.subr.bf16.mxu0 0
        %1723 = vmatpush1.bf16.xpose.msra.mxu0 0
        %1724 = vmatprep.subr.bf16.mxu0 0
        %1725 = vmatpush1.bf16.xpose.msra.mxu0 0
        %1726 = vmatprep.subr.bf16.mxu0 0
        %1727 = vmatpush1.bf16.xpose.msra.mxu0 0
        %1728 = vmatprep.subr.bf16.mxu0 0
        %1729 = vmatpush1.bf16.xpose.msra.mxu0 0
        %1730 = vmatprep.subr.bf16.mxu0 0
        %1731 = vmatpush1.bf16.xpose.msra.mxu0 0
        %1732 = vmatprep.subr.bf16.mxu0 0
        %1733 = vmatpush1.bf16.xpose.msra.mxu0 0
        %1734 = vmatprep.subr.bf16.mxu0 0
        %1735 = vmatpush1.bf16.xpose.msra.mxu0 0
        %1736 = vmatprep.subr.bf16.mxu0 0
        %1737 = vmatpush1.bf16.xpose.msra.mxu0 %v1716
        %1738 = vmatprep.subr.bf16.mxu0 0
        %1739 = vmatpush2.bf16.xpose.msra.mxu0 0
        %1740 = vmatprep.subr.bf16.mxu0 0
        %1741 = vmatpush2.bf16.xpose.msra.mxu0 0
        %1742 = vmatprep.subr.bf16.mxu0 0
        %1743 = vmatpush2.bf16.xpose.msra.mxu0 0
        %1744 = vmatprep.subr.bf16.mxu0 0
        %1745 = vmatpush2.bf16.xpose.msra.mxu0 0
        %1746 = vmatprep.subr.bf16.mxu0 0
        %1747 = vmatpush2.bf16.xpose.msra.mxu0 0
        %1748 = vmatprep.subr.bf16.mxu0 0
        %1749 = vmatpush2.bf16.xpose.msra.mxu0 0
        %1750 = vmatprep.subr.bf16.mxu0 0
        %1751 = vmatpush2.bf16.xpose.msra.mxu0 0
        %1752 = vmatprep.subr.bf16.mxu0 0
        %1753 = vmatpush2.bf16.xpose.msra.mxu0 0
        %1754 = vmatprep.mubr.bf16.mxu0 0
        %1755 = vmatmul.mubr.bf16.gmra.mxu0 %v1712
        %v1756 = vpop.f32.mrf.mxu0
        %v1757 = vadd.f32 %v1721, %v1756
        %v1758 = vpop.f32.mrf.mxu0
        %v1759 = vpop.f32.mrf.mxu0
        %v1760 = vadd.f32 %v1721, %v1759
        %v1761 = vpop.f32.mrf.mxu0
        %1762 = vmatprep.mubr.bf16.mxu0 0
        %1763 = vmatmul.mubr.bf16.gmra.mxu0 %v1713
        %v1764 = vpop.f32.mrf.mxu0
        %v1765 = vadd.f32 %v1721, %v1764
        %v1766 = vpop.f32.mrf.mxu0
        %v1767 = vpop.f32.mrf.mxu0
        %v1768 = vadd.f32 %v1721, %v1767
        %v1769 = vpop.f32.mrf.mxu0
        %1770 = vmatprep.mubr.bf16.mxu0 0
        %1771 = vmatmul.mubr.bf16.gmra.mxu0 %v1714
        %v1772 = vpop.f32.mrf.mxu0
        %v1773 = vadd.f32 %v1721, %v1772
        %v1774 = vpop.f32.mrf.mxu0
        %v1775 = vpop.f32.mrf.mxu0
        %v1776 = vadd.f32 %v1721, %v1775
        %v1777 = vpop.f32.mrf.mxu0
        %1778 = vmatprep.mubr.bf16.mxu0 0
        %1779 = vmatmul.mubr.bf16.gmra.mxu0 %v1715
        %v1780 = vpop.f32.mrf.mxu0
        %v1781 = vadd.f32 %v1721, %v1780
        %v1782 = vpop.f32.mrf.mxu0
        %v1783 = vpop.f32.mrf.mxu0
        %v1784 = vadd.f32 %v1721, %v1783
        %v1785 = vpop.f32.mrf.mxu0
        %1786 = vdwg.mxu0
        %v1787 = vsel %vm1419, %v1757, -inf
        %1788 = vmax.xlane.f32.xlu0 %v1787
        %v1789 = vpop.xlane.xlu0 %1788
        %v1790 = vsel %vm1419, %v1760, -inf
        %1791 = vmax.xlane.f32.xlu0 %v1790
        %v1792 = vpop.xlane.xlu0 %1791
        %v1793 = vsel %vm1419, %v1765, -inf
        %1794 = vmax.xlane.f32.xlu0 %v1793
        %v1795 = vpop.xlane.xlu0 %1794
        %v1796 = vsel %vm1419, %v1768, -inf
        %1797 = vmax.xlane.f32.xlu0 %v1796
        %v1798 = vpop.xlane.xlu0 %1797
        %v1799 = vsel %vm1419, %v1773, -inf
        %1800 = vmax.xlane.f32.xlu0 %v1799
        %v1801 = vpop.xlane.xlu0 %1800
        %v1802 = vsel %vm1419, %v1776, -inf
        %1803 = vmax.xlane.f32.xlu0 %v1802
        %v1804 = vpop.xlane.xlu0 %1803
        %v1805 = vsel %vm1419, %v1781, -inf
        %1806 = vmax.xlane.f32.xlu0 %v1805
        %v1807 = vpop.xlane.xlu0 %1806
        %v1808 = vsel %vm1419, %v1784, -inf
        %1809 = vmax.xlane.f32.xlu0 %v1808
        %v1810 = vpop.xlane.xlu0 %1809
        %v1811 = vsub.f32 %v1757, %v1789
        %v1812 = vsub.f32 %v1760, %v1792
        %v1813 = vsub.f32 %v1765, %v1795
        %v1814 = vsub.f32 %v1768, %v1798
        %v1815 = vsub.f32 %v1773, %v1801
        %v1816 = vsub.f32 %v1776, %v1804
        %v1817 = vsub.f32 %v1781, %v1807
        %v1818 = vsub.f32 %v1784, %v1810
        %v1819 = vmul.f32 %v1811, 1.442695
        %v1820 = vpow.pop %v1819
        %v1821 = vmul.f32 %v1812, 1.442695
        %v1822 = vpow.pop %v1821
        %v1823 = vmul.f32 %v1813, 1.442695
        %v1824 = vpow.pop %v1823
        %v1825 = vmul.f32 %v1814, 1.442695
        %v1826 = vpow.pop %v1825
        %v1827 = vmul.f32 %v1815, 1.442695
        %v1828 = vpow.pop %v1827
        %v1829 = vmul.f32 %v1816, 1.442695
        %v1830 = vpow.pop %v1829
        %v1831 = vmul.f32 %v1817, 1.442695
        %v1832 = vpow.pop %v1831
        %v1833 = vmul.f32 %v1818, 1.442695
        %v1834 = vpow.pop %v1833
        %v1835 = vsel %vm1419, %v1820, 0.0
        %1836 = vadd.xlane.f32.xlu0 %v1835
        %v1837 = vpop.xlane.xlu0 %1836
        %v1838 = vsel %vm1419, %v1822, 0.0
        %1839 = vadd.xlane.f32.xlu0 %v1838
        %v1840 = vpop.xlane.xlu0 %1839
        %v1841 = vsel %vm1419, %v1824, 0.0
        %1842 = vadd.xlane.f32.xlu0 %v1841
        %v1843 = vpop.xlane.xlu0 %1842
        %v1844 = vsel %vm1419, %v1826, 0.0
        %1845 = vadd.xlane.f32.xlu0 %v1844
        %v1846 = vpop.xlane.xlu0 %1845
        %v1847 = vsel %vm1419, %v1828, 0.0
        %1848 = vadd.xlane.f32.xlu0 %v1847
        %v1849 = vpop.xlane.xlu0 %1848
        %v1850 = vsel %vm1419, %v1830, 0.0
        %1851 = vadd.xlane.f32.xlu0 %v1850
        %v1852 = vpop.xlane.xlu0 %1851
        %v1853 = vsel %vm1419, %v1832, 0.0
        %1854 = vadd.xlane.f32.xlu0 %v1853
        %v1855 = vpop.xlane.xlu0 %1854
        %v1856 = vsel %vm1419, %v1834, 0.0
        %1857 = vadd.xlane.f32.xlu0 %v1856
        %v1858 = vpop.xlane.xlu0 %1857
        %v1859 = vrcp.pop %v1837
        %v1860 = vrcp.pop %v1840
        %v1861 = vrcp.pop %v1843
        %v1862 = vrcp.pop %v1846
        %v1863 = vrcp.pop %v1849
        %v1864 = vrcp.pop %v1852
        %v1865 = vrcp.pop %v1855
        %v1866 = vrcp.pop %v1858
        %v1867 = vmul.f32 %v1820, %v1859
        %v1868 = vmul.f32 %v1822, %v1860
        %v1869 = vmul.f32 %v1824, %v1861
        %v1870 = vmul.f32 %v1826, %v1862
        %v1871 = vmul.f32 %v1828, %v1863
        %v1872 = vmul.f32 %v1830, %v1864
        %v1873 = vmul.f32 %v1832, %v1865
        %v1874 = vmul.f32 %v1834, %v1866
        %v1875 = vpack.c.bf16 %v1868, %v1867
        %v1876 = vpack.c.bf16 %v1870, %v1869
        %v1877 = vpack.c.bf16 %v1872, %v1871
        %v1878 = vpack.c.bf16 %v1874, %v1873
        %v1879 = vmul.f32 %v1312, %v1323
        %v1880 = vmul.f32 %v1315, %v1323
        %v1881 = vpack.c.bf16 %v1880, %v1879
        %v1882 = vmul.f32 %v1312, %v1327
        %v1883 = vmul.f32 %v1315, %v1327
        %v1884 = vpack.c.bf16 %v1883, %v1882
        %v1886 = vsel %vm1419, %v1876, 0
        %1888 = vmatprep.subr.bf16.mxu0 0
        %1889 = vmatpush1.bf16.msra.mxu0 0
        %1890 = vmatprep.subr.bf16.mxu0 0
        %1891 = vmatpush1.bf16.msra.mxu0 0
        %1892 = vmatprep.subr.bf16.mxu0 0
        %1893 = vmatpush1.bf16.msra.mxu0 0
        %1894 = vmatprep.subr.bf16.mxu0 0
        %1895 = vmatpush1.bf16.msra.mxu0 0
        %1896 = vmatprep.subr.bf16.mxu0 0
        %1897 = vmatpush1.bf16.msra.mxu0 0
        %1898 = vmatprep.subr.bf16.mxu0 0
        %1899 = vmatpush1.bf16.msra.mxu0 0
        %1900 = vmatprep.subr.bf16.mxu0 0
        %1901 = vmatpush1.bf16.msra.mxu0 0
        %1902 = vmatprep.subr.bf16.mxu0 0
        %1903 = vmatpush1.bf16.msra.mxu0 %v1884
        %1904 = vmatprep.subr.bf16.mxu0 0
        %1905 = vmatpush2.bf16.msra.mxu0 0
        %1906 = vmatprep.subr.bf16.mxu0 0
        %1907 = vmatpush2.bf16.msra.mxu0 0
        %1908 = vmatprep.subr.bf16.mxu0 0
        %1909 = vmatpush2.bf16.msra.mxu0 0
        %1910 = vmatprep.subr.bf16.mxu0 0
        %1911 = vmatpush2.bf16.msra.mxu0 0
        %1912 = vmatprep.subr.bf16.mxu0 0
        %1913 = vmatpush2.bf16.msra.mxu0 0
        %1914 = vmatprep.subr.bf16.mxu0 0
        %1915 = vmatpush2.bf16.msra.mxu0 0
        %1916 = vmatprep.subr.bf16.mxu0 0
        %1917 = vmatpush2.bf16.msra.mxu0 0
        %1918 = vmatprep.subr.bf16.mxu0 0
        %1919 = vmatpush2.bf16.msra.mxu0 0
        %1920 = vmatprep.mubr.bf16.mxu0 0
        %1921 = vmatmul.mubr.bf16.gmra.mxu0 %v1886
        %v1922 = vpop.f32.mrf.mxu0
        %v1923 = vadd.f32 0.0, %v1922
        %v1924 = vpop.f32.mrf.mxu0
        %v1925 = vpop.f32.mrf.mxu0
        %v1926 = vadd.f32 0.0, %v1925
        %v1927 = vpop.f32.mrf.mxu0
        %1928 = vdwg.mxu0
        %v1930 = vsel %vm1419, %v1875, 0
        %1932 = vmatprep.subr.bf16.mxu0 0
        %1933 = vmatpush1.bf16.msra.mxu0 0
        %1934 = vmatprep.subr.bf16.mxu0 0
        %1935 = vmatpush1.bf16.msra.mxu0 0
        %1936 = vmatprep.subr.bf16.mxu0 0
        %1937 = vmatpush1.bf16.msra.mxu0 0
        %1938 = vmatprep.subr.bf16.mxu0 0
        %1939 = vmatpush1.bf16.msra.mxu0 0
        %1940 = vmatprep.subr.bf16.mxu0 0
        %1941 = vmatpush1.bf16.msra.mxu0 0
        %1942 = vmatprep.subr.bf16.mxu0 0
        %1943 = vmatpush1.bf16.msra.mxu0 0
        %1944 = vmatprep.subr.bf16.mxu0 0
        %1945 = vmatpush1.bf16.msra.mxu0 0
        %1946 = vmatprep.subr.bf16.mxu0 0
        %1947 = vmatpush1.bf16.msra.mxu0 %v1881
        %1948 = vmatprep.subr.bf16.mxu0 0
        %1949 = vmatpush2.bf16.msra.mxu0 0
        %1950 = vmatprep.subr.bf16.mxu0 0
        %1951 = vmatpush2.bf16.msra.mxu0 0
        %1952 = vmatprep.subr.bf16.mxu0 0
        %1953 = vmatpush2.bf16.msra.mxu0 0
        %1954 = vmatprep.subr.bf16.mxu0 0
        %1955 = vmatpush2.bf16.msra.mxu0 0
        %1956 = vmatprep.subr.bf16.mxu0 0
        %1957 = vmatpush2.bf16.msra.mxu0 0
        %1958 = vmatprep.subr.bf16.mxu0 0
        %1959 = vmatpush2.bf16.msra.mxu0 0
        %1960 = vmatprep.subr.bf16.mxu0 0
        %1961 = vmatpush2.bf16.msra.mxu0 0
        %1962 = vmatprep.subr.bf16.mxu0 0
        %1963 = vmatpush2.bf16.msra.mxu0 0
        %1964 = vmatprep.mubr.bf16.mxu0 0
        %1965 = vmatmul.mubr.bf16.gmra.mxu0 %v1930
        %v1966 = vpop.f32.mrf.mxu0
        %v1967 = vadd.f32 %v1923, %v1966
        %v1968 = vpop.f32.mrf.mxu0
        %v1969 = vpop.f32.mrf.mxu0
        %v1970 = vadd.f32 %v1926, %v1969
        %v1971 = vpop.f32.mrf.mxu0
        %1972 = vdwg.mxu0
        %v1973 = vmul.f32 %v1312, %v1331
        %v1974 = vmul.f32 %v1315, %v1331
        %v1975 = vpack.c.bf16 %v1974, %v1973
        %v1977 = vsel %vm1419, %v1877, 0
        %1979 = vmatprep.subr.bf16.mxu0 0
        %1980 = vmatpush1.bf16.msra.mxu0 0
        %1981 = vmatprep.subr.bf16.mxu0 0
        %1982 = vmatpush1.bf16.msra.mxu0 0
        %1983 = vmatprep.subr.bf16.mxu0 0
        %1984 = vmatpush1.bf16.msra.mxu0 0
        %1985 = vmatprep.subr.bf16.mxu0 0
        %1986 = vmatpush1.bf16.msra.mxu0 0
        %1987 = vmatprep.subr.bf16.mxu0 0
        %1988 = vmatpush1.bf16.msra.mxu0 0
        %1989 = vmatprep.subr.bf16.mxu0 0
        %1990 = vmatpush1.bf16.msra.mxu0 0
        %1991 = vmatprep.subr.bf16.mxu0 0
        %1992 = vmatpush1.bf16.msra.mxu0 0
        %1993 = vmatprep.subr.bf16.mxu0 0
        %1994 = vmatpush1.bf16.msra.mxu0 %v1975
        %1995 = vmatprep.subr.bf16.mxu0 0
        %1996 = vmatpush2.bf16.msra.mxu0 0
        %1997 = vmatprep.subr.bf16.mxu0 0
        %1998 = vmatpush2.bf16.msra.mxu0 0
        %1999 = vmatprep.subr.bf16.mxu0 0
        %2000 = vmatpush2.bf16.msra.mxu0 0
        %2001 = vmatprep.subr.bf16.mxu0 0
        %2002 = vmatpush2.bf16.msra.mxu0 0
        %2003 = vmatprep.subr.bf16.mxu0 0
        %2004 = vmatpush2.bf16.msra.mxu0 0
        %2005 = vmatprep.subr.bf16.mxu0 0
        %2006 = vmatpush2.bf16.msra.mxu0 0
        %2007 = vmatprep.subr.bf16.mxu0 0
        %2008 = vmatpush2.bf16.msra.mxu0 0
        %2009 = vmatprep.subr.bf16.mxu0 0
        %2010 = vmatpush2.bf16.msra.mxu0 0
        %2011 = vmatprep.mubr.bf16.mxu0 0
        %2012 = vmatmul.mubr.bf16.gmra.mxu0 %v1977
        %v2013 = vpop.f32.mrf.mxu0
        %v2014 = vadd.f32 0.0, %v2013
        %v2015 = vpop.f32.mrf.mxu0
        %v2016 = vpop.f32.mrf.mxu0
        %v2017 = vadd.f32 0.0, %v2016
        %v2018 = vpop.f32.mrf.mxu0
        %2019 = vdwg.mxu0
        %v2020 = vadd.f32 %v1967, %v2014
        %v2021 = vadd.f32 %v1970, %v2017
        %v2022 = vmul.f32 %v1312, %v1335
        %v2023 = vmul.f32 %v1315, %v1335
        %v2024 = vpack.c.bf16 %v2023, %v2022
        %v2026 = vsel %vm1419, %v1878, 0
        %2028 = vmatprep.subr.bf16.mxu0 0
        %2029 = vmatpush1.bf16.msra.mxu0 0
        %2030 = vmatprep.subr.bf16.mxu0 0
        %2031 = vmatpush1.bf16.msra.mxu0 0
        %2032 = vmatprep.subr.bf16.mxu0 0
        %2033 = vmatpush1.bf16.msra.mxu0 0
        %2034 = vmatprep.subr.bf16.mxu0 0
        %2035 = vmatpush1.bf16.msra.mxu0 0
        %2036 = vmatprep.subr.bf16.mxu0 0
        %2037 = vmatpush1.bf16.msra.mxu0 0
        %2038 = vmatprep.subr.bf16.mxu0 0
        %2039 = vmatpush1.bf16.msra.mxu0 0
        %2040 = vmatprep.subr.bf16.mxu0 0
        %2041 = vmatpush1.bf16.msra.mxu0 0
        %2042 = vmatprep.subr.bf16.mxu0 0
        %2043 = vmatpush1.bf16.msra.mxu0 %v2024
        %2044 = vmatprep.subr.bf16.mxu0 0
        %2045 = vmatpush2.bf16.msra.mxu0 0
        %2046 = vmatprep.subr.bf16.mxu0 0
        %2047 = vmatpush2.bf16.msra.mxu0 0
        %2048 = vmatprep.subr.bf16.mxu0 0
        %2049 = vmatpush2.bf16.msra.mxu0 0
        %2050 = vmatprep.subr.bf16.mxu0 0
        %2051 = vmatpush2.bf16.msra.mxu0 0
        %2052 = vmatprep.subr.bf16.mxu0 0
        %2053 = vmatpush2.bf16.msra.mxu0 0
        %2054 = vmatprep.subr.bf16.mxu0 0
        %2055 = vmatpush2.bf16.msra.mxu0 0
        %2056 = vmatprep.subr.bf16.mxu0 0
        %2057 = vmatpush2.bf16.msra.mxu0 0
        %2058 = vmatprep.subr.bf16.mxu0 0
        %2059 = vmatpush2.bf16.msra.mxu0 0
        %2060 = vmatprep.mubr.bf16.mxu0 0
        %2061 = vmatmul.mubr.bf16.gmra.mxu0 %v2026
        %v2062 = vpop.f32.mrf.mxu0
        %v2063 = vadd.f32 0.0, %v2062
        %v2064 = vpop.f32.mrf.mxu0
        %v2065 = vpop.f32.mrf.mxu0
        %v2066 = vadd.f32 0.0, %v2065
        %v2067 = vpop.f32.mrf.mxu0
        %2068 = vdwg.mxu0
        %v2069 = vadd.f32 %v2020, %v2063
        %v2070 = vadd.f32 %v2021, %v2066
        %v2071 = vpack.c.bf16 %v1703, %v1702
        %v2072 = vpack.c.bf16 %v2070, %v2069
        %v2073 = vld [vmem:[%s912] sm:$0xf]
        %v2074 = vld [vmem:[%s912 + $0x4] sm:$0xf]
        %v2075 = vld [vmem:[%s912 + $0x8] sm:$0xf]
        %v2076 = vld [vmem:[%s912 + $0xc] sm:$0xf]
        %v2077 = vld [vmem:[%s912 + $0x10] sm:$0xf]
        %v2078 = vld [vmem:[%s912 + $0x14] sm:$0xf]
        %v2079 = vld [vmem:[%s912 + $0x18] sm:$0xf]
        %v2080 = vld [vmem:[%s912 + $0x1c] sm:$0xf]
        %v2081 = vld [vmem:[%s912 + $0x20] sm:$0xf]
        %v2082 = vld [vmem:[%s912 + $0x24] sm:$0xf]
        %v2083 = vld [vmem:[%s912 + $0x28] sm:$0xf]
        %v2084 = vld [vmem:[%s912 + $0x2c] sm:$0xf]
        %v2085 = vld [vmem:[%s912 + $0x30] sm:$0xf]
        %v2086 = vld [vmem:[%s912 + $0x34] sm:$0xf]
        %v2087 = vld [vmem:[%s912 + $0x38] sm:$0xf]
        %v2088 = vld [vmem:[%s912 + $0x3c] sm:$0xf]
        %v2089 = vld [vmem:[%s915] sm:$0x1]
        %v2091 = vlaneseq
        %v2092 = vshrl.u32 %v2091, 7
        %v2093 = vsub.s32 0, %v2092
        %v2094 = vrot.slane %v2089, %v2093
        %v2112 = vunpack.c.l.b16 %v2073
        %v2113 = vunpack.c.l.b16 %v2074
        %v2114 = vunpack.c.l.b16 %v2075
        %v2115 = vunpack.c.l.b16 %v2076
        %v2116 = vunpack.c.l.b16 %v2077
        %v2117 = vunpack.c.l.b16 %v2078
        %v2118 = vunpack.c.l.b16 %v2079
        %v2119 = vunpack.c.l.b16 %v2080
        %v2120 = vunpack.c.l.b16 %v2081
        %v2121 = vunpack.c.l.b16 %v2082
        %v2122 = vunpack.c.l.b16 %v2083
        %v2123 = vunpack.c.l.b16 %v2084
        %v2124 = vunpack.c.l.b16 %v2085
        %v2125 = vunpack.c.l.b16 %v2086
        %v2126 = vunpack.c.l.b16 %v2087
        %v2127 = vunpack.c.l.b16 %v2088
        %v2128 = vpack.c.b16 %v2113, %v2112
        %v2129 = vpack.c.b16 %v2115, %v2114
        %v2130 = vpack.c.b16 %v2117, %v2116
        %v2131 = vpack.c.b16 %v2119, %v2118
        %v2132 = vpack.c.b16 %v2121, %v2120
        %v2133 = vpack.c.b16 %v2123, %v2122
        %v2134 = vpack.c.b16 %v2125, %v2124
        %v2135 = vpack.c.b16 %v2127, %v2126
        %2144 = vmatprep.subr.bf16.mxu0 0
        %2145 = vmatpush1.bf16.msra.mxu0 %v2135
        %2146 = vmatprep.subr.bf16.mxu0 0
        %2147 = vmatpush1.bf16.msra.mxu0 %v2134
        %2148 = vmatprep.subr.bf16.mxu0 0
        %2149 = vmatpush1.bf16.msra.mxu0 %v2133
        %2150 = vmatprep.subr.bf16.mxu0 0
        %2151 = vmatpush1.bf16.msra.mxu0 %v2132
        %2152 = vmatprep.subr.bf16.mxu0 0
        %2153 = vmatpush1.bf16.msra.mxu0 %v2131
        %2154 = vmatprep.subr.bf16.mxu0 0
        %2155 = vmatpush1.bf16.msra.mxu0 %v2130
        %2156 = vmatprep.subr.bf16.mxu0 0
        %2157 = vmatpush1.bf16.msra.mxu0 %v2129
        %2158 = vmatprep.subr.bf16.mxu0 0
        %2159 = vmatpush1.bf16.msra.mxu0 %v2128
        %2160 = vmatprep.subr.bf16.mxu0 0
        %2161 = vmatpush2.bf16.msra.mxu0 0
        %2162 = vmatprep.subr.bf16.mxu0 0
        %2163 = vmatpush2.bf16.msra.mxu0 0
        %2164 = vmatprep.subr.bf16.mxu0 0
        %2165 = vmatpush2.bf16.msra.mxu0 0
        %2166 = vmatprep.subr.bf16.mxu0 0
        %2167 = vmatpush2.bf16.msra.mxu0 0
        %2168 = vmatprep.subr.bf16.mxu0 0
        %2169 = vmatpush2.bf16.msra.mxu0 0
        %2170 = vmatprep.subr.bf16.mxu0 0
        %2171 = vmatpush2.bf16.msra.mxu0 0
        %2172 = vmatprep.subr.bf16.mxu0 0
        %2173 = vmatpush2.bf16.msra.mxu0 0
        %2174 = vmatprep.subr.bf16.mxu0 0
        %2175 = vmatpush2.bf16.msra.mxu0 0
        %2176 = vmatprep.mubr.bf16.mxu0 0
        %2177 = vmatmul.mubr.bf16.gmra.mxu0 %v2071
        %v2178 = vpop.f32.mrf.mxu0
        %v2179 = vadd.f32 %v2094, %v2178
        %v2180 = vpop.f32.mrf.mxu0
        %v2181 = vpop.f32.mrf.mxu0
        %v2182 = vadd.f32 %v2094, %v2181
        %v2183 = vpop.f32.mrf.mxu0
        %2184 = vmatprep.mubr.bf16.mxu0 0
        %2185 = vmatmul.mubr.bf16.gmra.mxu0 %v2072
        %v2186 = vpop.f32.mrf.mxu0
        %v2187 = vadd.f32 %v2094, %v2186
        %v2188 = vpop.f32.mrf.mxu0
        %v2189 = vpop.f32.mrf.mxu0
        %v2190 = vadd.f32 %v2094, %v2189
        %v2191 = vpop.f32.mrf.mxu0
        %2192 = vdwg.mxu0
        %v2193 = vunpack.c.l.bf16 %v1023
        %v2194 = vunpack.c.l.bf16 %v1024
        %v2195 = vunpack.c.l.bf16 %v1025
        %v2196 = vunpack.c.l.bf16 %v1026
        %v2197 = vadd.f32 %v2179, %v2193
        %v2198 = vadd.f32 %v2182, %v2194
        %v2199 = vadd.f32 %v2187, %v2195
        %v2200 = vadd.f32 %v2190, %v2196
        %v2201 = vld [vmem:[%s918] sm:$0x1]
        %v2202 = vld [vmem:[%s760] sm:$0x1]
        %2203 = vadd.xlane.f32.xlu0 %v2197
        %v2204 = vpop.xlane.xlu0 %2203
        %2205 = vadd.xlane.f32.xlu0 %v2198
        %v2206 = vpop.xlane.xlu0 %2205
        %2207 = vadd.xlane.f32.xlu0 %v2199
        %v2208 = vpop.xlane.xlu0 %2207
        %2209 = vadd.xlane.f32.xlu0 %v2200
        %v2210 = vpop.xlane.xlu0 %2209
        %v2211 = vrcp.pop 128.0
        %v2212 = vmul.f32 %v2204, %v2211
        %v2213 = vmul.f32 %v2206, %v2211
        %v2214 = vmul.f32 %v2208, %v2211
        %v2215 = vmul.f32 %v2210, %v2211
        %v2216 = vsub.f32 %v2197, %v2212
        %v2217 = vsub.f32 %v2198, %v2213
        %v2218 = vsub.f32 %v2199, %v2214
        %v2219 = vsub.f32 %v2200, %v2215
        %v2220 = vmul.f32 %v2216, %v2216
        %v2221 = vmul.f32 %v2217, %v2217
        %v2222 = vmul.f32 %v2218, %v2218
        %v2223 = vmul.f32 %v2219, %v2219
        %2224 = vadd.xlane.f32.xlu0 %v2220
        %v2225 = vpop.xlane.xlu0 %2224
        %2226 = vadd.xlane.f32.xlu0 %v2221
        %v2227 = vpop.xlane.xlu0 %2226
        %2228 = vadd.xlane.f32.xlu0 %v2222
        %v2229 = vpop.xlane.xlu0 %2228
        %2230 = vadd.xlane.f32.xlu0 %v2223
        %v2231 = vpop.xlane.xlu0 %2230
        %v2232 = vmul.f32 %v2225, %v2211
        %v2233 = vmul.f32 %v2227, %v2211
        %v2234 = vmul.f32 %v2229, %v2211
        %v2235 = vmul.f32 %v2231, %v2211
        %v2236 = vadd.f32 %v2232, 1e-05
        %v2237 = vadd.f32 %v2233, 1e-05
        %v2238 = vadd.f32 %v2234, 1e-05
        %v2239 = vadd.f32 %v2235, 1e-05
        %v2240 = vrsqrt.pop %v2236
        %v2241 = vrsqrt.pop %v2237
        %v2242 = vrsqrt.pop %v2238
        %v2243 = vrsqrt.pop %v2239
        %v2244 = vmul.f32 %v2216, %v2240
        %v2245 = vmul.f32 %v2217, %v2241
        %v2246 = vmul.f32 %v2218, %v2242
        %v2247 = vmul.f32 %v2219, %v2243
        %v2249 = vlaneseq
        %v2250 = vshrl.u32 %v2249, 7
        %v2251 = vsub.s32 0, %v2250
        %v2252 = vrot.slane %v2201, %v2251
        %v2254 = vmul.f32 %v2244, %v2252
        %v2255 = vmul.f32 %v2245, %v2252
        %v2256 = vmul.f32 %v2246, %v2252
        %v2257 = vmul.f32 %v2247, %v2252
        %v2259 = vlaneseq
        %v2260 = vshrl.u32 %v2259, 7
        %v2261 = vsub.s32 0, %v2260
        %v2262 = vrot.slane %v2202, %v2261
        %v2264 = vadd.f32 %v2254, %v2262
        %v2265 = vadd.f32 %v2255, %v2262
        %v2266 = vadd.f32 %v2256, %v2262
        %v2267 = vadd.f32 %v2257, %v2262
        %v2268 = vpack.c.bf16 %v2265, %v2264
        %v2269 = vpack.c.bf16 %v2267, %v2266
        %v2270 = vld [vmem:[%s923] sm:$0xff]
        %v2271 = vld [vmem:[%s923 + $0x8] sm:$0xff]
        %v2272 = vld [vmem:[%s923 + $0x10] sm:$0xff]
        %v2273 = vld [vmem:[%s923 + $0x18] sm:$0xff]
        %v2274 = vld [vmem:[%s923 + $0x20] sm:$0xff]
        %v2275 = vld [vmem:[%s923 + $0x28] sm:$0xff]
        %v2276 = vld [vmem:[%s923 + $0x30] sm:$0xff]
        %v2277 = vld [vmem:[%s923 + $0x38] sm:$0xff]
        %v2278 = vld [vmem:[%s923 + $0x40] sm:$0xff]
        %v2279 = vld [vmem:[%s923 + $0x48] sm:$0xff]
        %v2280 = vld [vmem:[%s923 + $0x50] sm:$0xff]
        %v2281 = vld [vmem:[%s923 + $0x58] sm:$0xff]
        %v2282 = vld [vmem:[%s923 + $0x60] sm:$0xff]
        %v2283 = vld [vmem:[%s923 + $0x68] sm:$0xff]
        %v2284 = vld [vmem:[%s923 + $0x70] sm:$0xff]
        %v2285 = vld [vmem:[%s923 + $0x78] sm:$0xff]
        %v2286 = vld [vmem:[%s769] sm:$0x3]
        %v2288 = vlaneseq
        %v2289 = vshrl.u32 %v2288, 7
        %v2290 = vsub.s32 0, %v2289
        %v2291 = vrot.slane %v2286, %v2290
        %v2292 = vlaneseq
        %v2293 = vshrl.u32 %v2292, 7
        %v2294 = vsub.s32 1, %v2293
        %v2295 = vrot.slane %v2286, %v2294
        %v2314 = vunpack.c.l.b16 %v2270
        %v2315 = vunpack.c.h.b16 %v2270
        %v2316 = vunpack.c.l.b16 %v2271
        %v2317 = vunpack.c.h.b16 %v2271
        %v2318 = vunpack.c.l.b16 %v2272
        %v2319 = vunpack.c.h.b16 %v2272
        %v2320 = vunpack.c.l.b16 %v2273
        %v2321 = vunpack.c.h.b16 %v2273
        %v2322 = vunpack.c.l.b16 %v2274
        %v2323 = vunpack.c.h.b16 %v2274
        %v2324 = vunpack.c.l.b16 %v2275
        %v2325 = vunpack.c.h.b16 %v2275
        %v2326 = vunpack.c.l.b16 %v2276
        %v2327 = vunpack.c.h.b16 %v2276
        %v2328 = vunpack.c.l.b16 %v2277
        %v2329 = vunpack.c.h.b16 %v2277
        %v2330 = vunpack.c.l.b16 %v2278
        %v2331 = vunpack.c.h.b16 %v2278
        %v2332 = vunpack.c.l.b16 %v2279
        %v2333 = vunpack.c.h.b16 %v2279
        %v2334 = vunpack.c.l.b16 %v2280
        %v2335 = vunpack.c.h.b16 %v2280
        %v2336 = vunpack.c.l.b16 %v2281
        %v2337 = vunpack.c.h.b16 %v2281
        %v2338 = vunpack.c.l.b16 %v2282
        %v2339 = vunpack.c.h.b16 %v2282
        %v2340 = vunpack.c.l.b16 %v2283
        %v2341 = vunpack.c.h.b16 %v2283
        %v2342 = vunpack.c.l.b16 %v2284
        %v2343 = vunpack.c.h.b16 %v2284
        %v2344 = vunpack.c.l.b16 %v2285
        %v2345 = vunpack.c.h.b16 %v2285
        %v2346 = vpack.c.b16 %v2316, %v2314
        %v2347 = vpack.c.b16 %v2317, %v2315
        %v2348 = vpack.c.b16 %v2320, %v2318
        %v2349 = vpack.c.b16 %v2321, %v2319
        %v2350 = vpack.c.b16 %v2324, %v2322
        %v2351 = vpack.c.b16 %v2325, %v2323
        %v2352 = vpack.c.b16 %v2328, %v2326
        %v2353 = vpack.c.b16 %v2329, %v2327
        %v2354 = vpack.c.b16 %v2332, %v2330
        %v2355 = vpack.c.b16 %v2333, %v2331
        %v2356 = vpack.c.b16 %v2336, %v2334
        %v2357 = vpack.c.b16 %v2337, %v2335
        %v2358 = vpack.c.b16 %v2340, %v2338
        %v2359 = vpack.c.b16 %v2341, %v2339
        %v2360 = vpack.c.b16 %v2344, %v2342
        %v2361 = vpack.c.b16 %v2345, %v2343
        %2378 = vmatprep.subr.bf16.mxu0 %v2361
        %2379 = vmatpush1.bf16.msra.mxu0 %v2360
        %2380 = vmatprep.subr.bf16.mxu0 %v2359
        %2381 = vmatpush1.bf16.msra.mxu0 %v2358
        %2382 = vmatprep.subr.bf16.mxu0 %v2357
        %2383 = vmatpush1.bf16.msra.mxu0 %v2356
        %2384 = vmatprep.subr.bf16.mxu0 %v2355
        %2385 = vmatpush1.bf16.msra.mxu0 %v2354
        %2386 = vmatprep.subr.bf16.mxu0 %v2353
        %2387 = vmatpush1.bf16.msra.mxu0 %v2352
        %2388 = vmatprep.subr.bf16.mxu0 %v2351
        %2389 = vmatpush1.bf16.msra.mxu0 %v2350
        %2390 = vmatprep.subr.bf16.mxu0 %v2349
        %2391 = vmatpush1.bf16.msra.mxu0 %v2348
        %2392 = vmatprep.subr.bf16.mxu0 %v2347
        %2393 = vmatpush1.bf16.msra.mxu0 %v2346
        %2394 = vmatprep.subr.bf16.mxu0 0
        %2395 = vmatpush2.bf16.msra.mxu0 0
        %2396 = vmatprep.subr.bf16.mxu0 0
        %2397 = vmatpush2.bf16.msra.mxu0 0
        %2398 = vmatprep.subr.bf16.mxu0 0
        %2399 = vmatpush2.bf16.msra.mxu0 0
        %2400 = vmatprep.subr.bf16.mxu0 0
        %2401 = vmatpush2.bf16.msra.mxu0 0
        %2402 = vmatprep.subr.bf16.mxu0 0
        %2403 = vmatpush2.bf16.msra.mxu0 0
        %2404 = vmatprep.subr.bf16.mxu0 0
        %2405 = vmatpush2.bf16.msra.mxu0 0
        %2406 = vmatprep.subr.bf16.mxu0 0
        %2407 = vmatpush2.bf16.msra.mxu0 0
        %2408 = vmatprep.subr.bf16.mxu0 0
        %2409 = vmatpush2.bf16.msra.mxu0 0
        %2410 = vmatprep.mubr.bf16.mxu0 0
        %2411 = vmatmul.mubr.bf16.gmra.mxu0 %v2268
        %v2412 = vpop.f32.mrf.mxu0
        %v2413 = vadd.f32 %v2291, %v2412
        %v2414 = vpop.f32.mrf.mxu0
        %v2415 = vadd.f32 %v2295, %v2414
        %v2416 = vpop.f32.mrf.mxu0
        %v2417 = vadd.f32 %v2291, %v2416
        %v2418 = vpop.f32.mrf.mxu0
        %v2419 = vadd.f32 %v2295, %v2418
        %2420 = vmatprep.mubr.bf16.mxu0 0
        %2421 = vmatmul.mubr.bf16.gmra.mxu0 %v2269
        %v2422 = vpop.f32.mrf.mxu0
        %v2423 = vadd.f32 %v2291, %v2422
        %v2424 = vpop.f32.mrf.mxu0
        %v2425 = vadd.f32 %v2295, %v2424
        %v2426 = vpop.f32.mrf.mxu0
        %v2427 = vadd.f32 %v2291, %v2426
        %v2428 = vpop.f32.mrf.mxu0
        %v2429 = vadd.f32 %v2295, %v2428
        %2430 = vdwg.mxu0
        %v2431 = vmul.f32 %v2413, 0.5
        %v2432 = vmul.f32 %v2415, 0.5
        %v2433 = vmul.f32 %v2417, 0.5
        %v2434 = vmul.f32 %v2419, 0.5
        %v2435 = vmul.f32 %v2423, 0.5
        %v2436 = vmul.f32 %v2425, 0.5
        %v2437 = vmul.f32 %v2427, 0.5
        %v2438 = vmul.f32 %v2429, 0.5
        %v2439 = vmul.f32 %v2413, 0.044715
        %v2440 = vmul.f32 %v2415, 0.044715
        %v2441 = vmul.f32 %v2417, 0.044715
        %v2442 = vmul.f32 %v2419, 0.044715
        %v2443 = vmul.f32 %v2423, 0.044715
        %v2444 = vmul.f32 %v2425, 0.044715
        %v2445 = vmul.f32 %v2427, 0.044715
        %v2446 = vmul.f32 %v2429, 0.044715
        %v2447 = vmul.f32 %v2439, %v2413
        %v2448 = vmul.f32 %v2440, %v2415
        %v2449 = vmul.f32 %v2441, %v2417
        %v2450 = vmul.f32 %v2442, %v2419
        %v2451 = vmul.f32 %v2443, %v2423
        %v2452 = vmul.f32 %v2444, %v2425
        %v2453 = vmul.f32 %v2445, %v2427
        %v2454 = vmul.f32 %v2446, %v2429
        %v2455 = vmul.f32 %v2447, %v2413
        %v2456 = vmul.f32 %v2448, %v2415
        %v2457 = vmul.f32 %v2449, %v2417
        %v2458 = vmul.f32 %v2450, %v2419
        %v2459 = vmul.f32 %v2451, %v2423
        %v2460 = vmul.f32 %v2452, %v2425
        %v2461 = vmul.f32 %v2453, %v2427
        %v2462 = vmul.f32 %v2454, %v2429
        %v2463 = vadd.f32 %v2413, %v2455
        %v2464 = vadd.f32 %v2415, %v2456
        %v2465 = vadd.f32 %v2417, %v2457
        %v2466 = vadd.f32 %v2419, %v2458
        %v2467 = vadd.f32 %v2423, %v2459
        %v2468 = vadd.f32 %v2425, %v2460
        %v2469 = vadd.f32 %v2427, %v2461
        %v2470 = vadd.f32 %v2429, %v2462
        %v2471 = vmul.f32 %v2463, 0.7978846
        %v2472 = vmul.f32 %v2464, 0.7978846
        %v2473 = vmul.f32 %v2465, 0.7978846
        %v2474 = vmul.f32 %v2466, 0.7978846
        %v2475 = vmul.f32 %v2467, 0.7978846
        %v2476 = vmul.f32 %v2468, 0.7978846
        %v2477 = vmul.f32 %v2469, 0.7978846
        %v2478 = vmul.f32 %v2470, 0.7978846
        %v2479 = vtanh.pop %v2471
        %v2480 = vtanh.pop %v2472
        %v2481 = vtanh.pop %v2473
        %v2482 = vtanh.pop %v2474
        %v2483 = vtanh.pop %v2475
        %v2484 = vtanh.pop %v2476
        %v2485 = vtanh.pop %v2477
        %v2486 = vtanh.pop %v2478
        %v2487 = vadd.f32 %v2479, 1.0
        %v2488 = vadd.f32 %v2480, 1.0
        %v2489 = vadd.f32 %v2481, 1.0
        %v2490 = vadd.f32 %v2482, 1.0
        %v2491 = vadd.f32 %v2483, 1.0
        %v2492 = vadd.f32 %v2484, 1.0
        %v2493 = vadd.f32 %v2485, 1.0
        %v2494 = vadd.f32 %v2486, 1.0
        %v2495 = vmul.f32 %v2431, %v2487
        %v2496 = vmul.f32 %v2432, %v2488
        %v2497 = vmul.f32 %v2433, %v2489
        %v2498 = vmul.f32 %v2434, %v2490
        %v2499 = vmul.f32 %v2435, %v2491
        %v2500 = vmul.f32 %v2436, %v2492
        %v2501 = vmul.f32 %v2437, %v2493
        %v2502 = vmul.f32 %v2438, %v2494
        %v2503 = vpack.c.bf16 %v2497, %v2495
        %v2504 = vpack.c.bf16 %v2498, %v2496
        %v2505 = vpack.c.bf16 %v2501, %v2499
        %v2506 = vpack.c.bf16 %v2502, %v2500
        %v2507 = vld [vmem:[%s778] sm:$0xf]
        %v2508 = vld [vmem:[%s778 + $0x4] sm:$0xf]
        %v2509 = vld [vmem:[%s778 + $0x8] sm:$0xf]
        %v2510 = vld [vmem:[%s778 + $0xc] sm:$0xf]
        %v2511 = vld [vmem:[%s778 + $0x10] sm:$0xf]
        %v2512 = vld [vmem:[%s778 + $0x14] sm:$0xf]
        %v2513 = vld [vmem:[%s778 + $0x18] sm:$0xf]
        %v2514 = vld [vmem:[%s778 + $0x1c] sm:$0xf]
        %v2515 = vld [vmem:[%s778 + $0x20] sm:$0xf]
        %v2516 = vld [vmem:[%s778 + $0x24] sm:$0xf]
        %v2517 = vld [vmem:[%s778 + $0x28] sm:$0xf]
        %v2518 = vld [vmem:[%s778 + $0x2c] sm:$0xf]
        %v2519 = vld [vmem:[%s778 + $0x30] sm:$0xf]
        %v2520 = vld [vmem:[%s778 + $0x34] sm:$0xf]
        %v2521 = vld [vmem:[%s778 + $0x38] sm:$0xf]
        %v2522 = vld [vmem:[%s778 + $0x3c] sm:$0xf]
        %v2523 = vld [vmem:[%s778 + $0x40] sm:$0xf]
        %v2524 = vld [vmem:[%s778 + $0x44] sm:$0xf]
        %v2525 = vld [vmem:[%s778 + $0x48] sm:$0xf]
        %v2526 = vld [vmem:[%s778 + $0x4c] sm:$0xf]
        %v2527 = vld [vmem:[%s778 + $0x50] sm:$0xf]
        %v2528 = vld [vmem:[%s778 + $0x54] sm:$0xf]
        %v2529 = vld [vmem:[%s778 + $0x58] sm:$0xf]
        %v2530 = vld [vmem:[%s778 + $0x5c] sm:$0xf]
        %v2531 = vld [vmem:[%s778 + $0x60] sm:$0xf]
        %v2532 = vld [vmem:[%s778 + $0x64] sm:$0xf]
        %v2533 = vld [vmem:[%s778 + $0x68] sm:$0xf]
        %v2534 = vld [vmem:[%s778 + $0x6c] sm:$0xf]
        %v2535 = vld [vmem:[%s778 + $0x70] sm:$0xf]
        %v2536 = vld [vmem:[%s778 + $0x74] sm:$0xf]
        %v2537 = vld [vmem:[%s778 + $0x78] sm:$0xf]
        %v2538 = vld [vmem:[%s778 + $0x7c] sm:$0xf]
        %v2539 = vld [vmem:[%s786] sm:$0x1]
        %v2541 = vlaneseq
        %v2542 = vshrl.u32 %v2541, 7
        %v2543 = vsub.s32 0, %v2542
        %v2544 = vrot.slane %v2539, %v2543
        %v2578 = vunpack.c.l.b16 %v2507
        %v2579 = vunpack.c.l.b16 %v2508
        %v2580 = vunpack.c.l.b16 %v2509
        %v2581 = vunpack.c.l.b16 %v2510
        %v2582 = vunpack.c.l.b16 %v2511
        %v2583 = vunpack.c.l.b16 %v2512
        %v2584 = vunpack.c.l.b16 %v2513
        %v2585 = vunpack.c.l.b16 %v2514
        %v2586 = vunpack.c.l.b16 %v2515
        %v2587 = vunpack.c.l.b16 %v2516
        %v2588 = vunpack.c.l.b16 %v2517
        %v2589 = vunpack.c.l.b16 %v2518
        %v2590 = vunpack.c.l.b16 %v2519
        %v2591 = vunpack.c.l.b16 %v2520
        %v2592 = vunpack.c.l.b16 %v2521
        %v2593 = vunpack.c.l.b16 %v2522
        %v2594 = vunpack.c.l.b16 %v2523
        %v2595 = vunpack.c.l.b16 %v2524
        %v2596 = vunpack.c.l.b16 %v2525
        %v2597 = vunpack.c.l.b16 %v2526
        %v2598 = vunpack.c.l.b16 %v2527
        %v2599 = vunpack.c.l.b16 %v2528
        %v2600 = vunpack.c.l.b16 %v2529
        %v2601 = vunpack.c.l.b16 %v2530
        %v2602 = vunpack.c.l.b16 %v2531
        %v2603 = vunpack.c.l.b16 %v2532
        %v2604 = vunpack.c.l.b16 %v2533
        %v2605 = vunpack.c.l.b16 %v2534
        %v2606 = vunpack.c.l.b16 %v2535
        %v2607 = vunpack.c.l.b16 %v2536
        %v2608 = vunpack.c.l.b16 %v2537
        %v2609 = vunpack.c.l.b16 %v2538
        %v2610 = vpack.c.b16 %v2579, %v2578
        %v2611 = vpack.c.b16 %v2581, %v2580
        %v2612 = vpack.c.b16 %v2583, %v2582
        %v2613 = vpack.c.b16 %v2585, %v2584
        %v2614 = vpack.c.b16 %v2587, %v2586
        %v2615 = vpack.c.b16 %v2589, %v2588
        %v2616 = vpack.c.b16 %v2591, %v2590
        %v2617 = vpack.c.b16 %v2593, %v2592
        %v2618 = vpack.c.b16 %v2595, %v2594
        %v2619 = vpack.c.b16 %v2597, %v2596
        %v2620 = vpack.c.b16 %v2599, %v2598
        %v2621 = vpack.c.b16 %v2601, %v2600
        %v2622 = vpack.c.b16 %v2603, %v2602
        %v2623 = vpack.c.b16 %v2605, %v2604
        %v2624 = vpack.c.b16 %v2607, %v2606
        %v2625 = vpack.c.b16 %v2609, %v2608
        %2642 = vmatprep.subr.bf16.mxu0 0
        %2643 = vmatpush1.bf16.msra.mxu0 %v2617
        %2644 = vmatprep.subr.bf16.mxu0 0
        %2645 = vmatpush1.bf16.msra.mxu0 %v2616
        %2646 = vmatprep.subr.bf16.mxu0 0
        %2647 = vmatpush1.bf16.msra.mxu0 %v2615
        %2648 = vmatprep.subr.bf16.mxu0 0
        %2649 = vmatpush1.bf16.msra.mxu0 %v2614
        %2650 = vmatprep.subr.bf16.mxu0 0
        %2651 = vmatpush1.bf16.msra.mxu0 %v2613
        %2652 = vmatprep.subr.bf16.mxu0 0
        %2653 = vmatpush1.bf16.msra.mxu0 %v2612
        %2654 = vmatprep.subr.bf16.mxu0 0
        %2655 = vmatpush1.bf16.msra.mxu0 %v2611
        %2656 = vmatprep.subr.bf16.mxu0 0
        %2657 = vmatpush1.bf16.msra.mxu0 %v2610
        %2658 = vmatprep.subr.bf16.mxu0 0
        %2659 = vmatpush2.bf16.msra.mxu0 %v2625
        %2660 = vmatprep.subr.bf16.mxu0 0
        %2661 = vmatpush2.bf16.msra.mxu0 %v2624
        %2662 = vmatprep.subr.bf16.mxu0 0
        %2663 = vmatpush2.bf16.msra.mxu0 %v2623
        %2664 = vmatprep.subr.bf16.mxu0 0
        %2665 = vmatpush2.bf16.msra.mxu0 %v2622
        %2666 = vmatprep.subr.bf16.mxu0 0
        %2667 = vmatpush2.bf16.msra.mxu0 %v2621
        %2668 = vmatprep.subr.bf16.mxu0 0
        %2669 = vmatpush2.bf16.msra.mxu0 %v2620
        %2670 = vmatprep.subr.bf16.mxu0 0
        %2671 = vmatpush2.bf16.msra.mxu0 %v2619
        %2672 = vmatprep.subr.bf16.mxu0 0
        %2673 = vmatpush2.bf16.msra.mxu0 %v2618
        %2674 = vmatprep.mubr.bf16.mxu0 %v2504
        %2675 = vmatmul.mubr.bf16.gmra.mxu0 %v2503
        %v2676 = vpop.f32.mrf.mxu0
        %v2677 = vadd.f32 %v2544, %v2676
        %v2678 = vpop.f32.mrf.mxu0
        %v2679 = vpop.f32.mrf.mxu0
        %v2680 = vadd.f32 %v2544, %v2679
        %v2681 = vpop.f32.mrf.mxu0
        %2682 = vmatprep.mubr.bf16.mxu0 %v2506
        %2683 = vmatmul.mubr.bf16.gmra.mxu0 %v2505
        %v2684 = vpop.f32.mrf.mxu0
        %v2685 = vadd.f32 %v2544, %v2684
        %v2686 = vpop.f32.mrf.mxu0
        %v2687 = vpop.f32.mrf.mxu0
        %v2688 = vadd.f32 %v2544, %v2687
        %v2689 = vpop.f32.mrf.mxu0
        %2690 = vdwg.mxu0
        %v2691 = vadd.f32 %v2677, %v2264
        %v2692 = vadd.f32 %v2680, %v2265
        %v2693 = vadd.f32 %v2685, %v2266
        %v2694 = vadd.f32 %v2688, %v2267
        %v2695 = vld [vmem:[%s926] sm:$0x1]
        %v2696 = vld [vmem:[%s794] sm:$0x1]
        %2697 = vadd.xlane.f32.xlu0 %v2691
        %v2698 = vpop.xlane.xlu0 %2697
        %2699 = vadd.xlane.f32.xlu0 %v2692
        %v2700 = vpop.xlane.xlu0 %2699
        %2701 = vadd.xlane.f32.xlu0 %v2693
        %v2702 = vpop.xlane.xlu0 %2701
        %2703 = vadd.xlane.f32.xlu0 %v2694
        %v2704 = vpop.xlane.xlu0 %2703
        %v2705 = vmul.f32 %v2698, %v2211
        %v2706 = vmul.f32 %v2700, %v2211
        %v2707 = vmul.f32 %v2702, %v2211
        %v2708 = vmul.f32 %v2704, %v2211
        %v2709 = vsub.f32 %v2691, %v2705
        %v2710 = vsub.f32 %v2692, %v2706
        %v2711 = vsub.f32 %v2693, %v2707
        %v2712 = vsub.f32 %v2694, %v2708
        %v2713 = vmul.f32 %v2709, %v2709
        %v2714 = vmul.f32 %v2710, %v2710
        %v2715 = vmul.f32 %v2711, %v2711
        %v2716 = vmul.f32 %v2712, %v2712
        %2717 = vadd.xlane.f32.xlu0 %v2713
        %v2718 = vpop.xlane.xlu0 %2717
        %2719 = vadd.xlane.f32.xlu0 %v2714
        %v2720 = vpop.xlane.xlu0 %2719
        %2721 = vadd.xlane.f32.xlu0 %v2715
        %v2722 = vpop.xlane.xlu0 %2721
        %2723 = vadd.xlane.f32.xlu0 %v2716
        %v2724 = vpop.xlane.xlu0 %2723
        %v2725 = vmul.f32 %v2718, %v2211
        %v2726 = vmul.f32 %v2720, %v2211
        %v2727 = vmul.f32 %v2722, %v2211
        %v2728 = vmul.f32 %v2724, %v2211
        %v2729 = vadd.f32 %v2725, 1e-05
        %v2730 = vadd.f32 %v2726, 1e-05
        %v2731 = vadd.f32 %v2727, 1e-05
        %v2732 = vadd.f32 %v2728, 1e-05
        %v2733 = vrsqrt.pop %v2729
        %v2734 = vrsqrt.pop %v2730
        %v2735 = vrsqrt.pop %v2731
        %v2736 = vrsqrt.pop %v2732
        %v2737 = vmul.f32 %v2709, %v2733
        %v2738 = vmul.f32 %v2710, %v2734
        %v2739 = vmul.f32 %v2711, %v2735
        %v2740 = vmul.f32 %v2712, %v2736
        %v2742 = vlaneseq
        %v2743 = vshrl.u32 %v2742, 7
        %v2744 = vsub.s32 0, %v2743
        %v2745 = vrot.slane %v2695, %v2744
        %v2747 = vmul.f32 %v2737, %v2745
        %v2748 = vmul.f32 %v2738, %v2745
        %v2749 = vmul.f32 %v2739, %v2745
        %v2750 = vmul.f32 %v2740, %v2745
        %v2752 = vlaneseq
        %v2753 = vshrl.u32 %v2752, 7
        %v2754 = vsub.s32 0, %v2753
        %v2755 = vrot.slane %v2696, %v2754
        %v2757 = vadd.f32 %v2747, %v2755
        %v2758 = vadd.f32 %v2748, %v2755
        %v2759 = vadd.f32 %v2749, %v2755
        %v2760 = vadd.f32 %v2750, %v2755
        %v2761 = vpack.c.bf16 %v2758, %v2757
        %v2762 = vpack.c.bf16 %v2760, %v2759
        %v2765 = vunpack.c.l.b16 %v2761
        %v2766 = vunpack.c.h.b16 %v2761
        %v2767 = vunpack.c.l.b16 %v2762
        %v2768 = vunpack.c.h.b16 %v2762
        %v2769 = vpack.c.b16 %v2765, %v2765
        %v2770 = vpack.c.b16 %v2766, %v2766
        %v2771 = vpack.c.b16 %v2767, %v2767
        %v2772 = vpack.c.b16 %v2768, %v2768
        %2777 = vst [vmem:[#allocation2] sm:$0xf] %v2769
        %2778 = vst [vmem:[#allocation2 + $0x4] sm:$0xf] %v2770
        %2779 = vst [vmem:[#allocation2 + $0x8] sm:$0xf] %v2771
        %2780 = vst [vmem:[#allocation2 + $0xc] sm:$0xf] %v2772
        %p2781 = scmp.eq.s32.totalorder %s43, 1
        // Predicated region
        $region137: #{roberta_class_forward.1} parent=99 // pred_check
          %p2782 = pneg %p2781
        $region138: #{roberta_class_forward.1} parent=99 // pred_check_branch
          %2784 = sbr.rel (%p2782) target = $region140
        $region139: #{roberta_class_forward.1} parent=99 // pred_region
          %v2786 = vrot.slane %v2759, 7
          %vm2788 = vcmask 1040384
          %v2789 = vsel %vm2788, %v2757, %v2786
          %v2790 = vpack.c.bf16 %v2789, %v2789
          %v2791 = vld [vmem:[%s16] sm:$0xf]
          %v2792 = vld [vmem:[%s16 + $0x4] sm:$0xf]
          %v2793 = vld [vmem:[%s16 + $0x8] sm:$0xf]
          %v2794 = vld [vmem:[%s16 + $0xc] sm:$0xf]
          %v2795 = vld [vmem:[%s16 + $0x10] sm:$0xf]
          %v2796 = vld [vmem:[%s16 + $0x14] sm:$0xf]
          %v2797 = vld [vmem:[%s16 + $0x18] sm:$0xf]
          %v2798 = vld [vmem:[%s16 + $0x1c] sm:$0xf]
          %v2799 = vld [vmem:[%s16 + $0x20] sm:$0xf]
          %v2800 = vld [vmem:[%s16 + $0x24] sm:$0xf]
          %v2801 = vld [vmem:[%s16 + $0x28] sm:$0xf]
          %v2802 = vld [vmem:[%s16 + $0x2c] sm:$0xf]
          %v2803 = vld [vmem:[%s16 + $0x30] sm:$0xf]
          %v2804 = vld [vmem:[%s16 + $0x34] sm:$0xf]
          %v2805 = vld [vmem:[%s16 + $0x38] sm:$0xf]
          %v2806 = vld [vmem:[%s16 + $0x3c] sm:$0xf]
          %v2807 = vld [vmem:[#allocation14] sm:$0x1]
          %v2809 = vlaneseq
          %v2810 = vshrl.u32 %v2809, 7
          %v2811 = vsub.s32 0, %v2810
          %v2812 = vrot.slane %v2807, %v2811
          %v2830 = vunpack.c.l.b16 %v2791
          %v2831 = vunpack.c.l.b16 %v2792
          %v2832 = vunpack.c.l.b16 %v2793
          %v2833 = vunpack.c.l.b16 %v2794
          %v2834 = vunpack.c.l.b16 %v2795
          %v2835 = vunpack.c.l.b16 %v2796
          %v2836 = vunpack.c.l.b16 %v2797
          %v2837 = vunpack.c.l.b16 %v2798
          %v2838 = vunpack.c.l.b16 %v2799
          %v2839 = vunpack.c.l.b16 %v2800
          %v2840 = vunpack.c.l.b16 %v2801
          %v2841 = vunpack.c.l.b16 %v2802
          %v2842 = vunpack.c.l.b16 %v2803
          %v2843 = vunpack.c.l.b16 %v2804
          %v2844 = vunpack.c.l.b16 %v2805
          %v2845 = vunpack.c.l.b16 %v2806
          %v2846 = vpack.c.b16 %v2831, %v2830
          %v2847 = vpack.c.b16 %v2833, %v2832
          %v2848 = vpack.c.b16 %v2835, %v2834
          %v2849 = vpack.c.b16 %v2837, %v2836
          %v2850 = vpack.c.b16 %v2839, %v2838
          %v2851 = vpack.c.b16 %v2841, %v2840
          %v2852 = vpack.c.b16 %v2843, %v2842
          %v2853 = vpack.c.b16 %v2845, %v2844
          %2862 = vmatprep.subr.bf16.mxu0 0
          %2863 = vmatpush1.bf16.msra.mxu0 %v2853
          %2864 = vmatprep.subr.bf16.mxu0 0
          %2865 = vmatpush1.bf16.msra.mxu0 %v2852
          %2866 = vmatprep.subr.bf16.mxu0 0
          %2867 = vmatpush1.bf16.msra.mxu0 %v2851
          %2868 = vmatprep.subr.bf16.mxu0 0
          %2869 = vmatpush1.bf16.msra.mxu0 %v2850
          %2870 = vmatprep.subr.bf16.mxu0 0
          %2871 = vmatpush1.bf16.msra.mxu0 %v2849
          %2872 = vmatprep.subr.bf16.mxu0 0
          %2873 = vmatpush1.bf16.msra.mxu0 %v2848
          %2874 = vmatprep.subr.bf16.mxu0 0
          %2875 = vmatpush1.bf16.msra.mxu0 %v2847
          %2876 = vmatprep.subr.bf16.mxu0 0
          %2877 = vmatpush1.bf16.msra.mxu0 %v2846
          %2878 = vmatprep.subr.bf16.mxu0 0
          %2879 = vmatpush2.bf16.msra.mxu0 0
          %2880 = vmatprep.subr.bf16.mxu0 0
          %2881 = vmatpush2.bf16.msra.mxu0 0
          %2882 = vmatprep.subr.bf16.mxu0 0
          %2883 = vmatpush2.bf16.msra.mxu0 0
          %2884 = vmatprep.subr.bf16.mxu0 0
          %2885 = vmatpush2.bf16.msra.mxu0 0
          %2886 = vmatprep.subr.bf16.mxu0 0
          %2887 = vmatpush2.bf16.msra.mxu0 0
          %2888 = vmatprep.subr.bf16.mxu0 0
          %2889 = vmatpush2.bf16.msra.mxu0 0
          %2890 = vmatprep.subr.bf16.mxu0 0
          %2891 = vmatpush2.bf16.msra.mxu0 0
          %2892 = vmatprep.subr.bf16.mxu0 0
          %2893 = vmatpush2.bf16.msra.mxu0 0
          %2894 = vmatprep.mubr.bf16.mxu0 0
          %2895 = vmatmul.mubr.bf16.gmra.mxu0 %v2790
          %v2896 = vpop.f32.mrf.mxu0
          %v2897 = vadd.f32 %v2812, %v2896
          %v2898 = vpop.f32.mrf.mxu0
          %v2899 = vpop.f32.mrf.mxu0
          %v2900 = vpop.f32.mrf.mxu0
          %2901 = vdwg.mxu0
          %v2902 = vtanh.pop %v2897
          %v2903 = vpack.c.bf16 %v2902, %v2902
          %v2904 = vld [vmem:[%s18] sm:$0xf]
          %v2905 = vld [vmem:[%s18 + $0x4] sm:$0xf]
          %v2906 = vld [vmem:[%s18 + $0x8] sm:$0xf]
          %v2907 = vld [vmem:[%s18 + $0xc] sm:$0xf]
          %v2908 = vld [vmem:[%s18 + $0x10] sm:$0xf]
          %v2909 = vld [vmem:[%s18 + $0x14] sm:$0xf]
          %v2910 = vld [vmem:[%s18 + $0x18] sm:$0xf]
          %v2911 = vld [vmem:[%s18 + $0x1c] sm:$0xf]
          %v2912 = vld [vmem:[%s18 + $0x20] sm:$0xf]
          %v2913 = vld [vmem:[%s18 + $0x24] sm:$0xf]
          %v2914 = vld [vmem:[%s18 + $0x28] sm:$0xf]
          %v2915 = vld [vmem:[%s18 + $0x2c] sm:$0xf]
          %v2916 = vld [vmem:[%s18 + $0x30] sm:$0xf]
          %v2917 = vld [vmem:[%s18 + $0x34] sm:$0xf]
          %v2918 = vld [vmem:[%s18 + $0x38] sm:$0xf]
          %v2919 = vld [vmem:[%s18 + $0x3c] sm:$0xf]
          %v2920 = vld [vmem:[#allocation15] sm:$0x1]
          %v2922 = vlaneseq
          %v2923 = vshrl.u32 %v2922, 7
          %v2924 = vsub.s32 0, %v2923
          %v2925 = vrot.slane %v2920, %v2924
          %v2943 = vunpack.c.l.b16 %v2904
          %v2944 = vunpack.c.l.b16 %v2905
          %v2945 = vunpack.c.l.b16 %v2906
          %v2946 = vunpack.c.l.b16 %v2907
          %v2947 = vunpack.c.l.b16 %v2908
          %v2948 = vunpack.c.l.b16 %v2909
          %v2949 = vunpack.c.l.b16 %v2910
          %v2950 = vunpack.c.l.b16 %v2911
          %v2951 = vunpack.c.l.b16 %v2912
          %v2952 = vunpack.c.l.b16 %v2913
          %v2953 = vunpack.c.l.b16 %v2914
          %v2954 = vunpack.c.l.b16 %v2915
          %v2955 = vunpack.c.l.b16 %v2916
          %v2956 = vunpack.c.l.b16 %v2917
          %v2957 = vunpack.c.l.b16 %v2918
          %v2958 = vunpack.c.l.b16 %v2919
          %v2959 = vpack.c.b16 %v2944, %v2943
          %v2960 = vpack.c.b16 %v2946, %v2945
          %v2961 = vpack.c.b16 %v2948, %v2947
          %v2962 = vpack.c.b16 %v2950, %v2949
          %v2963 = vpack.c.b16 %v2952, %v2951
          %v2964 = vpack.c.b16 %v2954, %v2953
          %v2965 = vpack.c.b16 %v2956, %v2955
          %v2966 = vpack.c.b16 %v2958, %v2957
          %2975 = vmatprep.subr.bf16.mxu0 0
          %2976 = vmatpush1.bf16.msra.mxu0 %v2966
          %2977 = vmatprep.subr.bf16.mxu0 0
          %2978 = vmatpush1.bf16.msra.mxu0 %v2965
          %2979 = vmatprep.subr.bf16.mxu0 0
          %2980 = vmatpush1.bf16.msra.mxu0 %v2964
          %2981 = vmatprep.subr.bf16.mxu0 0
          %2982 = vmatpush1.bf16.msra.mxu0 %v2963
          %2983 = vmatprep.subr.bf16.mxu0 0
          %2984 = vmatpush1.bf16.msra.mxu0 %v2962
          %2985 = vmatprep.subr.bf16.mxu0 0
          %2986 = vmatpush1.bf16.msra.mxu0 %v2961
          %2987 = vmatprep.subr.bf16.mxu0 0
          %2988 = vmatpush1.bf16.msra.mxu0 %v2960
          %2989 = vmatprep.subr.bf16.mxu0 0
          %2990 = vmatpush1.bf16.msra.mxu0 %v2959
          %2991 = vmatprep.subr.bf16.mxu0 0
          %2992 = vmatpush2.bf16.msra.mxu0 0
          %2993 = vmatprep.subr.bf16.mxu0 0
          %2994 = vmatpush2.bf16.msra.mxu0 0
          %2995 = vmatprep.subr.bf16.mxu0 0
          %2996 = vmatpush2.bf16.msra.mxu0 0
          %2997 = vmatprep.subr.bf16.mxu0 0
          %2998 = vmatpush2.bf16.msra.mxu0 0
          %2999 = vmatprep.subr.bf16.mxu0 0
          %3000 = vmatpush2.bf16.msra.mxu0 0
          %3001 = vmatprep.subr.bf16.mxu0 0
          %3002 = vmatpush2.bf16.msra.mxu0 0
          %3003 = vmatprep.subr.bf16.mxu0 0
          %3004 = vmatpush2.bf16.msra.mxu0 0
          %3005 = vmatprep.subr.bf16.mxu0 0
          %3006 = vmatpush2.bf16.msra.mxu0 0
          %3007 = vmatprep.mubr.bf16.mxu0 0
          %3008 = vmatmul.mubr.bf16.gmra.mxu0 %v2903
          %v3009 = vpop.f32.mrf.mxu0
          %v3010 = vadd.f32 %v2925, %v3009
          %v3011 = vpop.f32.mrf.mxu0
          %v3012 = vpop.f32.mrf.mxu0
          %v3013 = vpop.f32.mrf.mxu0
          %3014 = vdwg.mxu0
          %vm3015 = vcmask 25600
          %3016 = vst.msk [vmem:[#allocation17] sm:$0x3] %vm3015, %v3010
        $region140: #{roberta_class_forward.1} parent=99 // pred_fallthru
          _
        // Predicated region
        $region141: #{roberta_class_forward.1} parent=99 // pred_check
          %p3017 = pneg %p536
        $region142: #{roberta_class_forward.1} parent=99 // pred_check_branch
          %3019 = sbr.rel (%p3017) target = $region144
        $region143: #{roberta_class_forward.1} parent=99 // pred_region
          %s3021 = ssub.s32 32, 32
          %3022 = vsyncadd [#allocation5], %s3021
          %s3024 = sshll.u32 [#allocation17], 4
          %s3025 = int_to_ptr.vmem [resolvable:$true] %s3024
          %3027 = dma.vmem_to_hbm [thread:$0]  %s3025, 32, %s20, [#allocation5]
        $region144: #{roberta_class_forward.1} parent=99 // pred_fallthru
          _
        // Predicated region
        $region145: #{roberta_class_forward.1} parent=99 // pred_check
          %p3028 = pneg %p536
        $region146: #{roberta_class_forward.1} parent=99 // pred_check_branch
          %3030 = sbr.rel (%p3028) target = $region148
        $region147: #{roberta_class_forward.1} parent=99 // pred_region
          %3031 = dma.done [#allocation5], 32
        $region148: #{roberta_class_forward.1} parent=99 // pred_fallthru
          _
      $region100: #{roberta_class_forward.1} parent=5 // pred_fallthru
        _
      %p3032 = scmp.le.s32.totalorder 2, %s38
      // Predicated region
      $region149: #{roberta_class_forward.1} parent=5 // pred_check
        %p3033 = pneg %p3032
      $region150: #{roberta_class_forward.1} parent=5 // pred_check_branch
        %3035 = sbr.rel (%p3033) target = $region152
      $region151: #{roberta_class_forward.1} parent=5 // pred_region
        %s3036 = ssub.s32 %s38, 2
      $region152: #{roberta_class_forward.1} parent=5 // pred_fallthru
        _
    $region6: #{roberta_class_forward.1} parent=1 // loop_footer
      %s42 = sadd.s32 1, %s38
    $region7: #{roberta_class_forward.1} parent=1 // loop_footer_branch
      %37 = sbr.rel target = $region3
    $region8: #{roberta_class_forward.1} parent=1 // loop_exit
      _
    %3037 = vsyncpa [#allocation4], 1
    %s3038 = scalar_lea.sflag [#allocation4], 1
    %3039 = vsyncpa %s3038, 1
    %3040 = vsyncpa [#allocation7], 1
    %s3041 = scalar_lea.sflag [#allocation7], 1
    %3042 = vsyncpa %s3041, 1
    %3043 = vsyncpa [#allocation10], 1
    %s3044 = scalar_lea.sflag [#allocation10], 1
    %3045 = vsyncpa %s3044, 1
    %3046 = vsyncpa [#allocation13], 1
    %s3047 = scalar_lea.sflag [#allocation13], 1
    %3048 = vsyncpa %s3047, 1
    %3049 = vsyncpa [#allocation16], 1
    %3050 = vsyncpa [#allocation5], 1
    %s3051 = scalar_lea.sflag [#allocation5], 1
    %3052 = vsyncpa %s3051, 1

</llo_original>
